<compile_context>
chip_gen: v7x
topology: tpu7x:2x2x1
jax: 0.10.0
libtpu: 0.0.40
codegen_flags: <defaults>
</compile_context>

<pallas_src>
import jax
import jax.numpy as jnp
from jax.experimental import pallas as pl
from jax.experimental.pallas import tpu as pltpu


def _round_up(n, m):
    return ((n + m - 1) // m) * m


def _pick_tile(dim, cap):
    """Largest multiple-of-128 tile <= cap that divides dim (dim % 128 == 0)."""
    start = min(dim, cap)
    start -= start % 128
    for t in range(start, 0, -128):
        if dim % t == 0:
            return t
    return dim


def _vmem_budget_bytes():
    """Generation-aware VMEM budget, leaving headroom for compiler scratch."""
    try:
        cap = int(pltpu.get_tpu_info().vmem_capacity_bytes)
    except Exception:
        cap = 64 << 20  # conservative (v7x per-TC capacity)
    # ~40 MiB on v7x (64 MiB/TC), ~80 MiB on v5e/v6e (128 MiB).
    return (cap * 5) // 8


# ---------------------------------------------------------------------------
# Parameter preparation (hoisted out of the per-call forward path).
# ---------------------------------------------------------------------------
def prepare_classifier_params(params, compute_dtype=jnp.bfloat16):
    """Pad/cast weights & biases once.

    params: [(W_i, b_i)] with W_i: (in, out), b_i: (out,) -- depth+1 layers.
    """
    dims = [params[0][0].shape[0]] + [w.shape[1] for (w, _) in params]
    pdims = [_round_up(d, 128) for d in dims]
    L = len(params)
    ko_max = max(pdims[1:])

    weights, biases = [], []
    bias_stack = jnp.zeros((L, ko_max), jnp.float32)
    for i, (w, b) in enumerate(params):
        ki, ko = pdims[i], pdims[i + 1]
        w_p = jnp.zeros((ki, ko), compute_dtype)
        w_p = w_p.at[: w.shape[0], : w.shape[1]].set(w.astype(compute_dtype))
        b_p = jnp.zeros((1, ko), jnp.float32)
        b_p = b_p.at[:, : b.shape[0]].set(b.reshape(1, -1).astype(jnp.float32))
        weights.append(w_p)
        biases.append(b_p)
        bias_stack = bias_stack.at[i, : b.shape[0]].set(b.astype(jnp.float32))

    return dict(dims=dims, pdims=pdims, weights=weights, biases=biases,
                bias_stack=bias_stack, compute_dtype=compute_dtype)


# ---------------------------------------------------------------------------
# Fused (weight-resident) kernel: whole MLP on one batch tile.
# ---------------------------------------------------------------------------
def _make_fused_kernel(num_layers, out_pdims):
    """kernel(x_ref, W1..WL, bias_stack_ref, o_ref)."""

    def kernel(x_ref, *refs):
        o_ref = refs[-1]
        b_ref = refs[-2]                      # (L, ko_max) f32
        w_refs = refs[:num_layers]
        h = x_ref[...]                        # bf16 (TB, F0)
        for i in range(num_layers):
            ko = out_pdims[i]
            acc = jnp.dot(h, w_refs[i][...], preferred_element_type=jnp.float32)
            acc = acc + b_ref[i:i + 1, :ko]   # f32 bias add (broadcast over rows)
            if i < num_layers - 1:
                h = jnp.maximum(acc, 0.0).astype(x_ref.dtype)   # ReLU -> bf16
            else:
                o_ref[...] = acc.astype(o_ref.dtype)            # lane-dense store

    return kernel


def _fused_forward(x_p, weights, bias_stack, pdims, TB, n_tiles, out_dtype,
                   vmem_needed, resident_bytes, budget):
    B_pad = x_p.shape[0]
    L = len(weights)
    out_pdims = pdims[1:]

    def build_and_run(single_buffer):
        def const_spec(shape):
            if single_buffer:
                # Constant block index -> one resident VMEM buffer is enough.
                return pl.BlockSpec(shape, lambda i: (0,) * len(shape),
                                    pipeline_mode=pl.Buffered(1))
            return pl.BlockSpec(shape, lambda i: (0,) * len(shape))

        in_specs = [pl.BlockSpec((TB, pdims[0]), lambda i: (i, 0))]   # pipelined
        in_specs += [const_spec(tuple(w.shape)) for w in weights]
        in_specs += [const_spec(tuple(bias_stack.shape))]
        out_spec = pl.BlockSpec((TB, pdims[-1]), lambda i: (i, 0))
        out_shape = jax.ShapeDtypeStruct((B_pad, pdims[-1]), out_dtype)

        flops = 2 * B_pad * sum(pdims[i] * pdims[i + 1] for i in range(L))
        bytes_accessed = (int(x_p.size) * x_p.dtype.itemsize
                          + resident_bytes
                          + B_pad * pdims[-1] * jnp.dtype(out_dtype).itemsize)
        cost = pl.CostEstimate(flops=int(flops), transcendentals=0,
                               bytes_accessed=int(bytes_accessed))

        extra = 0 if single_buffer else resident_bytes  # double-buffered weights
        vmem_limit = int(min(budget, max(vmem_needed + extra + (8 << 20),
                                         16 << 20)))

        return pl.pallas_call(
            _make_fused_kernel(L, out_pdims),
            out_shape=out_shape,
            grid=(n_tiles,),
            in_specs=in_specs,
            out_specs=out_spec,
            compiler_params=pltpu.CompilerParams(
                dimension_semantics=("parallel",),   # v7x: split batch over 2 TCs
                vmem_limit_bytes=vmem_limit),
            cost_estimate=cost,
        )(x_p, *weights, bias_stack)

    try:
        return build_and_run(single_buffer=True)
    except Exception:
        # pl.Buffered(1) unsupported on this jax version -> default buffering.
        return build_and_run(single_buffer=False)


# ---------------------------------------------------------------------------
# Layer-wise fallback: tiled matmul + bias (+ relu) per layer (for wide layers
# whose weights do not fit the per-core VMEM budget, e.g. on v7x).
# ---------------------------------------------------------------------------
def _make_dense_kernel(apply_relu):
    def kernel(x_ref, w_ref, b_ref, o_ref, acc_ref):
        k = pl.program_id(2)

        @pl.when(k == 0)
        def _():
            acc_ref[...] = jnp.zeros_like(acc_ref)

        acc_ref[...] += jnp.dot(x_ref[...], w_ref[...],
                                preferred_element_type=jnp.float32)

        @pl.when(k == pl.num_programs(2) - 1)
        def _():
            acc = acc_ref[...] + b_ref[...]
            if apply_relu:
                acc = jnp.maximum(acc, 0.0)
            o_ref[...] = acc.astype(o_ref.dtype)

    return kernel


def _layerwise_forward(x_p, weights, biases, TB, out_dtype, budget):
    h = x_p
    L = len(weights)
    B_pad = x_p.shape[0]
    for li, (w, b) in enumerate(zip(weights, biases)):
        ki, ko = w.shape
        last = (li == L - 1)
        tn = _pick_tile(ko, 512)
        tk = _pick_tile(ki, 512)
        layer_dtype = out_dtype if last else h.dtype
        h = pl.pallas_call(
            _make_dense_kernel(apply_relu=not last),
            out_shape=jax.ShapeDtypeStruct((B_pad, ko), layer_dtype),
            grid=(B_pad // TB, ko // tn, ki // tk),
            in_specs=[pl.BlockSpec((TB, tk), lambda i, j, k: (i, k)),
                      pl.BlockSpec((tk, tn), lambda i, j, k: (k, j)),
                      pl.BlockSpec((1, tn), lambda i, j, k: (0, j))],
            out_specs=pl.BlockSpec((TB, tn), lambda i, j, k: (i, j)),
            scratch_shapes=[pltpu.VMEM((TB, tn), jnp.float32)],
            compiler_params=pltpu.CompilerParams(
                dimension_semantics=("parallel", "parallel", "arbitrary"),
                vmem_limit_bytes=int(budget)),
        )(h, w, b)
    return h


# ---------------------------------------------------------------------------
# Public forward.
# ---------------------------------------------------------------------------
def classifier_forward(x, prepared, *, block_b=256, out_dtype=jnp.bfloat16,
                       force_layerwise=False):
    """Forward pass.  x: (B, in_features) f32.  Returns (B, num_classes) f32."""
    B, F = x.shape
    dims, pdims = prepared["dims"], prepared["pdims"]
    weights, biases = prepared["weights"], prepared["biases"]
    bias_stack = prepared["bias_stack"]
    cdt = prepared["compute_dtype"]
    num_classes = dims[-1]
    assert F == dims[0], (F, dims[0])

    # --- Batch tile: large (>=256) to amortize per-step overhead, but keep an
    # even number of tiles (>=2) so v7x's two TensorCores split the batch. ---
    TB = min(block_b, _round_up(B, 8))
    B_pad = _round_up(B, TB)
    n_tiles = B_pad // TB
    if n_tiles == 1 and TB >= 16 and (TB // 2) % 8 == 0:
        TB //= 2
        B_pad = _round_up(B, TB)
        n_tiles = B_pad // TB

    # --- Input: skip the pad copy when already aligned (cast only). ---
    if B_pad == B and pdims[0] == F:
        x_p = x.astype(cdt)
    else:
        x_p = jnp.zeros((B_pad, pdims[0]), cdt).at[:B, :F].set(x.astype(cdt))

    # --- VMEM feasibility of the fused (weight-resident) path. ---
    itemsize = jnp.dtype(cdt).itemsize
    out_isz = jnp.dtype(out_dtype).itemsize
    w_bytes = sum(int(w.size) * itemsize for w in weights)       # single-buffered
    b_bytes = int(bias_stack.size) * 4
    resident = w_bytes + b_bytes
    act_bytes = 2 * TB * pdims[0] * itemsize + 2 * TB * pdims[-1] * out_isz
    hidden_bytes = 4 * TB * max(pdims) * 4       # in-kernel f32/bf16 temporaries
    needed = resident + act_bytes + hidden_bytes
    budget = _vmem_budget_bytes()

    if force_layerwise or needed > budget:
        out_p = _layerwise_forward(x_p, weights, biases, TB, out_dtype, budget)
    else:
        out_p = _fused_forward(x_p, weights, bias_stack, pdims, TB, n_tiles,
                               out_dtype, needed, resident, budget)

    # Slice padded batch rows / padded class columns off; cast logits to f32.
    return out_p[:B, :num_classes].astype(jnp.float32)


# ---------------------------------------------------------------------------
# Helpers for the self-test.
# ---------------------------------------------------------------------------
def init_params(key, in_features, width, depth, num_classes, dtype=jnp.float32):
    """Deterministic init mirroring the nn.Linear shapes of the PyTorch module."""
    dims = [in_features] + [width] * depth + [num_classes]
    params = []
    for i in range(depth + 1):
        key, kw, kb = jax.random.split(key, 3)
        bound = 1.0 / jnp.sqrt(dims[i])
        w = jax.random.uniform(kw, (dims[i], dims[i + 1]), dtype, -bound, bound)
        b = jax.random.uniform(kb, (dims[i + 1],), dtype, -bound, bound)
        params.append((w, b))
    return params


def reference_forward(x, params, out_dtype=jnp.bfloat16):
    """Numerics-matched JAX reference: bf16 inputs, f32 accumulation, bf16 logits."""
    h = x.astype(jnp.bfloat16)
    for i, (w, b) in enumerate(params):
        acc = jnp.dot(h, w.astype(jnp.bfloat16),
                      preferred_element_type=jnp.float32) + b.astype(jnp.float32)
        if i < len(params) - 1:
            h = jnp.maximum(acc, 0.0).astype(jnp.bfloat16)
        else:
            h = acc.astype(out_dtype).astype(jnp.float32)
    return h


if __name__ == "__main__":
    # Small, MXU-friendly shapes consistent with the module's structure.
    batch, in_features, width, depth, num_classes = 512, 128, 256, 3, 10

    key = jax.random.PRNGKey(0)
    key, kx = jax.random.split(key)
    x = jax.random.normal(kx, (batch, in_features), jnp.float32)
    params = init_params(key, in_features, width, depth, num_classes)

    # Pad/cast of the weights is done once, outside the per-call forward.
    prepared = prepare_classifier_params(params)

    out = classifier_forward(x, prepared, block_b=256)
    out = jax.block_until_ready(out)

    ref = reference_forward(x, params)
    assert out.shape == (batch, num_classes), out.shape
    max_err = float(jnp.max(jnp.abs(out - ref)))
    assert jnp.allclose(out, ref, atol=2e-2, rtol=2e-2), f"fused mismatch {max_err}"

    # Also exercise the VMEM-guard fallback path (per-layer tiled matmul).
    out_lw = classifier_forward(x, prepared, block_b=256, force_layerwise=True)
    out_lw = jax.block_until_ready(out_lw)
    max_err_lw = float(jnp.max(jnp.abs(out_lw - ref)))
    assert jnp.allclose(out_lw, ref, atol=2e-2, rtol=2e-2), \
        f"layerwise mismatch {max_err_lw}"

    print("KERNEL_OK")
</pallas_src>

<mosaic_0001>
module attributes {stable_mosaic.version = 11 : i64} {
  func.func @kernel(%arg0: i32, %arg1: memref<256x128xbf16, #tpu.memory_space<vmem>>, %arg2: memref<128x256xbf16, #tpu.memory_space<vmem>>, %arg3: memref<256x256xbf16, #tpu.memory_space<vmem>>, %arg4: memref<256x256xbf16, #tpu.memory_space<vmem>>, %arg5: memref<256x128xbf16, #tpu.memory_space<vmem>>, %arg6: memref<4x256xf32, #tpu.memory_space<vmem>>, %arg7: memref<256x128xbf16, #tpu.memory_space<vmem>>) attributes {dimension_semantics = [#tpu.dimension_semantics<parallel>], iteration_bounds = array<i64: 2>, scalar_prefetch = 0 : i64, scratch_operands = 0 : i64, tpu.core_type = #tpu.core_type<tc>, window_params = [{transform_indices = @transform_0, window_bounds = array<i64: 256, 128>}, {pipeline_mode = #tpu.pipeline_mode<synchronous>, transform_indices = @transform_1, window_bounds = array<i64: 128, 256>}, {pipeline_mode = #tpu.pipeline_mode<synchronous>, transform_indices = @transform_2, window_bounds = array<i64: 256, 256>}, {pipeline_mode = #tpu.pipeline_mode<synchronous>, transform_indices = @transform_3, window_bounds = array<i64: 256, 256>}, {pipeline_mode = #tpu.pipeline_mode<synchronous>, transform_indices = @transform_4, window_bounds = array<i64: 256, 128>}, {pipeline_mode = #tpu.pipeline_mode<synchronous>, transform_indices = @transform_5, window_bounds = array<i64: 4, 256>}, {transform_indices = @transform_6, window_bounds = array<i64: 256, 128>}]} {
    %c0 = arith.constant 0 : index
    %c0_0 = arith.constant 0 : index
    %0 = vector.load %arg1[%c0, %c0_0] : memref<256x128xbf16, #tpu.memory_space<vmem>>, vector<256x128xbf16>
    %c0_1 = arith.constant 0 : index
    %c0_2 = arith.constant 0 : index
    %1 = vector.load %arg2[%c0_1, %c0_2] : memref<128x256xbf16, #tpu.memory_space<vmem>>, vector<128x256xbf16>
    %cst = arith.constant dense<0.000000e+00> : vector<256x256xf32>
    %2 = tpu.matmul %0, %1, %cst {dimension_numbers = #tpu.dot_dimension_numbers<[1], [0], [0], [1], [0, 0, 1, 1], [], []>} : vector<256x128xbf16>, vector<128x256xbf16>, vector<256x256xf32> -> vector<256x256xf32>
    %c0_3 = arith.constant 0 : index
    %c0_4 = arith.constant 0 : index
    %3 = vector.load %arg6[%c0_3, %c0_4] : memref<4x256xf32, #tpu.memory_space<vmem>>, vector<1x256xf32>
    %4 = vector.broadcast %3 : vector<1x256xf32> to vector<256x256xf32>
    %5 = arith.addf %2, %4 : vector<256x256xf32>
    %cst_5 = arith.constant 0.000000e+00 : f32
    %6 = vector.broadcast %cst_5 : f32 to vector<256x256xf32>
    %7 = arith.maximumf %5, %6 : vector<256x256xf32>
    %8 = arith.truncf %7 : vector<256x256xf32> to vector<256x256xbf16>
    %c0_6 = arith.constant 0 : index
    %c0_7 = arith.constant 0 : index
    %9 = vector.load %arg3[%c0_6, %c0_7] : memref<256x256xbf16, #tpu.memory_space<vmem>>, vector<256x256xbf16>
    %cst_8 = arith.constant dense<0.000000e+00> : vector<256x256xf32>
    %10 = tpu.matmul %8, %9, %cst_8 {dimension_numbers = #tpu.dot_dimension_numbers<[1], [0], [0], [1], [0, 0, 1, 1], [], []>} : vector<256x256xbf16>, vector<256x256xbf16>, vector<256x256xf32> -> vector<256x256xf32>
    %c1 = arith.constant 1 : index
    %c0_9 = arith.constant 0 : index
    %11 = vector.load %arg6[%c1, %c0_9] : memref<4x256xf32, #tpu.memory_space<vmem>>, vector<1x256xf32>
    %12 = vector.broadcast %11 : vector<1x256xf32> to vector<256x256xf32>
    %13 = arith.addf %10, %12 : vector<256x256xf32>
    %cst_10 = arith.constant 0.000000e+00 : f32
    %14 = vector.broadcast %cst_10 : f32 to vector<256x256xf32>
    %15 = arith.maximumf %13, %14 : vector<256x256xf32>
    %16 = arith.truncf %15 : vector<256x256xf32> to vector<256x256xbf16>
    %c0_11 = arith.constant 0 : index
    %c0_12 = arith.constant 0 : index
    %17 = vector.load %arg4[%c0_11, %c0_12] : memref<256x256xbf16, #tpu.memory_space<vmem>>, vector<256x256xbf16>
    %cst_13 = arith.constant dense<0.000000e+00> : vector<256x256xf32>
    %18 = tpu.matmul %16, %17, %cst_13 {dimension_numbers = #tpu.dot_dimension_numbers<[1], [0], [0], [1], [0, 0, 1, 1], [], []>} : vector<256x256xbf16>, vector<256x256xbf16>, vector<256x256xf32> -> vector<256x256xf32>
    %c2 = arith.constant 2 : index
    %c0_14 = arith.constant 0 : index
    %19 = vector.load %arg6[%c2, %c0_14] : memref<4x256xf32, #tpu.memory_space<vmem>>, vector<1x256xf32>
    %20 = vector.broadcast %19 : vector<1x256xf32> to vector<256x256xf32>
    %21 = arith.addf %18, %20 : vector<256x256xf32>
    %cst_15 = arith.constant 0.000000e+00 : f32
    %22 = vector.broadcast %cst_15 : f32 to vector<256x256xf32>
    %23 = arith.maximumf %21, %22 : vector<256x256xf32>
    %24 = arith.truncf %23 : vector<256x256xf32> to vector<256x256xbf16>
    %c0_16 = arith.constant 0 : index
    %c0_17 = arith.constant 0 : index
    %25 = vector.load %arg5[%c0_16, %c0_17] : memref<256x128xbf16, #tpu.memory_space<vmem>>, vector<256x128xbf16>
    %cst_18 = arith.constant dense<0.000000e+00> : vector<256x128xf32>
    %26 = tpu.matmul %24, %25, %cst_18 {dimension_numbers = #tpu.dot_dimension_numbers<[1], [0], [0], [1], [0, 0, 1, 1], [], []>} : vector<256x256xbf16>, vector<256x128xbf16>, vector<256x128xf32> -> vector<256x128xf32>
    %c3 = arith.constant 3 : index
    %c0_19 = arith.constant 0 : index
    %27 = vector.load %arg6[%c3, %c0_19] : memref<4x256xf32, #tpu.memory_space<vmem>>, vector<1x128xf32>
    %28 = vector.broadcast %27 : vector<1x128xf32> to vector<256x128xf32>
    %29 = arith.addf %26, %28 : vector<256x128xf32>
    %30 = arith.truncf %29 : vector<256x128xf32> to vector<256x128xbf16>
    %c0_20 = arith.constant 0 : index
    %c0_21 = arith.constant 0 : index
    %31 = vector.load %arg7[%c0_20, %c0_21] : memref<256x128xbf16, #tpu.memory_space<vmem>>, vector<256x128xbf16>
    tpu.vector_store %arg7[%c0_20, %c0_21], %30 {strides = array<i32>} : memref<256x128xbf16, #tpu.memory_space<vmem>>, vector<256x128xbf16>,
    return
  }
  func.func @transform_0(%arg0: i32) -> (i32, i32) {
    %c0_i32 = arith.constant 0 : i32
    %c0_i32_0 = arith.constant 0 : i32
    return %arg0, %c0_i32 : i32, i32
  }
  func.func @transform_1(%arg0: i32) -> (i32, i32) {
    %c0_i32 = arith.constant 0 : i32
    %c0_i32_0 = arith.constant 0 : i32
    %c0_i32_1 = arith.constant 0 : i32
    return %c0_i32, %c0_i32_0 : i32, i32
  }
  func.func @transform_2(%arg0: i32) -> (i32, i32) {
    %c0_i32 = arith.constant 0 : i32
    %c0_i32_0 = arith.constant 0 : i32
    %c0_i32_1 = arith.constant 0 : i32
    return %c0_i32, %c0_i32_0 : i32, i32
  }
  func.func @transform_3(%arg0: i32) -> (i32, i32) {
    %c0_i32 = arith.constant 0 : i32
    %c0_i32_0 = arith.constant 0 : i32
    %c0_i32_1 = arith.constant 0 : i32
    return %c0_i32, %c0_i32_0 : i32, i32
  }
  func.func @transform_4(%arg0: i32) -> (i32, i32) {
    %c0_i32 = arith.constant 0 : i32
    %c0_i32_0 = arith.constant 0 : i32
    %c0_i32_1 = arith.constant 0 : i32
    return %c0_i32, %c0_i32_0 : i32, i32
  }
  func.func @transform_5(%arg0: i32) -> (i32, i32) {
    %c0_i32 = arith.constant 0 : i32
    %c0_i32_0 = arith.constant 0 : i32
    %c0_i32_1 = arith.constant 0 : i32
    return %c0_i32, %c0_i32_0 : i32, i32
  }
  func.func @transform_6(%arg0: i32) -> (i32, i32) {
    %c0_i32 = arith.constant 0 : i32
    %c0_i32_0 = arith.constant 0 : i32
    return %arg0, %c0_i32 : i32, i32
  }
}

module attributes {stable_mosaic.version = 11 : i64} {
  func.func @kernel(%arg0: i32, %arg1: memref<256x128xbf16, #tpu.memory_space<vmem>>, %arg2: memref<128x256xbf16, #tpu.memory_space<vmem>>, %arg3: memref<256x256xbf16, #tpu.memory_space<vmem>>, %arg4: memref<256x256xbf16, #tpu.memory_space<vmem>>, %arg5: memref<256x128xbf16, #tpu.memory_space<vmem>>, %arg6: memref<4x256xf32, #tpu.memory_space<vmem>>, %arg7: memref<256x128xbf16, #tpu.memory_space<vmem>>) attributes {dimension_semantics = [#tpu.dimension_semantics<parallel>], iteration_bounds = array<i64: 2>, scalar_prefetch = 0 : i64, scratch_operands = 0 : i64, tpu.core_type = #tpu.core_type<tc>, window_params = [{transform_indices = @transform_0, window_bounds = array<i64: 256, 128>}, {pipeline_mode = #tpu.pipeline_mode<synchronous>, transform_indices = @transform_1, window_bounds = array<i64: 128, 256>}, {pipeline_mode = #tpu.pipeline_mode<synchronous>, transform_indices = @transform_2, window_bounds = array<i64: 256, 256>}, {pipeline_mode = #tpu.pipeline_mode<synchronous>, transform_indices = @transform_3, window_bounds = array<i64: 256, 256>}, {pipeline_mode = #tpu.pipeline_mode<synchronous>, transform_indices = @transform_4, window_bounds = array<i64: 256, 128>}, {pipeline_mode = #tpu.pipeline_mode<synchronous>, transform_indices = @transform_5, window_bounds = array<i64: 4, 256>}, {transform_indices = @transform_6, window_bounds = array<i64: 256, 128>}]} {
    %c0 = arith.constant 0 : index
    %c0_0 = arith.constant 0 : index
    %0 = vector.load %arg1[%c0, %c0_0] : memref<256x128xbf16, #tpu.memory_space<vmem>>, vector<256x128xbf16>
    %c0_1 = arith.constant 0 : index
    %c0_2 = arith.constant 0 : index
    %1 = vector.load %arg2[%c0_1, %c0_2] : memref<128x256xbf16, #tpu.memory_space<vmem>>, vector<128x256xbf16>
    %cst = arith.constant dense<0.000000e+00> : vector<256x256xf32>
    %2 = tpu.matmul %0, %1, %cst {dimension_numbers = #tpu.dot_dimension_numbers<[1], [0], [0], [1], [0, 0, 1, 1], [], []>} : vector<256x128xbf16>, vector<128x256xbf16>, vector<256x256xf32> -> vector<256x256xf32>
    %c0_3 = arith.constant 0 : index
    %c0_4 = arith.constant 0 : index
    %3 = vector.load %arg6[%c0_3, %c0_4] : memref<4x256xf32, #tpu.memory_space<vmem>>, vector<1x256xf32>
    %4 = vector.broadcast %3 : vector<1x256xf32> to vector<256x256xf32>
    %5 = arith.addf %2, %4 : vector<256x256xf32>
    %cst_5 = arith.constant 0.000000e+00 : f32
    %6 = vector.broadcast %cst_5 : f32 to vector<256x256xf32>
    %7 = arith.maximumf %5, %6 : vector<256x256xf32>
    %8 = arith.truncf %7 : vector<256x256xf32> to vector<256x256xbf16>
    %c0_6 = arith.constant 0 : index
    %c0_7 = arith.constant 0 : index
    %9 = vector.load %arg3[%c0_6, %c0_7] : memref<256x256xbf16, #tpu.memory_space<vmem>>, vector<256x256xbf16>
    %cst_8 = arith.constant dense<0.000000e+00> : vector<256x256xf32>
    %10 = tpu.matmul %8, %9, %cst_8 {dimension_numbers = #tpu.dot_dimension_numbers<[1], [0], [0], [1], [0, 0, 1, 1], [], []>} : vector<256x256xbf16>, vector<256x256xbf16>, vector<256x256xf32> -> vector<256x256xf32>
    %c1 = arith.constant 1 : index
    %c0_9 = arith.constant 0 : index
    %11 = vector.load %arg6[%c1, %c0_9] : memref<4x256xf32, #tpu.memory_space<vmem>>, vector<1x256xf32>
    %12 = vector.broadcast %11 : vector<1x256xf32> to vector<256x256xf32>
    %13 = arith.addf %10, %12 : vector<256x256xf32>
    %cst_10 = arith.constant 0.000000e+00 : f32
    %14 = vector.broadcast %cst_10 : f32 to vector<256x256xf32>
    %15 = arith.maximumf %13, %14 : vector<256x256xf32>
    %16 = arith.truncf %15 : vector<256x256xf32> to vector<256x256xbf16>
    %c0_11 = arith.constant 0 : index
    %c0_12 = arith.constant 0 : index
    %17 = vector.load %arg4[%c0_11, %c0_12] : memref<256x256xbf16, #tpu.memory_space<vmem>>, vector<256x256xbf16>
    %cst_13 = arith.constant dense<0.000000e+00> : vector<256x256xf32>
    %18 = tpu.matmul %16, %17, %cst_13 {dimension_numbers = #tpu.dot_dimension_numbers<[1], [0], [0], [1], [0, 0, 1, 1], [], []>} : vector<256x256xbf16>, vector<256x256xbf16>, vector<256x256xf32> -> vector<256x256xf32>
    %c2 = arith.constant 2 : index
    %c0_14 = arith.constant 0 : index
    %19 = vector.load %arg6[%c2, %c0_14] : memref<4x256xf32, #tpu.memory_space<vmem>>, vector<1x256xf32>
    %20 = vector.broadcast %19 : vector<1x256xf32> to vector<256x256xf32>
    %21 = arith.addf %18, %20 : vector<256x256xf32>
    %cst_15 = arith.constant 0.000000e+00 : f32
    %22 = vector.broadcast %cst_15 : f32 to vector<256x256xf32>
    %23 = arith.maximumf %21, %22 : vector<256x256xf32>
    %24 = arith.truncf %23 : vector<256x256xf32> to vector<256x256xbf16>
    %c0_16 = arith.constant 0 : index
    %c0_17 = arith.constant 0 : index
    %25 = vector.load %arg5[%c0_16, %c0_17] : memref<256x128xbf16, #tpu.memory_space<vmem>>, vector<256x128xbf16>
    %cst_18 = arith.constant dense<0.000000e+00> : vector<256x128xf32>
    %26 = tpu.matmul %24, %25, %cst_18 {dimension_numbers = #tpu.dot_dimension_numbers<[1], [0], [0], [1], [0, 0, 1, 1], [], []>} : vector<256x256xbf16>, vector<256x128xbf16>, vector<256x128xf32> -> vector<256x128xf32>
    %c3 = arith.constant 3 : index
    %c0_19 = arith.constant 0 : index
    %27 = vector.load %arg6[%c3, %c0_19] : memref<4x256xf32, #tpu.memory_space<vmem>>, vector<1x128xf32>
    %28 = vector.broadcast %27 : vector<1x128xf32> to vector<256x128xf32>
    %29 = arith.addf %26, %28 : vector<256x128xf32>
    %30 = arith.truncf %29 : vector<256x128xf32> to vector<256x128xbf16>
    %c0_20 = arith.constant 0 : index
    %c0_21 = arith.constant 0 : index
    %31 = vector.load %arg7[%c0_20, %c0_21] : memref<256x128xbf16, #tpu.memory_space<vmem>>, vector<256x128xbf16>
    tpu.vector_store %arg7[%c0_20, %c0_21], %30 {strides = array<i32>} : memref<256x128xbf16, #tpu.memory_space<vmem>>, vector<256x128xbf16>,
    return
  }
  func.func @transform_0(%arg0: i32) -> (i32, i32) {
    %c0_i32 = arith.constant 0 : i32
    %c0_i32_0 = arith.constant 0 : i32
    return %arg0, %c0_i32 : i32, i32
  }
  func.func @transform_1(%arg0: i32) -> (i32, i32) {
    %c0_i32 = arith.constant 0 : i32
    %c0_i32_0 = arith.constant 0 : i32
    %c0_i32_1 = arith.constant 0 : i32
    return %c0_i32, %c0_i32_0 : i32, i32
  }
  func.func @transform_2(%arg0: i32) -> (i32, i32) {
    %c0_i32 = arith.constant 0 : i32
    %c0_i32_0 = arith.constant 0 : i32
    %c0_i32_1 = arith.constant 0 : i32
    return %c0_i32, %c0_i32_0 : i32, i32
  }
  func.func @transform_3(%arg0: i32) -> (i32, i32) {
    %c0_i32 = arith.constant 0 : i32
    %c0_i32_0 = arith.constant 0 : i32
    %c0_i32_1 = arith.constant 0 : i32
    return %c0_i32, %c0_i32_0 : i32, i32
  }
  func.func @transform_4(%arg0: i32) -> (i32, i32) {
    %c0_i32 = arith.constant 0 : i32
    %c0_i32_0 = arith.constant 0 : i32
    %c0_i32_1 = arith.constant 0 : i32
    return %c0_i32, %c0_i32_0 : i32, i32
  }
  func.func @transform_5(%arg0: i32) -> (i32, i32) {
    %c0_i32 = arith.constant 0 : i32
    %c0_i32_0 = arith.constant 0 : i32
    %c0_i32_1 = arith.constant 0 : i32
    return %c0_i32, %c0_i32_0 : i32, i32
  }
  func.func @transform_6(%arg0: i32) -> (i32, i32) {
    %c0_i32 = arith.constant 0 : i32
    %c0_i32_0 = arith.constant 0 : i32
    return %arg0, %c0_i32 : i32, i32
  }
}

</mosaic_0001>

<llo_original>
// kernel: tpu_custom_call.1
$region0: #{tpu_custom_call.1}
  #allocation0 [shape = 'u32[]', space=smem, size = 0x4, offset = 0x4, fixed_abs, tag = 'smem constant byte address 0x4 - core index']
  #allocation1 [shape = 'u32[144,128]{1,0:T(1,128)}', space=vmem, size = 0x12000, scoped, tag = 'internal scratch']
  %s0 = inlined_call_operand.hbm [shape: bf16[512,128], index: 0, kind: input, shape index: {}]
  %s1 = inlined_call_operand.hbm [shape: bf16[128,256], index: 1, kind: input, shape index: {}]
  %s2 = inlined_call_operand.hbm [shape: bf16[256,256], index: 2, kind: input, shape index: {}]
  %s3 = inlined_call_operand.hbm [shape: bf16[256,256], index: 3, kind: input, shape index: {}]
  %s4 = inlined_call_operand.hbm [shape: bf16[256,128], index: 4, kind: input, shape index: {}]
  %s5 = inlined_call_operand.vmem [shape: f32[4,256], index: 5, kind: input, shape index: {}]
  %s6 = inlined_call_operand.hbm [shape: bf16[512,128], index: 6, kind: output, shape index: {}]
  %s7 = sld [smem:[#allocation0]]
  $region77: #{tpu_custom_call.1} parent=0
    _
  %s9 = ssub.s32 1, %s7
  %s10 = scalar_select 0, %s9, %s7
  $region1: #{tpu_custom_call.1} parent=0
    #allocation2 [shape = 'u8[131072]{0}', space=vmem, size = 0x20000, scoped, tag = 'input window, operand 0']
    #allocation3 [shape = 's32[2]{0}', space=sflag, size = 0x8, scoped, tag = 'scoped memory for tpu_custom_call.1']
    #allocation4 [shape = 's32[2]{0}', space=sflag, size = 0x8, scoped, tag = 'scoped memory for tpu_custom_call.1']
    #allocation5 [shape = 'u8[65536]{0}', space=vmem, size = 0x10000, scoped, tag = 'input window, operand 1, single buffered']
    #allocation6 [shape = 's32[1]{0}', space=sflag, size = 0x4, scoped, tag = 'scoped memory for tpu_custom_call.1']
    #allocation7 [shape = 'u8[131072]{0}', space=vmem, size = 0x20000, scoped, tag = 'input window, operand 2, single buffered']
    #allocation8 [shape = 'u8[131072]{0}', space=vmem, size = 0x20000, scoped, tag = 'input window, operand 3, single buffered']
    #allocation9 [shape = 's32[1]{0}', space=sflag, size = 0x4, scoped, tag = 'scoped memory for tpu_custom_call.1']
    #allocation10 [shape = 'u8[65536]{0}', space=vmem, size = 0x10000, scoped, tag = 'input window, operand 4, single buffered']
    #allocation11 [shape = 'u8[131072]{0}', space=vmem, size = 0x20000, scoped, tag = 'output window, operand 0']
    %11 = vsyncpa [#allocation3], 0
    %s12 = scalar_lea.sflag [#allocation3], 1
    %13 = vsyncpa %s12, 0
    %14 = vsyncpa [#allocation6], 0
    %15 = vsyncpa [#allocation9], 0
    %16 = vsyncpa [#allocation4], 0
    %s17 = scalar_lea.sflag [#allocation4], 1
    %18 = vsyncpa %s17, 0
    loop: start=0, step=1, limit=4
    $region2: #{tpu_custom_call.1} parent=1 // loop_pre_header
      _
    $region3: #{tpu_custom_call.1} parent=1 // loop_header
      %s20 = sphi 0, %s24
      %p21 = scmp.ge.s32.totalorder %s20, 4
      %s30 = sphi 0, %s32
      %s33 = sphi 0, %s30
      %s34 = sphi 0, %s33
      %s50 = sphi 0, %s34
      %s54 = sphi 0, %s54
      %s56 = sphi 0, %s54
      %s57 = sphi 0, %s56
      %s71 = sphi 0, %s57
      %s75 = sphi 0, %s75
      %s77 = sphi 0, %s75
      %s78 = sphi 0, %s77
      %s92 = sphi 0, %s78
      %s96 = sphi 0, %s96
      %s98 = sphi 0, %s96
      %s99 = sphi 0, %s98
      %s113 = sphi 0, %s99
      %s117 = sphi 0, %s117
      %s119 = sphi 0, %s117
      %s120 = sphi 0, %s119
      %s134 = sphi 0, %s120
      %s138 = sphi 0, %s138
      %s140 = sphi 0, %s138
      %s141 = sphi 0, %s140
      %s155 = sphi 0, %s141
      %s161 = sphi 0, %s163
      %s164 = sphi 0, %s161
      %s165 = sphi 0, %s164
      %s181 = sphi 0, %s165
    $region4: #{tpu_custom_call.1} parent=1 // loop_header_branch
      %23 = sbr.rel (%p21) target = $region8
    $region5: #{tpu_custom_call.1} parent=1 // loop_body
      %s25 = ssub.s32 %s20, 1
      %s26 = ssub.s32 %s20, 2
      %s27 = sadd.s32 %s20, 1
      %s28 = ssub.s32 %s20, %s27
      %p29 = scmp.eq.s32.totalorder %s28, 0
      %s31 = sadd.s32 %s30, 1
      %s32 = scalar_select %p29, %s30, %s31
      %p35 = pneg %p29
      %p36 = scmp.eq.s32.totalorder %s20, 1
      %p37 = por %p35, %p36
      %p38 = scmp.ne.s32.totalorder %s30, %s33
      %p39 = scmp.eq.s32.totalorder %s20, 0
      %p40 = por %p38, %p39
      %p41 = scmp.ne.s32.totalorder %s30, %s33
      %p42 = scmp.eq.s32.totalorder %s25, 1
      %p43 = por %p41, %p42
      %p44 = scmp.ne.s32.totalorder %s33, %s34
      %p45 = scmp.eq.s32.totalorder %s25, 0
      %p46 = por %p44, %p45
      %p47 = scmp.ne.s32.totalorder %s33, %s34
      %p48 = scmp.eq.s32.totalorder %s26, 1
      %p49 = por %p47, %p48
      %p51 = scmp.ne.s32.totalorder %s34, %s50
      %p52 = scmp.eq.s32.totalorder %s26, 0
      %p53 = por %p51, %p52
      %s55 = sadd.s32 %s54, 1
      %p58 = scmp.eq.s32.totalorder %s20, 1
      %p59 = scmp.ne.s32.totalorder %s54, %s56
      %p60 = scmp.eq.s32.totalorder %s20, 0
      %p61 = por %p59, %p60
      %p62 = scmp.ne.s32.totalorder %s54, %s56
      %p63 = scmp.eq.s32.totalorder %s25, 1
      %p64 = por %p62, %p63
      %p65 = scmp.ne.s32.totalorder %s56, %s57
      %p66 = scmp.eq.s32.totalorder %s25, 0
      %p67 = por %p65, %p66
      %p68 = scmp.ne.s32.totalorder %s56, %s57
      %p69 = scmp.eq.s32.totalorder %s26, 1
      %p70 = por %p68, %p69
      %p72 = scmp.ne.s32.totalorder %s57, %s71
      %p73 = scmp.eq.s32.totalorder %s26, 0
      %p74 = por %p72, %p73
      %s76 = sadd.s32 %s75, 1
      %p79 = scmp.eq.s32.totalorder %s20, 1
      %p80 = scmp.ne.s32.totalorder %s75, %s77
      %p81 = scmp.eq.s32.totalorder %s20, 0
      %p82 = por %p80, %p81
      %p83 = scmp.ne.s32.totalorder %s75, %s77
      %p84 = scmp.eq.s32.totalorder %s25, 1
      %p85 = por %p83, %p84
      %p86 = scmp.ne.s32.totalorder %s77, %s78
      %p87 = scmp.eq.s32.totalorder %s25, 0
      %p88 = por %p86, %p87
      %p89 = scmp.ne.s32.totalorder %s77, %s78
      %p90 = scmp.eq.s32.totalorder %s26, 1
      %p91 = por %p89, %p90
      %p93 = scmp.ne.s32.totalorder %s78, %s92
      %p94 = scmp.eq.s32.totalorder %s26, 0
      %p95 = por %p93, %p94
      %s97 = sadd.s32 %s96, 1
      %p100 = scmp.eq.s32.totalorder %s20, 1
      %p101 = scmp.ne.s32.totalorder %s96, %s98
      %p102 = scmp.eq.s32.totalorder %s20, 0
      %p103 = por %p101, %p102
      %p104 = scmp.ne.s32.totalorder %s96, %s98
      %p105 = scmp.eq.s32.totalorder %s25, 1
      %p106 = por %p104, %p105
      %p107 = scmp.ne.s32.totalorder %s98, %s99
      %p108 = scmp.eq.s32.totalorder %s25, 0
      %p109 = por %p107, %p108
      %p110 = scmp.ne.s32.totalorder %s98, %s99
      %p111 = scmp.eq.s32.totalorder %s26, 1
      %p112 = por %p110, %p111
      %p114 = scmp.ne.s32.totalorder %s99, %s113
      %p115 = scmp.eq.s32.totalorder %s26, 0
      %p116 = por %p114, %p115
      %s118 = sadd.s32 %s117, 1
      %p121 = scmp.eq.s32.totalorder %s20, 1
      %p122 = scmp.ne.s32.totalorder %s117, %s119
      %p123 = scmp.eq.s32.totalorder %s20, 0
      %p124 = por %p122, %p123
      %p125 = scmp.ne.s32.totalorder %s117, %s119
      %p126 = scmp.eq.s32.totalorder %s25, 1
      %p127 = por %p125, %p126
      %p128 = scmp.ne.s32.totalorder %s119, %s120
      %p129 = scmp.eq.s32.totalorder %s25, 0
      %p130 = por %p128, %p129
      %p131 = scmp.ne.s32.totalorder %s119, %s120
      %p132 = scmp.eq.s32.totalorder %s26, 1
      %p133 = por %p131, %p132
      %p135 = scmp.ne.s32.totalorder %s120, %s134
      %p136 = scmp.eq.s32.totalorder %s26, 0
      %p137 = por %p135, %p136
      %s139 = sadd.s32 %s138, 1
      %p142 = scmp.eq.s32.totalorder %s20, 1
      %p143 = scmp.ne.s32.totalorder %s138, %s140
      %p144 = scmp.eq.s32.totalorder %s20, 0
      %p145 = por %p143, %p144
      %p146 = scmp.ne.s32.totalorder %s138, %s140
      %p147 = scmp.eq.s32.totalorder %s25, 1
      %p148 = por %p146, %p147
      %p149 = scmp.ne.s32.totalorder %s140, %s141
      %p150 = scmp.eq.s32.totalorder %s25, 0
      %p151 = por %p149, %p150
      %p152 = scmp.ne.s32.totalorder %s140, %s141
      %p153 = scmp.eq.s32.totalorder %s26, 1
      %p154 = por %p152, %p153
      %p156 = scmp.ne.s32.totalorder %s141, %s155
      %p157 = scmp.eq.s32.totalorder %s26, 0
      %p158 = por %p156, %p157
      %s159 = ssub.s32 %s20, %s27
      %p160 = scmp.eq.s32.totalorder %s159, 0
      %s162 = sadd.s32 %s161, 1
      %s163 = scalar_select %p160, %s161, %s162
      %p166 = pneg %p160
      %p167 = scmp.eq.s32.totalorder %s20, 1
      %p168 = por %p166, %p167
      %p169 = scmp.ne.s32.totalorder %s161, %s164
      %p170 = scmp.eq.s32.totalorder %s20, 0
      %p171 = por %p169, %p170
      %p172 = scmp.ne.s32.totalorder %s161, %s164
      %p173 = scmp.eq.s32.totalorder %s25, 1
      %p174 = por %p172, %p173
      %p175 = scmp.ne.s32.totalorder %s164, %s165
      %p176 = scmp.eq.s32.totalorder %s25, 0
      %p177 = por %p175, %p176
      %p178 = scmp.ne.s32.totalorder %s164, %s165
      %p179 = scmp.eq.s32.totalorder %s26, 1
      %p180 = por %p178, %p179
      %p182 = scmp.ne.s32.totalorder %s165, %s181
      %p183 = scmp.eq.s32.totalorder %s26, 0
      %p184 = por %p182, %p183
      %p185 = scmp.le.s32.totalorder 1, %s20
      %p186 = scmp.lt.s32.totalorder %s20, 3
      %p187 = pnand %p185, %p186
      %p188 = pneg %p187
      // Predicated region
      $region9: #{tpu_custom_call.1} parent=5 // pred_check
        _
      $region10: #{tpu_custom_call.1} parent=5 // pred_check_branch
        %190 = sbr.rel (%p187) target = $region12
      $region11: #{tpu_custom_call.1} parent=5 // pred_region
        %s191 = ssub.s32 %s20, 1
        // Predicated region
        $region13: #{tpu_custom_call.1} parent=11 // pred_check
          %p192 = pneg %p67
        $region14: #{tpu_custom_call.1} parent=11 // pred_check_branch
          %194 = sbr.rel (%p192) target = $region16
        $region15: #{tpu_custom_call.1} parent=11 // pred_region
          %s196 = ssub.s32 2048, 2048
          %197 = vsyncadd [#allocation6], %s196
          %s198 = sshll.u32 [#allocation5], 4
          %s199 = int_to_ptr.vmem [resolvable:$true] %s198
          %204 = dma.hbm_to_vmem [thread:$0]  %s1, 2048, %s199, [#allocation6], 128, 128, 8
        $region16: #{tpu_custom_call.1} parent=11 // pred_fallthru
          _
        // Predicated region
        $region17: #{tpu_custom_call.1} parent=11 // pred_check
          %p205 = pneg %p88
        $region18: #{tpu_custom_call.1} parent=11 // pred_check_branch
          %207 = sbr.rel (%p205) target = $region20
        $region19: #{tpu_custom_call.1} parent=11 // pred_region
          %s209 = ssub.s32 4096, 4096
          %210 = vsyncadd [#allocation6], %s209
          %s211 = sshll.u32 [#allocation7], 4
          %s212 = int_to_ptr.vmem [resolvable:$true] %s211
          %217 = dma.hbm_to_vmem [thread:$0]  %s2, 4096, %s212, [#allocation6], 128, 128, 8
        $region20: #{tpu_custom_call.1} parent=11 // pred_fallthru
          _
        // Predicated region
        $region21: #{tpu_custom_call.1} parent=11 // pred_check
          %p218 = pneg %p109
        $region22: #{tpu_custom_call.1} parent=11 // pred_check_branch
          %220 = sbr.rel (%p218) target = $region24
        $region23: #{tpu_custom_call.1} parent=11 // pred_region
          %s222 = ssub.s32 4096, 4096
          %223 = vsyncadd [#allocation9], %s222
          %s224 = sshll.u32 [#allocation8], 4
          %s225 = int_to_ptr.vmem [resolvable:$true] %s224
          %230 = dma.hbm_to_vmem [thread:$0]  %s3, 4096, %s225, [#allocation9], 128, 128, 8
        $region24: #{tpu_custom_call.1} parent=11 // pred_fallthru
          _
        // Predicated region
        $region25: #{tpu_custom_call.1} parent=11 // pred_check
          %p231 = pneg %p130
        $region26: #{tpu_custom_call.1} parent=11 // pred_check_branch
          %233 = sbr.rel (%p231) target = $region28
        $region27: #{tpu_custom_call.1} parent=11 // pred_region
          %s235 = ssub.s32 2048, 2048
          %236 = vsyncadd [#allocation9], %s235
          %s237 = sshll.u32 [#allocation10], 4
          %s238 = int_to_ptr.vmem [resolvable:$true] %s237
          %243 = dma.hbm_to_vmem [thread:$0]  %s4, 2048, %s238, [#allocation9], 64, 64, 4
        $region28: #{tpu_custom_call.1} parent=11 // pred_fallthru
          _
        // Predicated region
        $region29: #{tpu_custom_call.1} parent=11 // pred_check
          %p244 = pneg %p151
        $region30: #{tpu_custom_call.1} parent=11 // pred_check_branch
          %246 = sbr.rel (%p244) target = $region32
        $region31: #{tpu_custom_call.1} parent=11 // pred_region
          _
        $region32: #{tpu_custom_call.1} parent=11 // pred_fallthru
          _
      $region12: #{tpu_custom_call.1} parent=5 // pred_fallthru
        _
      %p247 = scmp.lt.s32.totalorder %s20, 2
      // Predicated region
      $region33: #{tpu_custom_call.1} parent=5 // pred_check
        %p248 = pneg %p247
      $region34: #{tpu_custom_call.1} parent=5 // pred_check_branch
        %250 = sbr.rel (%p248) target = $region36
      $region35: #{tpu_custom_call.1} parent=5 // pred_region
        // Predicated region
        $region37: #{tpu_custom_call.1} parent=35 // pred_check
          %p251 = pneg %p40
        $region38: #{tpu_custom_call.1} parent=35 // pred_check_branch
          %253 = sbr.rel (%p251) target = $region40
        $region39: #{tpu_custom_call.1} parent=35 // pred_region
          %s254 = sand.u32 %s30, 1
          %s255 = scalar_lea.sflag [#allocation3], %s254
          %s256 = sand.u32 %s30, 1
          %s257 = smul.addr %s256, 128
          %s258 = scalar_lea.vmem [#allocation2], %s257
          %s259 = smul.u32 32, %s20
          %s261 = ssub.s32 2048, 2048
          %262 = vsyncadd %s255, %s261
          %s263 = smul.addr %s259, 64
          %s264 = scalar_lea.hbm %s0, %s263
          %s265 = sshll.u32 %s258, 4
          %s266 = int_to_ptr.vmem [resolvable:$true] %s265
          %271 = dma.hbm_to_vmem [thread:$0]  %s264, 2048, %s266, %s255, 64, 64, 4
        $region40: #{tpu_custom_call.1} parent=35 // pred_fallthru
          _
      $region36: #{tpu_custom_call.1} parent=5 // pred_fallthru
        _
      %p272 = scmp.le.s32.totalorder 1, %s20
      %p273 = scmp.lt.s32.totalorder %s20, 3
      %p274 = pnand %p272, %p273
      %p275 = pneg %p274
      // Predicated region
      $region41: #{tpu_custom_call.1} parent=5 // pred_check
        _
      $region42: #{tpu_custom_call.1} parent=5 // pred_check_branch
        %277 = sbr.rel (%p274) target = $region44
      $region43: #{tpu_custom_call.1} parent=5 // pred_region
        %s278 = ssub.s32 %s20, 1
        %s279 = sand.u32 %s33, 1
        %s280 = scalar_lea.sflag [#allocation3], %s279
        %s281 = sand.u32 %s33, 1
        %s282 = smul.addr %s281, 128
        %s283 = scalar_lea.vmem [#allocation2], %s282
        // Predicated region
        $region45: #{tpu_custom_call.1} parent=43 // pred_check
          %p284 = pneg %p46
        $region46: #{tpu_custom_call.1} parent=43 // pred_check_branch
          %286 = sbr.rel (%p284) target = $region48
        $region47: #{tpu_custom_call.1} parent=43 // pred_region
          %287 = dma.done %s280, 2048
        $region48: #{tpu_custom_call.1} parent=43 // pred_fallthru
          _
        // Predicated region
        $region49: #{tpu_custom_call.1} parent=43 // pred_check
          %p288 = pneg %p67
        $region50: #{tpu_custom_call.1} parent=43 // pred_check_branch
          %290 = sbr.rel (%p288) target = $region52
        $region51: #{tpu_custom_call.1} parent=43 // pred_region
          %291 = dma.done [#allocation6], 2048
        $region52: #{tpu_custom_call.1} parent=43 // pred_fallthru
          _
        // Predicated region
        $region53: #{tpu_custom_call.1} parent=43 // pred_check
          %p292 = pneg %p88
        $region54: #{tpu_custom_call.1} parent=43 // pred_check_branch
          %294 = sbr.rel (%p292) target = $region56
        $region55: #{tpu_custom_call.1} parent=43 // pred_region
          %295 = dma.done [#allocation6], 4096
        $region56: #{tpu_custom_call.1} parent=43 // pred_fallthru
          _
        // Predicated region
        $region57: #{tpu_custom_call.1} parent=43 // pred_check
          %p296 = pneg %p109
        $region58: #{tpu_custom_call.1} parent=43 // pred_check_branch
          %298 = sbr.rel (%p296) target = $region60
        $region59: #{tpu_custom_call.1} parent=43 // pred_region
          %299 = dma.done [#allocation9], 4096
        $region60: #{tpu_custom_call.1} parent=43 // pred_fallthru
          _
        // Predicated region
        $region61: #{tpu_custom_call.1} parent=43 // pred_check
          %p300 = pneg %p130
        $region62: #{tpu_custom_call.1} parent=43 // pred_check_branch
          %302 = sbr.rel (%p300) target = $region64
        $region63: #{tpu_custom_call.1} parent=43 // pred_region
          %303 = dma.done [#allocation9], 2048
        $region64: #{tpu_custom_call.1} parent=43 // pred_fallthru
          _
        %s304 = sand.u32 %s33, 1
        %s305 = scalar_lea.sflag [#allocation3], %s304
        %s306 = sand.u32 %s33, 1
        %s307 = smul.addr %s306, 128
        %s308 = scalar_lea.vmem [#allocation2], %s307
        %p309 = pneg %p46
        %p310 = pneg %p43
        %p311 = pneg %p67
        %p312 = pneg %p64
        %p313 = pneg %p88
        %p314 = pneg %p85
        %p315 = pneg %p109
        %p316 = pneg %p106
        %p317 = pneg %p130
        %p318 = pneg %p127
        %p319 = pneg %p151
        %p320 = pneg %p148
        %p321 = pneg %p177
        %p322 = pneg %p174
        %s323 = sand.u32 %s164, 1
        %s324 = scalar_lea.sflag [#allocation4], %s323
        %s325 = sand.u32 %s164, 1
        %s326 = smul.addr %s325, 128
        %s327 = scalar_lea.vmem [#allocation11], %s326
        %s328 = smul.u32 32, %s25
        %s329 = smul.u32 32, %s25
        %v331 = vld [vmem:[%s283] sm:$0xf]
        %v332 = vld [vmem:[%s283 + $0x4] sm:$0xf]
        %v333 = vld [vmem:[%s283 + $0x8] sm:$0xf]
        %v334 = vld [vmem:[%s283 + $0xc] sm:$0xf]
        %v335 = vld [vmem:[%s283 + $0x10] sm:$0xf]
        %v336 = vld [vmem:[%s283 + $0x14] sm:$0xf]
        %v337 = vld [vmem:[%s283 + $0x18] sm:$0xf]
        %v338 = vld [vmem:[%s283 + $0x1c] sm:$0xf]
        %v339 = vld [vmem:[%s283 + $0x20] sm:$0xf]
        %v340 = vld [vmem:[%s283 + $0x24] sm:$0xf]
        %v341 = vld [vmem:[%s283 + $0x28] sm:$0xf]
        %v342 = vld [vmem:[%s283 + $0x2c] sm:$0xf]
        %v343 = vld [vmem:[%s283 + $0x30] sm:$0xf]
        %v344 = vld [vmem:[%s283 + $0x34] sm:$0xf]
        %v345 = vld [vmem:[%s283 + $0x38] sm:$0xf]
        %v346 = vld [vmem:[%s283 + $0x3c] sm:$0xf]
        %v347 = vld [vmem:[%s283 + $0x40] sm:$0xf]
        %v348 = vld [vmem:[%s283 + $0x44] sm:$0xf]
        %v349 = vld [vmem:[%s283 + $0x48] sm:$0xf]
        %v350 = vld [vmem:[%s283 + $0x4c] sm:$0xf]
        %v351 = vld [vmem:[%s283 + $0x50] sm:$0xf]
        %v352 = vld [vmem:[%s283 + $0x54] sm:$0xf]
        %v353 = vld [vmem:[%s283 + $0x58] sm:$0xf]
        %v354 = vld [vmem:[%s283 + $0x5c] sm:$0xf]
        %v355 = vld [vmem:[%s283 + $0x60] sm:$0xf]
        %v356 = vld [vmem:[%s283 + $0x64] sm:$0xf]
        %v357 = vld [vmem:[%s283 + $0x68] sm:$0xf]
        %v358 = vld [vmem:[%s283 + $0x6c] sm:$0xf]
        %v359 = vld [vmem:[%s283 + $0x70] sm:$0xf]
        %v360 = vld [vmem:[%s283 + $0x74] sm:$0xf]
        %v361 = vld [vmem:[%s283 + $0x78] sm:$0xf]
        %v362 = vld [vmem:[%s283 + $0x7c] sm:$0xf]
        %v363 = vld [vmem:[#allocation5] sm:$0xff]
        %v364 = vld [vmem:[#allocation5 + $0x8] sm:$0xff]
        %v365 = vld [vmem:[#allocation5 + $0x10] sm:$0xff]
        %v366 = vld [vmem:[#allocation5 + $0x18] sm:$0xff]
        %v367 = vld [vmem:[#allocation5 + $0x20] sm:$0xff]
        %v368 = vld [vmem:[#allocation5 + $0x28] sm:$0xff]
        %v369 = vld [vmem:[#allocation5 + $0x30] sm:$0xff]
        %v370 = vld [vmem:[#allocation5 + $0x38] sm:$0xff]
        %v371 = vld [vmem:[#allocation5 + $0x40] sm:$0xff]
        %v372 = vld [vmem:[#allocation5 + $0x48] sm:$0xff]
        %v373 = vld [vmem:[#allocation5 + $0x50] sm:$0xff]
        %v374 = vld [vmem:[#allocation5 + $0x58] sm:$0xff]
        %v375 = vld [vmem:[#allocation5 + $0x60] sm:$0xff]
        %v376 = vld [vmem:[#allocation5 + $0x68] sm:$0xff]
        %v377 = vld [vmem:[#allocation5 + $0x70] sm:$0xff]
        %v378 = vld [vmem:[#allocation5 + $0x78] sm:$0xff]
        %v379 = vld [vmem:[%s5] ss:$4 sm:$0x3]
        %v381 = vlaneseq
        %v382 = vshrl.u32 %v381, 7
        %v383 = vsub.s32 0, %v382
        %v384 = vrot.slane %v379, %v383
        %v385 = vlaneseq
        %v386 = vshrl.u32 %v385, 7
        %v387 = vsub.s32 1, %v386
        %v388 = vrot.slane %v379, %v387
        %v423 = vunpack.c.l.b16 %v331
        %v424 = vunpack.c.l.b16 %v332
        %v425 = vunpack.c.l.b16 %v333
        %v426 = vunpack.c.l.b16 %v334
        %v427 = vunpack.c.l.b16 %v335
        %v428 = vunpack.c.l.b16 %v336
        %v429 = vunpack.c.l.b16 %v337
        %v430 = vunpack.c.l.b16 %v338
        %v431 = vunpack.c.l.b16 %v339
        %v432 = vunpack.c.l.b16 %v340
        %v433 = vunpack.c.l.b16 %v341
        %v434 = vunpack.c.l.b16 %v342
        %v435 = vunpack.c.l.b16 %v343
        %v436 = vunpack.c.l.b16 %v344
        %v437 = vunpack.c.l.b16 %v345
        %v438 = vunpack.c.l.b16 %v346
        %v439 = vunpack.c.l.b16 %v347
        %v440 = vunpack.c.l.b16 %v348
        %v441 = vunpack.c.l.b16 %v349
        %v442 = vunpack.c.l.b16 %v350
        %v443 = vunpack.c.l.b16 %v351
        %v444 = vunpack.c.l.b16 %v352
        %v445 = vunpack.c.l.b16 %v353
        %v446 = vunpack.c.l.b16 %v354
        %v447 = vunpack.c.l.b16 %v355
        %v448 = vunpack.c.l.b16 %v356
        %v449 = vunpack.c.l.b16 %v357
        %v450 = vunpack.c.l.b16 %v358
        %v451 = vunpack.c.l.b16 %v359
        %v452 = vunpack.c.l.b16 %v360
        %v453 = vunpack.c.l.b16 %v361
        %v454 = vunpack.c.l.b16 %v362
        %v455 = vpack.c.b16 %v424, %v423
        %v456 = vpack.c.b16 %v426, %v425
        %v457 = vpack.c.b16 %v428, %v427
        %v458 = vpack.c.b16 %v430, %v429
        %v459 = vpack.c.b16 %v432, %v431
        %v460 = vpack.c.b16 %v434, %v433
        %v461 = vpack.c.b16 %v436, %v435
        %v462 = vpack.c.b16 %v438, %v437
        %v463 = vpack.c.b16 %v440, %v439
        %v464 = vpack.c.b16 %v442, %v441
        %v465 = vpack.c.b16 %v444, %v443
        %v466 = vpack.c.b16 %v446, %v445
        %v467 = vpack.c.b16 %v448, %v447
        %v468 = vpack.c.b16 %v450, %v449
        %v469 = vpack.c.b16 %v452, %v451
        %v470 = vpack.c.b16 %v454, %v453
        %v503 = vunpack.c.l.b16 %v363
        %v504 = vunpack.c.h.b16 %v363
        %v505 = vunpack.c.l.b16 %v364
        %v506 = vunpack.c.h.b16 %v364
        %v507 = vunpack.c.l.b16 %v365
        %v508 = vunpack.c.h.b16 %v365
        %v509 = vunpack.c.l.b16 %v366
        %v510 = vunpack.c.h.b16 %v366
        %v511 = vunpack.c.l.b16 %v367
        %v512 = vunpack.c.h.b16 %v367
        %v513 = vunpack.c.l.b16 %v368
        %v514 = vunpack.c.h.b16 %v368
        %v515 = vunpack.c.l.b16 %v369
        %v516 = vunpack.c.h.b16 %v369
        %v517 = vunpack.c.l.b16 %v370
        %v518 = vunpack.c.h.b16 %v370
        %v519 = vunpack.c.l.b16 %v371
        %v520 = vunpack.c.h.b16 %v371
        %v521 = vunpack.c.l.b16 %v372
        %v522 = vunpack.c.h.b16 %v372
        %v523 = vunpack.c.l.b16 %v373
        %v524 = vunpack.c.h.b16 %v373
        %v525 = vunpack.c.l.b16 %v374
        %v526 = vunpack.c.h.b16 %v374
        %v527 = vunpack.c.l.b16 %v375
        %v528 = vunpack.c.h.b16 %v375
        %v529 = vunpack.c.l.b16 %v376
        %v530 = vunpack.c.h.b16 %v376
        %v531 = vunpack.c.l.b16 %v377
        %v532 = vunpack.c.h.b16 %v377
        %v533 = vunpack.c.l.b16 %v378
        %v534 = vunpack.c.h.b16 %v378
        %v535 = vpack.c.b16 %v505, %v503
        %v536 = vpack.c.b16 %v506, %v504
        %v537 = vpack.c.b16 %v509, %v507
        %v538 = vpack.c.b16 %v510, %v508
        %v539 = vpack.c.b16 %v513, %v511
        %v540 = vpack.c.b16 %v514, %v512
        %v541 = vpack.c.b16 %v517, %v515
        %v542 = vpack.c.b16 %v518, %v516
        %v543 = vpack.c.b16 %v521, %v519
        %v544 = vpack.c.b16 %v522, %v520
        %v545 = vpack.c.b16 %v525, %v523
        %v546 = vpack.c.b16 %v526, %v524
        %v547 = vpack.c.b16 %v529, %v527
        %v548 = vpack.c.b16 %v530, %v528
        %v549 = vpack.c.b16 %v533, %v531
        %v550 = vpack.c.b16 %v534, %v532
        %567 = vmatprep.subr.bf16.mxu0 %v536
        %568 = vmatpush1.bf16.msra.mxu0 %v535
        %569 = vmatprep.subr.bf16.mxu0 %v538
        %570 = vmatpush1.bf16.msra.mxu0 %v537
        %571 = vmatprep.subr.bf16.mxu0 %v540
        %572 = vmatpush1.bf16.msra.mxu0 %v539
        %573 = vmatprep.subr.bf16.mxu0 %v542
        %574 = vmatpush1.bf16.msra.mxu0 %v541
        %575 = vmatprep.subr.bf16.mxu0 %v544
        %576 = vmatpush1.bf16.msra.mxu0 %v543
        %577 = vmatprep.subr.bf16.mxu0 %v546
        %578 = vmatpush1.bf16.msra.mxu0 %v545
        %579 = vmatprep.subr.bf16.mxu0 %v548
        %580 = vmatpush1.bf16.msra.mxu0 %v547
        %581 = vmatprep.subr.bf16.mxu0 %v550
        %582 = vmatpush1.bf16.msra.mxu0 %v549
        %583 = vmatprep.subr.bf16.mxu0 0
        %584 = vmatpush1.bf16.msra.mxu0 0
        %585 = vmatprep.subr.bf16.mxu0 0
        %586 = vmatpush1.bf16.msra.mxu0 0
        %587 = vmatprep.subr.bf16.mxu0 0
        %588 = vmatpush1.bf16.msra.mxu0 0
        %589 = vmatprep.subr.bf16.mxu0 0
        %590 = vmatpush1.bf16.msra.mxu0 0
        %591 = vmatprep.subr.bf16.mxu0 0
        %592 = vmatpush1.bf16.msra.mxu0 0
        %593 = vmatprep.subr.bf16.mxu0 0
        %594 = vmatpush1.bf16.msra.mxu0 0
        %595 = vmatprep.subr.bf16.mxu0 0
        %596 = vmatpush1.bf16.msra.mxu0 0
        %597 = vmatprep.subr.bf16.mxu0 0
        %598 = vmatpush1.bf16.msra.mxu0 0
        %599 = vmatprep.mubr.bf16.mxu0 0
        %600 = vmatmul.mubr.bf16.gmra.mrb[0].mxu0 %v455
        %v601 = vpop.f32.mrb[0].mxu0
        %v602 = vadd.f32 %v384, %v601
        %v603 = vpop.f32.mrb[0].mxu0
        %v604 = vadd.f32 %v388, %v603
        %v605 = vpop.f32.mrb[0].mxu0
        %v606 = vadd.f32 %v384, %v605
        %v607 = vpop.f32.mrb[0].mxu0
        %v608 = vadd.f32 %v388, %v607
        %609 = vmatprep.mubr.bf16.mxu0 0
        %610 = vmatmul.mubr.bf16.gmra.mrb[0].mxu0 %v456
        %v611 = vpop.f32.mrb[0].mxu0
        %v612 = vadd.f32 %v384, %v611
        %v613 = vpop.f32.mrb[0].mxu0
        %v614 = vadd.f32 %v388, %v613
        %v615 = vpop.f32.mrb[0].mxu0
        %v616 = vadd.f32 %v384, %v615
        %v617 = vpop.f32.mrb[0].mxu0
        %v618 = vadd.f32 %v388, %v617
        %619 = vmatprep.mubr.bf16.mxu0 0
        %620 = vmatmul.mubr.bf16.gmra.mrb[0].mxu0 %v457
        %v621 = vpop.f32.mrb[0].mxu0
        %v622 = vadd.f32 %v384, %v621
        %v623 = vpop.f32.mrb[0].mxu0
        %v624 = vadd.f32 %v388, %v623
        %v625 = vpop.f32.mrb[0].mxu0
        %v626 = vadd.f32 %v384, %v625
        %v627 = vpop.f32.mrb[0].mxu0
        %v628 = vadd.f32 %v388, %v627
        %629 = vmatprep.mubr.bf16.mxu0 0
        %630 = vmatmul.mubr.bf16.gmra.mrb[0].mxu0 %v458
        %v631 = vpop.f32.mrb[0].mxu0
        %v632 = vadd.f32 %v384, %v631
        %v633 = vpop.f32.mrb[0].mxu0
        %v634 = vadd.f32 %v388, %v633
        %v635 = vpop.f32.mrb[0].mxu0
        %v636 = vadd.f32 %v384, %v635
        %v637 = vpop.f32.mrb[0].mxu0
        %v638 = vadd.f32 %v388, %v637
        %639 = vmatprep.mubr.bf16.mxu0 0
        %640 = vmatmul.mubr.bf16.gmra.mrb[0].mxu0 %v459
        %v641 = vpop.f32.mrb[0].mxu0
        %v642 = vadd.f32 %v384, %v641
        %v643 = vpop.f32.mrb[0].mxu0
        %v644 = vadd.f32 %v388, %v643
        %v645 = vpop.f32.mrb[0].mxu0
        %v646 = vadd.f32 %v384, %v645
        %v647 = vpop.f32.mrb[0].mxu0
        %v648 = vadd.f32 %v388, %v647
        %649 = vmatprep.mubr.bf16.mxu0 0
        %650 = vmatmul.mubr.bf16.gmra.mrb[0].mxu0 %v460
        %v651 = vpop.f32.mrb[0].mxu0
        %v652 = vadd.f32 %v384, %v651
        %v653 = vpop.f32.mrb[0].mxu0
        %v654 = vadd.f32 %v388, %v653
        %v655 = vpop.f32.mrb[0].mxu0
        %v656 = vadd.f32 %v384, %v655
        %v657 = vpop.f32.mrb[0].mxu0
        %v658 = vadd.f32 %v388, %v657
        %659 = vmatprep.mubr.bf16.mxu0 0
        %660 = vmatmul.mubr.bf16.gmra.mrb[0].mxu0 %v461
        %v661 = vpop.f32.mrb[0].mxu0
        %v662 = vadd.f32 %v384, %v661
        %v663 = vpop.f32.mrb[0].mxu0
        %v664 = vadd.f32 %v388, %v663
        %v665 = vpop.f32.mrb[0].mxu0
        %v666 = vadd.f32 %v384, %v665
        %v667 = vpop.f32.mrb[0].mxu0
        %v668 = vadd.f32 %v388, %v667
        %669 = vmatprep.mubr.bf16.mxu0 0
        %670 = vmatmul.mubr.bf16.gmra.mrb[0].mxu0 %v462
        %v671 = vpop.f32.mrb[0].mxu0
        %v672 = vadd.f32 %v384, %v671
        %v673 = vpop.f32.mrb[0].mxu0
        %v674 = vadd.f32 %v388, %v673
        %v675 = vpop.f32.mrb[0].mxu0
        %v676 = vadd.f32 %v384, %v675
        %v677 = vpop.f32.mrb[0].mxu0
        %v678 = vadd.f32 %v388, %v677
        %679 = vmatprep.mubr.bf16.mxu0 0
        %680 = vmatmul.mubr.bf16.gmra.mrb[0].mxu0 %v463
        %v681 = vpop.f32.mrb[0].mxu0
        %v682 = vadd.f32 %v384, %v681
        %v683 = vpop.f32.mrb[0].mxu0
        %v684 = vadd.f32 %v388, %v683
        %v685 = vpop.f32.mrb[0].mxu0
        %v686 = vadd.f32 %v384, %v685
        %v687 = vpop.f32.mrb[0].mxu0
        %v688 = vadd.f32 %v388, %v687
        %689 = vmatprep.mubr.bf16.mxu0 0
        %690 = vmatmul.mubr.bf16.gmra.mrb[0].mxu0 %v464
        %v691 = vpop.f32.mrb[0].mxu0
        %v692 = vadd.f32 %v384, %v691
        %v693 = vpop.f32.mrb[0].mxu0
        %v694 = vadd.f32 %v388, %v693
        %v695 = vpop.f32.mrb[0].mxu0
        %v696 = vadd.f32 %v384, %v695
        %v697 = vpop.f32.mrb[0].mxu0
        %v698 = vadd.f32 %v388, %v697
        %699 = vmatprep.mubr.bf16.mxu0 0
        %700 = vmatmul.mubr.bf16.gmra.mrb[0].mxu0 %v465
        %v701 = vpop.f32.mrb[0].mxu0
        %v702 = vadd.f32 %v384, %v701
        %v703 = vpop.f32.mrb[0].mxu0
        %v704 = vadd.f32 %v388, %v703
        %v705 = vpop.f32.mrb[0].mxu0
        %v706 = vadd.f32 %v384, %v705
        %v707 = vpop.f32.mrb[0].mxu0
        %v708 = vadd.f32 %v388, %v707
        %709 = vmatprep.mubr.bf16.mxu0 0
        %710 = vmatmul.mubr.bf16.gmra.mrb[0].mxu0 %v466
        %v711 = vpop.f32.mrb[0].mxu0
        %v712 = vadd.f32 %v384, %v711
        %v713 = vpop.f32.mrb[0].mxu0
        %v714 = vadd.f32 %v388, %v713
        %v715 = vpop.f32.mrb[0].mxu0
        %v716 = vadd.f32 %v384, %v715
        %v717 = vpop.f32.mrb[0].mxu0
        %v718 = vadd.f32 %v388, %v717
        %719 = vmatprep.mubr.bf16.mxu0 0
        %720 = vmatmul.mubr.bf16.gmra.mrb[0].mxu0 %v467
        %v721 = vpop.f32.mrb[0].mxu0
        %v722 = vadd.f32 %v384, %v721
        %v723 = vpop.f32.mrb[0].mxu0
        %v724 = vadd.f32 %v388, %v723
        %v725 = vpop.f32.mrb[0].mxu0
        %v726 = vadd.f32 %v384, %v725
        %v727 = vpop.f32.mrb[0].mxu0
        %v728 = vadd.f32 %v388, %v727
        %729 = vmatprep.mubr.bf16.mxu0 0
        %730 = vmatmul.mubr.bf16.gmra.mrb[0].mxu0 %v468
        %v731 = vpop.f32.mrb[0].mxu0
        %v732 = vadd.f32 %v384, %v731
        %v733 = vpop.f32.mrb[0].mxu0
        %v734 = vadd.f32 %v388, %v733
        %v735 = vpop.f32.mrb[0].mxu0
        %v736 = vadd.f32 %v384, %v735
        %v737 = vpop.f32.mrb[0].mxu0
        %v738 = vadd.f32 %v388, %v737
        %739 = vmatprep.mubr.bf16.mxu0 0
        %740 = vmatmul.mubr.bf16.gmra.mrb[0].mxu0 %v469
        %v741 = vpop.f32.mrb[0].mxu0
        %v742 = vadd.f32 %v384, %v741
        %v743 = vpop.f32.mrb[0].mxu0
        %v744 = vadd.f32 %v388, %v743
        %v745 = vpop.f32.mrb[0].mxu0
        %v746 = vadd.f32 %v384, %v745
        %v747 = vpop.f32.mrb[0].mxu0
        %v748 = vadd.f32 %v388, %v747
        %749 = vmatprep.mubr.bf16.mxu0 0
        %750 = vmatmul.mubr.bf16.gmra.mrb[0].mxu0 %v470
        %v751 = vpop.f32.mrb[0].mxu0
        %v752 = vadd.f32 %v384, %v751
        %v753 = vpop.f32.mrb[0].mxu0
        %v754 = vadd.f32 %v388, %v753
        %v755 = vpop.f32.mrb[0].mxu0
        %v756 = vadd.f32 %v384, %v755
        %v757 = vpop.f32.mrb[0].mxu0
        %v758 = vadd.f32 %v388, %v757
        %759 = vdwg.mxu0
        %v760 = vmax.f32 %v602, 0.0
        %v761 = vmax.f32 %v604, 0.0
        %v762 = vmax.f32 %v606, 0.0
        %v763 = vmax.f32 %v608, 0.0
        %v764 = vmax.f32 %v612, 0.0
        %v765 = vmax.f32 %v614, 0.0
        %v766 = vmax.f32 %v616, 0.0
        %v767 = vmax.f32 %v618, 0.0
        %v768 = vmax.f32 %v622, 0.0
        %v769 = vmax.f32 %v624, 0.0
        %v770 = vmax.f32 %v626, 0.0
        %v771 = vmax.f32 %v628, 0.0
        %v772 = vmax.f32 %v632, 0.0
        %v773 = vmax.f32 %v634, 0.0
        %v774 = vmax.f32 %v636, 0.0
        %v775 = vmax.f32 %v638, 0.0
        %v776 = vmax.f32 %v642, 0.0
        %v777 = vmax.f32 %v644, 0.0
        %v778 = vmax.f32 %v646, 0.0
        %v779 = vmax.f32 %v648, 0.0
        %v780 = vmax.f32 %v652, 0.0
        %v781 = vmax.f32 %v654, 0.0
        %v782 = vmax.f32 %v656, 0.0
        %v783 = vmax.f32 %v658, 0.0
        %v784 = vmax.f32 %v662, 0.0
        %v785 = vmax.f32 %v664, 0.0
        %v786 = vmax.f32 %v666, 0.0
        %v787 = vmax.f32 %v668, 0.0
        %v788 = vmax.f32 %v672, 0.0
        %v789 = vmax.f32 %v674, 0.0
        %v790 = vmax.f32 %v676, 0.0
        %v791 = vmax.f32 %v678, 0.0
        %v792 = vmax.f32 %v682, 0.0
        %v793 = vmax.f32 %v684, 0.0
        %v794 = vmax.f32 %v686, 0.0
        %v795 = vmax.f32 %v688, 0.0
        %v796 = vmax.f32 %v692, 0.0
        %v797 = vmax.f32 %v694, 0.0
        %v798 = vmax.f32 %v696, 0.0
        %v799 = vmax.f32 %v698, 0.0
        %v800 = vmax.f32 %v702, 0.0
        %v801 = vmax.f32 %v704, 0.0
        %v802 = vmax.f32 %v706, 0.0
        %v803 = vmax.f32 %v708, 0.0
        %v804 = vmax.f32 %v712, 0.0
        %v805 = vmax.f32 %v714, 0.0
        %v806 = vmax.f32 %v716, 0.0
        %v807 = vmax.f32 %v718, 0.0
        %v808 = vmax.f32 %v722, 0.0
        %v809 = vmax.f32 %v724, 0.0
        %v810 = vmax.f32 %v726, 0.0
        %v811 = vmax.f32 %v728, 0.0
        %v812 = vmax.f32 %v732, 0.0
        %v813 = vmax.f32 %v734, 0.0
        %v814 = vmax.f32 %v736, 0.0
        %v815 = vmax.f32 %v738, 0.0
        %v816 = vmax.f32 %v742, 0.0
        %v817 = vmax.f32 %v744, 0.0
        %v818 = vmax.f32 %v746, 0.0
        %v819 = vmax.f32 %v748, 0.0
        %v820 = vmax.f32 %v752, 0.0
        %v821 = vmax.f32 %v754, 0.0
        %v822 = vmax.f32 %v756, 0.0
        %v823 = vmax.f32 %v758, 0.0
        %v824 = vpack.c.bf16 %v762, %v760
        %v825 = vpack.c.bf16 %v763, %v761
        %v826 = vpack.c.bf16 %v766, %v764
        %v827 = vpack.c.bf16 %v767, %v765
        %v828 = vpack.c.bf16 %v770, %v768
        %v829 = vpack.c.bf16 %v771, %v769
        %v830 = vpack.c.bf16 %v774, %v772
        %v831 = vpack.c.bf16 %v775, %v773
        %v832 = vpack.c.bf16 %v778, %v776
        %v833 = vpack.c.bf16 %v779, %v777
        %v834 = vpack.c.bf16 %v782, %v780
        %v835 = vpack.c.bf16 %v783, %v781
        %v836 = vpack.c.bf16 %v786, %v784
        %v837 = vpack.c.bf16 %v787, %v785
        %v838 = vpack.c.bf16 %v790, %v788
        %v839 = vpack.c.bf16 %v791, %v789
        %v840 = vpack.c.bf16 %v794, %v792
        %v841 = vpack.c.bf16 %v795, %v793
        %v842 = vpack.c.bf16 %v798, %v796
        %v843 = vpack.c.bf16 %v799, %v797
        %v844 = vpack.c.bf16 %v802, %v800
        %v845 = vpack.c.bf16 %v803, %v801
        %v846 = vpack.c.bf16 %v806, %v804
        %v847 = vpack.c.bf16 %v807, %v805
        %v848 = vpack.c.bf16 %v810, %v808
        %v849 = vpack.c.bf16 %v811, %v809
        %v850 = vpack.c.bf16 %v814, %v812
        %v851 = vpack.c.bf16 %v815, %v813
        %v852 = vpack.c.bf16 %v818, %v816
        %v853 = vpack.c.bf16 %v819, %v817
        %v854 = vpack.c.bf16 %v822, %v820
        %v855 = vpack.c.bf16 %v823, %v821
        %v856 = vld [vmem:[#allocation7] sm:$0xff]
        %v857 = vld [vmem:[#allocation7 + $0x8] sm:$0xff]
        %v858 = vld [vmem:[#allocation7 + $0x10] sm:$0xff]
        %v859 = vld [vmem:[#allocation7 + $0x18] sm:$0xff]
        %v860 = vld [vmem:[#allocation7 + $0x20] sm:$0xff]
        %v861 = vld [vmem:[#allocation7 + $0x28] sm:$0xff]
        %v862 = vld [vmem:[#allocation7 + $0x30] sm:$0xff]
        %v863 = vld [vmem:[#allocation7 + $0x38] sm:$0xff]
        %v864 = vld [vmem:[#allocation7 + $0x40] sm:$0xff]
        %v865 = vld [vmem:[#allocation7 + $0x48] sm:$0xff]
        %v866 = vld [vmem:[#allocation7 + $0x50] sm:$0xff]
        %v867 = vld [vmem:[#allocation7 + $0x58] sm:$0xff]
        %v868 = vld [vmem:[#allocation7 + $0x60] sm:$0xff]
        %v869 = vld [vmem:[#allocation7 + $0x68] sm:$0xff]
        %v870 = vld [vmem:[#allocation7 + $0x70] sm:$0xff]
        %v871 = vld [vmem:[#allocation7 + $0x78] sm:$0xff]
        %v872 = vld [vmem:[#allocation7 + $0x80] sm:$0xff]
        %v873 = vld [vmem:[#allocation7 + $0x88] sm:$0xff]
        %v874 = vld [vmem:[#allocation7 + $0x90] sm:$0xff]
        %v875 = vld [vmem:[#allocation7 + $0x98] sm:$0xff]
        %v876 = vld [vmem:[#allocation7 + $0xa0] sm:$0xff]
        %v877 = vld [vmem:[#allocation7 + $0xa8] sm:$0xff]
        %v878 = vld [vmem:[#allocation7 + $0xb0] sm:$0xff]
        %v879 = vld [vmem:[#allocation7 + $0xb8] sm:$0xff]
        %v880 = vld [vmem:[#allocation7 + $0xc0] sm:$0xff]
        %v881 = vld [vmem:[#allocation7 + $0xc8] sm:$0xff]
        %v882 = vld [vmem:[#allocation7 + $0xd0] sm:$0xff]
        %v883 = vld [vmem:[#allocation7 + $0xd8] sm:$0xff]
        %v884 = vld [vmem:[#allocation7 + $0xe0] sm:$0xff]
        %v885 = vld [vmem:[#allocation7 + $0xe8] sm:$0xff]
        %v886 = vld [vmem:[#allocation7 + $0xf0] sm:$0xff]
        %v887 = vld [vmem:[#allocation7 + $0xf8] sm:$0xff]
        %s888 = scalar_lea.vmem %s5, 1
        %v889 = vld [vmem:[%s888] ss:$4 sm:$0x3]
        %v891 = vlaneseq
        %v892 = vshrl.u32 %v891, 7
        %v893 = vsub.s32 0, %v892
        %v894 = vrot.slane %v889, %v893
        %v895 = vlaneseq
        %v896 = vshrl.u32 %v895, 7
        %v897 = vsub.s32 1, %v896
        %v898 = vrot.slane %v889, %v897
        %v933 = vunpack.c.l.b16 %v856
        %v934 = vunpack.c.h.b16 %v856
        %v935 = vunpack.c.l.b16 %v857
        %v936 = vunpack.c.h.b16 %v857
        %v937 = vunpack.c.l.b16 %v858
        %v938 = vunpack.c.h.b16 %v858
        %v939 = vunpack.c.l.b16 %v859
        %v940 = vunpack.c.h.b16 %v859
        %v941 = vunpack.c.l.b16 %v860
        %v942 = vunpack.c.h.b16 %v860
        %v943 = vunpack.c.l.b16 %v861
        %v944 = vunpack.c.h.b16 %v861
        %v945 = vunpack.c.l.b16 %v862
        %v946 = vunpack.c.h.b16 %v862
        %v947 = vunpack.c.l.b16 %v863
        %v948 = vunpack.c.h.b16 %v863
        %v949 = vunpack.c.l.b16 %v864
        %v950 = vunpack.c.h.b16 %v864
        %v951 = vunpack.c.l.b16 %v865
        %v952 = vunpack.c.h.b16 %v865
        %v953 = vunpack.c.l.b16 %v866
        %v954 = vunpack.c.h.b16 %v866
        %v955 = vunpack.c.l.b16 %v867
        %v956 = vunpack.c.h.b16 %v867
        %v957 = vunpack.c.l.b16 %v868
        %v958 = vunpack.c.h.b16 %v868
        %v959 = vunpack.c.l.b16 %v869
        %v960 = vunpack.c.h.b16 %v869
        %v961 = vunpack.c.l.b16 %v870
        %v962 = vunpack.c.h.b16 %v870
        %v963 = vunpack.c.l.b16 %v871
        %v964 = vunpack.c.h.b16 %v871
        %v965 = vunpack.c.l.b16 %v872
        %v966 = vunpack.c.h.b16 %v872
        %v967 = vunpack.c.l.b16 %v873
        %v968 = vunpack.c.h.b16 %v873
        %v969 = vunpack.c.l.b16 %v874
        %v970 = vunpack.c.h.b16 %v874
        %v971 = vunpack.c.l.b16 %v875
        %v972 = vunpack.c.h.b16 %v875
        %v973 = vunpack.c.l.b16 %v876
        %v974 = vunpack.c.h.b16 %v876
        %v975 = vunpack.c.l.b16 %v877
        %v976 = vunpack.c.h.b16 %v877
        %v977 = vunpack.c.l.b16 %v878
        %v978 = vunpack.c.h.b16 %v878
        %v979 = vunpack.c.l.b16 %v879
        %v980 = vunpack.c.h.b16 %v879
        %v981 = vunpack.c.l.b16 %v880
        %v982 = vunpack.c.h.b16 %v880
        %v983 = vunpack.c.l.b16 %v881
        %v984 = vunpack.c.h.b16 %v881
        %v985 = vunpack.c.l.b16 %v882
        %v986 = vunpack.c.h.b16 %v882
        %v987 = vunpack.c.l.b16 %v883
        %v988 = vunpack.c.h.b16 %v883
        %v989 = vunpack.c.l.b16 %v884
        %v990 = vunpack.c.h.b16 %v884
        %v991 = vunpack.c.l.b16 %v885
        %v992 = vunpack.c.h.b16 %v885
        %v993 = vunpack.c.l.b16 %v886
        %v994 = vunpack.c.h.b16 %v886
        %v995 = vunpack.c.l.b16 %v887
        %v996 = vunpack.c.h.b16 %v887
        %v997 = vpack.c.b16 %v935, %v933
        %v998 = vpack.c.b16 %v936, %v934
        %v999 = vpack.c.b16 %v939, %v937
        %v1000 = vpack.c.b16 %v940, %v938
        %v1001 = vpack.c.b16 %v943, %v941
        %v1002 = vpack.c.b16 %v944, %v942
        %v1003 = vpack.c.b16 %v947, %v945
        %v1004 = vpack.c.b16 %v948, %v946
        %v1005 = vpack.c.b16 %v951, %v949
        %v1006 = vpack.c.b16 %v952, %v950
        %v1007 = vpack.c.b16 %v955, %v953
        %v1008 = vpack.c.b16 %v956, %v954
        %v1009 = vpack.c.b16 %v959, %v957
        %v1010 = vpack.c.b16 %v960, %v958
        %v1011 = vpack.c.b16 %v963, %v961
        %v1012 = vpack.c.b16 %v964, %v962
        %v1013 = vpack.c.b16 %v967, %v965
        %v1014 = vpack.c.b16 %v968, %v966
        %v1015 = vpack.c.b16 %v971, %v969
        %v1016 = vpack.c.b16 %v972, %v970
        %v1017 = vpack.c.b16 %v975, %v973
        %v1018 = vpack.c.b16 %v976, %v974
        %v1019 = vpack.c.b16 %v979, %v977
        %v1020 = vpack.c.b16 %v980, %v978
        %v1021 = vpack.c.b16 %v983, %v981
        %v1022 = vpack.c.b16 %v984, %v982
        %v1023 = vpack.c.b16 %v987, %v985
        %v1024 = vpack.c.b16 %v988, %v986
        %v1025 = vpack.c.b16 %v991, %v989
        %v1026 = vpack.c.b16 %v992, %v990
        %v1027 = vpack.c.b16 %v995, %v993
        %v1028 = vpack.c.b16 %v996, %v994
        %1061 = vmatprep.subr.bf16.mxu0 %v998
        %1062 = vmatpush1.bf16.msra.mxu0 %v997
        %1063 = vmatprep.subr.bf16.mxu0 %v1000
        %1064 = vmatpush1.bf16.msra.mxu0 %v999
        %1065 = vmatprep.subr.bf16.mxu0 %v1002
        %1066 = vmatpush1.bf16.msra.mxu0 %v1001
        %1067 = vmatprep.subr.bf16.mxu0 %v1004
        %1068 = vmatpush1.bf16.msra.mxu0 %v1003
        %1069 = vmatprep.subr.bf16.mxu0 %v1006
        %1070 = vmatpush1.bf16.msra.mxu0 %v1005
        %1071 = vmatprep.subr.bf16.mxu0 %v1008
        %1072 = vmatpush1.bf16.msra.mxu0 %v1007
        %1073 = vmatprep.subr.bf16.mxu0 %v1010
        %1074 = vmatpush1.bf16.msra.mxu0 %v1009
        %1075 = vmatprep.subr.bf16.mxu0 %v1012
        %1076 = vmatpush1.bf16.msra.mxu0 %v1011
        %1077 = vmatprep.subr.bf16.mxu0 %v1014
        %1078 = vmatpush1.bf16.msra.mxu0 %v1013
        %1079 = vmatprep.subr.bf16.mxu0 %v1016
        %1080 = vmatpush1.bf16.msra.mxu0 %v1015
        %1081 = vmatprep.subr.bf16.mxu0 %v1018
        %1082 = vmatpush1.bf16.msra.mxu0 %v1017
        %1083 = vmatprep.subr.bf16.mxu0 %v1020
        %1084 = vmatpush1.bf16.msra.mxu0 %v1019
        %1085 = vmatprep.subr.bf16.mxu0 %v1022
        %1086 = vmatpush1.bf16.msra.mxu0 %v1021
        %1087 = vmatprep.subr.bf16.mxu0 %v1024
        %1088 = vmatpush1.bf16.msra.mxu0 %v1023
        %1089 = vmatprep.subr.bf16.mxu0 %v1026
        %1090 = vmatpush1.bf16.msra.mxu0 %v1025
        %1091 = vmatprep.subr.bf16.mxu0 %v1028
        %1092 = vmatpush1.bf16.msra.mxu0 %v1027
        %1093 = vmatprep.mubr.bf16.mxu0 %v825
        %1094 = vmatmul.mubr.bf16.gmra.mrb[0].mxu0 %v824
        %v1095 = vpop.f32.mrb[0].mxu0
        %v1096 = vadd.f32 %v894, %v1095
        %v1097 = vpop.f32.mrb[0].mxu0
        %v1098 = vadd.f32 %v898, %v1097
        %v1099 = vpop.f32.mrb[0].mxu0
        %v1100 = vadd.f32 %v894, %v1099
        %v1101 = vpop.f32.mrb[0].mxu0
        %v1102 = vadd.f32 %v898, %v1101
        %1103 = vmatprep.mubr.bf16.mxu0 %v827
        %1104 = vmatmul.mubr.bf16.gmra.mrb[0].mxu0 %v826
        %v1105 = vpop.f32.mrb[0].mxu0
        %v1106 = vadd.f32 %v894, %v1105
        %v1107 = vpop.f32.mrb[0].mxu0
        %v1108 = vadd.f32 %v898, %v1107
        %v1109 = vpop.f32.mrb[0].mxu0
        %v1110 = vadd.f32 %v894, %v1109
        %v1111 = vpop.f32.mrb[0].mxu0
        %v1112 = vadd.f32 %v898, %v1111
        %1113 = vmatprep.mubr.bf16.mxu0 %v829
        %1114 = vmatmul.mubr.bf16.gmra.mrb[0].mxu0 %v828
        %v1115 = vpop.f32.mrb[0].mxu0
        %v1116 = vadd.f32 %v894, %v1115
        %v1117 = vpop.f32.mrb[0].mxu0
        %v1118 = vadd.f32 %v898, %v1117
        %v1119 = vpop.f32.mrb[0].mxu0
        %v1120 = vadd.f32 %v894, %v1119
        %v1121 = vpop.f32.mrb[0].mxu0
        %v1122 = vadd.f32 %v898, %v1121
        %1123 = vmatprep.mubr.bf16.mxu0 %v831
        %1124 = vmatmul.mubr.bf16.gmra.mrb[0].mxu0 %v830
        %v1125 = vpop.f32.mrb[0].mxu0
        %v1126 = vadd.f32 %v894, %v1125
        %v1127 = vpop.f32.mrb[0].mxu0
        %v1128 = vadd.f32 %v898, %v1127
        %v1129 = vpop.f32.mrb[0].mxu0
        %v1130 = vadd.f32 %v894, %v1129
        %v1131 = vpop.f32.mrb[0].mxu0
        %v1132 = vadd.f32 %v898, %v1131
        %1133 = vmatprep.mubr.bf16.mxu0 %v833
        %1134 = vmatmul.mubr.bf16.gmra.mrb[0].mxu0 %v832
        %v1135 = vpop.f32.mrb[0].mxu0
        %v1136 = vadd.f32 %v894, %v1135
        %v1137 = vpop.f32.mrb[0].mxu0
        %v1138 = vadd.f32 %v898, %v1137
        %v1139 = vpop.f32.mrb[0].mxu0
        %v1140 = vadd.f32 %v894, %v1139
        %v1141 = vpop.f32.mrb[0].mxu0
        %v1142 = vadd.f32 %v898, %v1141
        %1143 = vmatprep.mubr.bf16.mxu0 %v835
        %1144 = vmatmul.mubr.bf16.gmra.mrb[0].mxu0 %v834
        %v1145 = vpop.f32.mrb[0].mxu0
        %v1146 = vadd.f32 %v894, %v1145
        %v1147 = vpop.f32.mrb[0].mxu0
        %v1148 = vadd.f32 %v898, %v1147
        %v1149 = vpop.f32.mrb[0].mxu0
        %v1150 = vadd.f32 %v894, %v1149
        %v1151 = vpop.f32.mrb[0].mxu0
        %v1152 = vadd.f32 %v898, %v1151
        %1153 = vmatprep.mubr.bf16.mxu0 %v837
        %1154 = vmatmul.mubr.bf16.gmra.mrb[0].mxu0 %v836
        %v1155 = vpop.f32.mrb[0].mxu0
        %v1156 = vadd.f32 %v894, %v1155
        %v1157 = vpop.f32.mrb[0].mxu0
        %v1158 = vadd.f32 %v898, %v1157
        %v1159 = vpop.f32.mrb[0].mxu0
        %v1160 = vadd.f32 %v894, %v1159
        %v1161 = vpop.f32.mrb[0].mxu0
        %v1162 = vadd.f32 %v898, %v1161
        %1163 = vmatprep.mubr.bf16.mxu0 %v839
        %1164 = vmatmul.mubr.bf16.gmra.mrb[0].mxu0 %v838
        %v1165 = vpop.f32.mrb[0].mxu0
        %v1166 = vadd.f32 %v894, %v1165
        %v1167 = vpop.f32.mrb[0].mxu0
        %v1168 = vadd.f32 %v898, %v1167
        %v1169 = vpop.f32.mrb[0].mxu0
        %v1170 = vadd.f32 %v894, %v1169
        %v1171 = vpop.f32.mrb[0].mxu0
        %v1172 = vadd.f32 %v898, %v1171
        %1173 = vmatprep.mubr.bf16.mxu0 %v841
        %1174 = vmatmul.mubr.bf16.gmra.mrb[0].mxu0 %v840
        %v1175 = vpop.f32.mrb[0].mxu0
        %v1176 = vadd.f32 %v894, %v1175
        %v1177 = vpop.f32.mrb[0].mxu0
        %v1178 = vadd.f32 %v898, %v1177
        %v1179 = vpop.f32.mrb[0].mxu0
        %v1180 = vadd.f32 %v894, %v1179
        %v1181 = vpop.f32.mrb[0].mxu0
        %v1182 = vadd.f32 %v898, %v1181
        %1183 = vmatprep.mubr.bf16.mxu0 %v843
        %1184 = vmatmul.mubr.bf16.gmra.mrb[0].mxu0 %v842
        %v1185 = vpop.f32.mrb[0].mxu0
        %v1186 = vadd.f32 %v894, %v1185
        %v1187 = vpop.f32.mrb[0].mxu0
        %v1188 = vadd.f32 %v898, %v1187
        %v1189 = vpop.f32.mrb[0].mxu0
        %v1190 = vadd.f32 %v894, %v1189
        %v1191 = vpop.f32.mrb[0].mxu0
        %v1192 = vadd.f32 %v898, %v1191
        %1193 = vmatprep.mubr.bf16.mxu0 %v845
        %1194 = vmatmul.mubr.bf16.gmra.mrb[0].mxu0 %v844
        %v1195 = vpop.f32.mrb[0].mxu0
        %v1196 = vadd.f32 %v894, %v1195
        %v1197 = vpop.f32.mrb[0].mxu0
        %v1198 = vadd.f32 %v898, %v1197
        %v1199 = vpop.f32.mrb[0].mxu0
        %v1200 = vadd.f32 %v894, %v1199
        %v1201 = vpop.f32.mrb[0].mxu0
        %v1202 = vadd.f32 %v898, %v1201
        %1203 = vmatprep.mubr.bf16.mxu0 %v847
        %1204 = vmatmul.mubr.bf16.gmra.mrb[0].mxu0 %v846
        %v1205 = vpop.f32.mrb[0].mxu0
        %v1206 = vadd.f32 %v894, %v1205
        %v1207 = vpop.f32.mrb[0].mxu0
        %v1208 = vadd.f32 %v898, %v1207
        %v1209 = vpop.f32.mrb[0].mxu0
        %v1210 = vadd.f32 %v894, %v1209
        %v1211 = vpop.f32.mrb[0].mxu0
        %v1212 = vadd.f32 %v898, %v1211
        %1213 = vmatprep.mubr.bf16.mxu0 %v849
        %1214 = vmatmul.mubr.bf16.gmra.mrb[0].mxu0 %v848
        %v1215 = vpop.f32.mrb[0].mxu0
        %v1216 = vadd.f32 %v894, %v1215
        %v1217 = vpop.f32.mrb[0].mxu0
        %v1218 = vadd.f32 %v898, %v1217
        %v1219 = vpop.f32.mrb[0].mxu0
        %v1220 = vadd.f32 %v894, %v1219
        %v1221 = vpop.f32.mrb[0].mxu0
        %v1222 = vadd.f32 %v898, %v1221
        %1223 = vmatprep.mubr.bf16.mxu0 %v851
        %1224 = vmatmul.mubr.bf16.gmra.mrb[0].mxu0 %v850
        %v1225 = vpop.f32.mrb[0].mxu0
        %v1226 = vadd.f32 %v894, %v1225
        %v1227 = vpop.f32.mrb[0].mxu0
        %v1228 = vadd.f32 %v898, %v1227
        %v1229 = vpop.f32.mrb[0].mxu0
        %v1230 = vadd.f32 %v894, %v1229
        %v1231 = vpop.f32.mrb[0].mxu0
        %v1232 = vadd.f32 %v898, %v1231
        %1233 = vmatprep.mubr.bf16.mxu0 %v853
        %1234 = vmatmul.mubr.bf16.gmra.mrb[0].mxu0 %v852
        %v1235 = vpop.f32.mrb[0].mxu0
        %v1236 = vadd.f32 %v894, %v1235
        %v1237 = vpop.f32.mrb[0].mxu0
        %v1238 = vadd.f32 %v898, %v1237
        %v1239 = vpop.f32.mrb[0].mxu0
        %v1240 = vadd.f32 %v894, %v1239
        %v1241 = vpop.f32.mrb[0].mxu0
        %v1242 = vadd.f32 %v898, %v1241
        %1243 = vmatprep.mubr.bf16.mxu0 %v855
        %1244 = vmatmul.mubr.bf16.gmra.mrb[0].mxu0 %v854
        %v1245 = vpop.f32.mrb[0].mxu0
        %v1246 = vadd.f32 %v894, %v1245
        %v1247 = vpop.f32.mrb[0].mxu0
        %v1248 = vadd.f32 %v898, %v1247
        %v1249 = vpop.f32.mrb[0].mxu0
        %v1250 = vadd.f32 %v894, %v1249
        %v1251 = vpop.f32.mrb[0].mxu0
        %v1252 = vadd.f32 %v898, %v1251
        %1253 = vdwg.mxu0
        %v1254 = vmax.f32 %v1096, 0.0
        %v1255 = vmax.f32 %v1098, 0.0
        %v1256 = vmax.f32 %v1100, 0.0
        %v1257 = vmax.f32 %v1102, 0.0
        %v1258 = vmax.f32 %v1106, 0.0
        %v1259 = vmax.f32 %v1108, 0.0
        %v1260 = vmax.f32 %v1110, 0.0
        %v1261 = vmax.f32 %v1112, 0.0
        %v1262 = vmax.f32 %v1116, 0.0
        %v1263 = vmax.f32 %v1118, 0.0
        %v1264 = vmax.f32 %v1120, 0.0
        %v1265 = vmax.f32 %v1122, 0.0
        %v1266 = vmax.f32 %v1126, 0.0
        %v1267 = vmax.f32 %v1128, 0.0
        %v1268 = vmax.f32 %v1130, 0.0
        %v1269 = vmax.f32 %v1132, 0.0
        %v1270 = vmax.f32 %v1136, 0.0
        %v1271 = vmax.f32 %v1138, 0.0
        %v1272 = vmax.f32 %v1140, 0.0
        %v1273 = vmax.f32 %v1142, 0.0
        %v1274 = vmax.f32 %v1146, 0.0
        %v1275 = vmax.f32 %v1148, 0.0
        %v1276 = vmax.f32 %v1150, 0.0
        %v1277 = vmax.f32 %v1152, 0.0
        %v1278 = vmax.f32 %v1156, 0.0
        %v1279 = vmax.f32 %v1158, 0.0
        %v1280 = vmax.f32 %v1160, 0.0
        %v1281 = vmax.f32 %v1162, 0.0
        %v1282 = vmax.f32 %v1166, 0.0
        %v1283 = vmax.f32 %v1168, 0.0
        %v1284 = vmax.f32 %v1170, 0.0
        %v1285 = vmax.f32 %v1172, 0.0
        %v1286 = vmax.f32 %v1176, 0.0
        %v1287 = vmax.f32 %v1178, 0.0
        %v1288 = vmax.f32 %v1180, 0.0
        %v1289 = vmax.f32 %v1182, 0.0
        %v1290 = vmax.f32 %v1186, 0.0
        %v1291 = vmax.f32 %v1188, 0.0
        %v1292 = vmax.f32 %v1190, 0.0
        %v1293 = vmax.f32 %v1192, 0.0
        %v1294 = vmax.f32 %v1196, 0.0
        %v1295 = vmax.f32 %v1198, 0.0
        %v1296 = vmax.f32 %v1200, 0.0
        %v1297 = vmax.f32 %v1202, 0.0
        %v1298 = vmax.f32 %v1206, 0.0
        %v1299 = vmax.f32 %v1208, 0.0
        %v1300 = vmax.f32 %v1210, 0.0
        %v1301 = vmax.f32 %v1212, 0.0
        %v1302 = vmax.f32 %v1216, 0.0
        %v1303 = vmax.f32 %v1218, 0.0
        %v1304 = vmax.f32 %v1220, 0.0
        %v1305 = vmax.f32 %v1222, 0.0
        %v1306 = vmax.f32 %v1226, 0.0
        %v1307 = vmax.f32 %v1228, 0.0
        %v1308 = vmax.f32 %v1230, 0.0
        %v1309 = vmax.f32 %v1232, 0.0
        %v1310 = vmax.f32 %v1236, 0.0
        %v1311 = vmax.f32 %v1238, 0.0
        %v1312 = vmax.f32 %v1240, 0.0
        %v1313 = vmax.f32 %v1242, 0.0
        %v1314 = vmax.f32 %v1246, 0.0
        %v1315 = vmax.f32 %v1248, 0.0
        %v1316 = vmax.f32 %v1250, 0.0
        %v1317 = vmax.f32 %v1252, 0.0
        %v1318 = vpack.c.bf16 %v1256, %v1254
        %v1319 = vpack.c.bf16 %v1257, %v1255
        %v1320 = vpack.c.bf16 %v1260, %v1258
        %v1321 = vpack.c.bf16 %v1261, %v1259
        %v1322 = vpack.c.bf16 %v1264, %v1262
        %v1323 = vpack.c.bf16 %v1265, %v1263
        %v1324 = vpack.c.bf16 %v1268, %v1266
        %v1325 = vpack.c.bf16 %v1269, %v1267
        %v1326 = vpack.c.bf16 %v1272, %v1270
        %v1327 = vpack.c.bf16 %v1273, %v1271
        %v1328 = vpack.c.bf16 %v1276, %v1274
        %v1329 = vpack.c.bf16 %v1277, %v1275
        %v1330 = vpack.c.bf16 %v1280, %v1278
        %v1331 = vpack.c.bf16 %v1281, %v1279
        %v1332 = vpack.c.bf16 %v1284, %v1282
        %v1333 = vpack.c.bf16 %v1285, %v1283
        %v1334 = vpack.c.bf16 %v1288, %v1286
        %v1335 = vpack.c.bf16 %v1289, %v1287
        %v1336 = vpack.c.bf16 %v1292, %v1290
        %v1337 = vpack.c.bf16 %v1293, %v1291
        %v1338 = vpack.c.bf16 %v1296, %v1294
        %v1339 = vpack.c.bf16 %v1297, %v1295
        %v1340 = vpack.c.bf16 %v1300, %v1298
        %v1341 = vpack.c.bf16 %v1301, %v1299
        %v1342 = vpack.c.bf16 %v1304, %v1302
        %v1343 = vpack.c.bf16 %v1305, %v1303
        %v1344 = vpack.c.bf16 %v1308, %v1306
        %v1345 = vpack.c.bf16 %v1309, %v1307
        %v1346 = vpack.c.bf16 %v1312, %v1310
        %v1347 = vpack.c.bf16 %v1313, %v1311
        %v1348 = vpack.c.bf16 %v1316, %v1314
        %v1349 = vpack.c.bf16 %v1317, %v1315
        %v1350 = vld [vmem:[#allocation8] sm:$0xff]
        %v1351 = vld [vmem:[#allocation8 + $0x8] sm:$0xff]
        %v1352 = vld [vmem:[#allocation8 + $0x10] sm:$0xff]
        %v1353 = vld [vmem:[#allocation8 + $0x18] sm:$0xff]
        %v1354 = vld [vmem:[#allocation8 + $0x20] sm:$0xff]
        %v1355 = vld [vmem:[#allocation8 + $0x28] sm:$0xff]
        %v1356 = vld [vmem:[#allocation8 + $0x30] sm:$0xff]
        %v1357 = vld [vmem:[#allocation8 + $0x38] sm:$0xff]
        %v1358 = vld [vmem:[#allocation8 + $0x40] sm:$0xff]
        %v1359 = vld [vmem:[#allocation8 + $0x48] sm:$0xff]
        %v1360 = vld [vmem:[#allocation8 + $0x50] sm:$0xff]
        %v1361 = vld [vmem:[#allocation8 + $0x58] sm:$0xff]
        %v1362 = vld [vmem:[#allocation8 + $0x60] sm:$0xff]
        %v1363 = vld [vmem:[#allocation8 + $0x68] sm:$0xff]
        %v1364 = vld [vmem:[#allocation8 + $0x70] sm:$0xff]
        %v1365 = vld [vmem:[#allocation8 + $0x78] sm:$0xff]
        %v1366 = vld [vmem:[#allocation8 + $0x80] sm:$0xff]
        %v1367 = vld [vmem:[#allocation8 + $0x88] sm:$0xff]
        %v1368 = vld [vmem:[#allocation8 + $0x90] sm:$0xff]
        %v1369 = vld [vmem:[#allocation8 + $0x98] sm:$0xff]
        %v1370 = vld [vmem:[#allocation8 + $0xa0] sm:$0xff]
        %v1371 = vld [vmem:[#allocation8 + $0xa8] sm:$0xff]
        %v1372 = vld [vmem:[#allocation8 + $0xb0] sm:$0xff]
        %v1373 = vld [vmem:[#allocation8 + $0xb8] sm:$0xff]
        %v1374 = vld [vmem:[#allocation8 + $0xc0] sm:$0xff]
        %v1375 = vld [vmem:[#allocation8 + $0xc8] sm:$0xff]
        %v1376 = vld [vmem:[#allocation8 + $0xd0] sm:$0xff]
        %v1377 = vld [vmem:[#allocation8 + $0xd8] sm:$0xff]
        %v1378 = vld [vmem:[#allocation8 + $0xe0] sm:$0xff]
        %v1379 = vld [vmem:[#allocation8 + $0xe8] sm:$0xff]
        %v1380 = vld [vmem:[#allocation8 + $0xf0] sm:$0xff]
        %v1381 = vld [vmem:[#allocation8 + $0xf8] sm:$0xff]
        %s1382 = scalar_lea.vmem %s5, 2
        %v1383 = vld [vmem:[%s1382] ss:$4 sm:$0x3]
        %v1385 = vlaneseq
        %v1386 = vshrl.u32 %v1385, 7
        %v1387 = vsub.s32 0, %v1386
        %v1388 = vrot.slane %v1383, %v1387
        %v1389 = vlaneseq
        %v1390 = vshrl.u32 %v1389, 7
        %v1391 = vsub.s32 1, %v1390
        %v1392 = vrot.slane %v1383, %v1391
        %v1427 = vunpack.c.l.b16 %v1350
        %v1428 = vunpack.c.h.b16 %v1350
        %v1429 = vunpack.c.l.b16 %v1351
        %v1430 = vunpack.c.h.b16 %v1351
        %v1431 = vunpack.c.l.b16 %v1352
        %v1432 = vunpack.c.h.b16 %v1352
        %v1433 = vunpack.c.l.b16 %v1353
        %v1434 = vunpack.c.h.b16 %v1353
        %v1435 = vunpack.c.l.b16 %v1354
        %v1436 = vunpack.c.h.b16 %v1354
        %v1437 = vunpack.c.l.b16 %v1355
        %v1438 = vunpack.c.h.b16 %v1355
        %v1439 = vunpack.c.l.b16 %v1356
        %v1440 = vunpack.c.h.b16 %v1356
        %v1441 = vunpack.c.l.b16 %v1357
        %v1442 = vunpack.c.h.b16 %v1357
        %v1443 = vunpack.c.l.b16 %v1358
        %v1444 = vunpack.c.h.b16 %v1358
        %v1445 = vunpack.c.l.b16 %v1359
        %v1446 = vunpack.c.h.b16 %v1359
        %v1447 = vunpack.c.l.b16 %v1360
        %v1448 = vunpack.c.h.b16 %v1360
        %v1449 = vunpack.c.l.b16 %v1361
        %v1450 = vunpack.c.h.b16 %v1361
        %v1451 = vunpack.c.l.b16 %v1362
        %v1452 = vunpack.c.h.b16 %v1362
        %v1453 = vunpack.c.l.b16 %v1363
        %v1454 = vunpack.c.h.b16 %v1363
        %v1455 = vunpack.c.l.b16 %v1364
        %v1456 = vunpack.c.h.b16 %v1364
        %v1457 = vunpack.c.l.b16 %v1365
        %v1458 = vunpack.c.h.b16 %v1365
        %v1459 = vunpack.c.l.b16 %v1366
        %v1460 = vunpack.c.h.b16 %v1366
        %v1461 = vunpack.c.l.b16 %v1367
        %v1462 = vunpack.c.h.b16 %v1367
        %v1463 = vunpack.c.l.b16 %v1368
        %v1464 = vunpack.c.h.b16 %v1368
        %v1465 = vunpack.c.l.b16 %v1369
        %v1466 = vunpack.c.h.b16 %v1369
        %v1467 = vunpack.c.l.b16 %v1370
        %v1468 = vunpack.c.h.b16 %v1370
        %v1469 = vunpack.c.l.b16 %v1371
        %v1470 = vunpack.c.h.b16 %v1371
        %v1471 = vunpack.c.l.b16 %v1372
        %v1472 = vunpack.c.h.b16 %v1372
        %v1473 = vunpack.c.l.b16 %v1373
        %v1474 = vunpack.c.h.b16 %v1373
        %v1475 = vunpack.c.l.b16 %v1374
        %v1476 = vunpack.c.h.b16 %v1374
        %v1477 = vunpack.c.l.b16 %v1375
        %v1478 = vunpack.c.h.b16 %v1375
        %v1479 = vunpack.c.l.b16 %v1376
        %v1480 = vunpack.c.h.b16 %v1376
        %v1481 = vunpack.c.l.b16 %v1377
        %v1482 = vunpack.c.h.b16 %v1377
        %v1483 = vunpack.c.l.b16 %v1378
        %v1484 = vunpack.c.h.b16 %v1378
        %v1485 = vunpack.c.l.b16 %v1379
        %v1486 = vunpack.c.h.b16 %v1379
        %v1487 = vunpack.c.l.b16 %v1380
        %v1488 = vunpack.c.h.b16 %v1380
        %v1489 = vunpack.c.l.b16 %v1381
        %v1490 = vunpack.c.h.b16 %v1381
        %v1491 = vpack.c.b16 %v1429, %v1427
        %v1492 = vpack.c.b16 %v1430, %v1428
        %v1493 = vpack.c.b16 %v1433, %v1431
        %v1494 = vpack.c.b16 %v1434, %v1432
        %v1495 = vpack.c.b16 %v1437, %v1435
        %v1496 = vpack.c.b16 %v1438, %v1436
        %v1497 = vpack.c.b16 %v1441, %v1439
        %v1498 = vpack.c.b16 %v1442, %v1440
        %v1499 = vpack.c.b16 %v1445, %v1443
        %v1500 = vpack.c.b16 %v1446, %v1444
        %v1501 = vpack.c.b16 %v1449, %v1447
        %v1502 = vpack.c.b16 %v1450, %v1448
        %v1503 = vpack.c.b16 %v1453, %v1451
        %v1504 = vpack.c.b16 %v1454, %v1452
        %v1505 = vpack.c.b16 %v1457, %v1455
        %v1506 = vpack.c.b16 %v1458, %v1456
        %v1507 = vpack.c.b16 %v1461, %v1459
        %v1508 = vpack.c.b16 %v1462, %v1460
        %v1509 = vpack.c.b16 %v1465, %v1463
        %v1510 = vpack.c.b16 %v1466, %v1464
        %v1511 = vpack.c.b16 %v1469, %v1467
        %v1512 = vpack.c.b16 %v1470, %v1468
        %v1513 = vpack.c.b16 %v1473, %v1471
        %v1514 = vpack.c.b16 %v1474, %v1472
        %v1515 = vpack.c.b16 %v1477, %v1475
        %v1516 = vpack.c.b16 %v1478, %v1476
        %v1517 = vpack.c.b16 %v1481, %v1479
        %v1518 = vpack.c.b16 %v1482, %v1480
        %v1519 = vpack.c.b16 %v1485, %v1483
        %v1520 = vpack.c.b16 %v1486, %v1484
        %v1521 = vpack.c.b16 %v1489, %v1487
        %v1522 = vpack.c.b16 %v1490, %v1488
        %1555 = vmatprep.subr.bf16.mxu0 %v1492
        %1556 = vmatpush1.bf16.msra.mxu0 %v1491
        %1557 = vmatprep.subr.bf16.mxu0 %v1494
        %1558 = vmatpush1.bf16.msra.mxu0 %v1493
        %1559 = vmatprep.subr.bf16.mxu0 %v1496
        %1560 = vmatpush1.bf16.msra.mxu0 %v1495
        %1561 = vmatprep.subr.bf16.mxu0 %v1498
        %1562 = vmatpush1.bf16.msra.mxu0 %v1497
        %1563 = vmatprep.subr.bf16.mxu0 %v1500
        %1564 = vmatpush1.bf16.msra.mxu0 %v1499
        %1565 = vmatprep.subr.bf16.mxu0 %v1502
        %1566 = vmatpush1.bf16.msra.mxu0 %v1501
        %1567 = vmatprep.subr.bf16.mxu0 %v1504
        %1568 = vmatpush1.bf16.msra.mxu0 %v1503
        %1569 = vmatprep.subr.bf16.mxu0 %v1506
        %1570 = vmatpush1.bf16.msra.mxu0 %v1505
        %1571 = vmatprep.subr.bf16.mxu0 %v1508
        %1572 = vmatpush1.bf16.msra.mxu0 %v1507
        %1573 = vmatprep.subr.bf16.mxu0 %v1510
        %1574 = vmatpush1.bf16.msra.mxu0 %v1509
        %1575 = vmatprep.subr.bf16.mxu0 %v1512
        %1576 = vmatpush1.bf16.msra.mxu0 %v1511
        %1577 = vmatprep.subr.bf16.mxu0 %v1514
        %1578 = vmatpush1.bf16.msra.mxu0 %v1513
        %1579 = vmatprep.subr.bf16.mxu0 %v1516
        %1580 = vmatpush1.bf16.msra.mxu0 %v1515
        %1581 = vmatprep.subr.bf16.mxu0 %v1518
        %1582 = vmatpush1.bf16.msra.mxu0 %v1517
        %1583 = vmatprep.subr.bf16.mxu0 %v1520
        %1584 = vmatpush1.bf16.msra.mxu0 %v1519
        %1585 = vmatprep.subr.bf16.mxu0 %v1522
        %1586 = vmatpush1.bf16.msra.mxu0 %v1521
        %1587 = vmatprep.mubr.bf16.mxu0 %v1319
        %1588 = vmatmul.mubr.bf16.gmra.mrb[0].mxu0 %v1318
        %v1589 = vpop.f32.mrb[0].mxu0
        %v1590 = vadd.f32 %v1388, %v1589
        %v1591 = vpop.f32.mrb[0].mxu0
        %v1592 = vadd.f32 %v1392, %v1591
        %v1593 = vpop.f32.mrb[0].mxu0
        %v1594 = vadd.f32 %v1388, %v1593
        %v1595 = vpop.f32.mrb[0].mxu0
        %v1596 = vadd.f32 %v1392, %v1595
        %1597 = vmatprep.mubr.bf16.mxu0 %v1321
        %1598 = vmatmul.mubr.bf16.gmra.mrb[0].mxu0 %v1320
        %v1599 = vpop.f32.mrb[0].mxu0
        %v1600 = vadd.f32 %v1388, %v1599
        %v1601 = vpop.f32.mrb[0].mxu0
        %v1602 = vadd.f32 %v1392, %v1601
        %v1603 = vpop.f32.mrb[0].mxu0
        %v1604 = vadd.f32 %v1388, %v1603
        %v1605 = vpop.f32.mrb[0].mxu0
        %v1606 = vadd.f32 %v1392, %v1605
        %1607 = vmatprep.mubr.bf16.mxu0 %v1323
        %1608 = vmatmul.mubr.bf16.gmra.mrb[0].mxu0 %v1322
        %v1609 = vpop.f32.mrb[0].mxu0
        %v1610 = vadd.f32 %v1388, %v1609
        %v1611 = vpop.f32.mrb[0].mxu0
        %v1612 = vadd.f32 %v1392, %v1611
        %v1613 = vpop.f32.mrb[0].mxu0
        %v1614 = vadd.f32 %v1388, %v1613
        %v1615 = vpop.f32.mrb[0].mxu0
        %v1616 = vadd.f32 %v1392, %v1615
        %1617 = vmatprep.mubr.bf16.mxu0 %v1325
        %1618 = vmatmul.mubr.bf16.gmra.mrb[0].mxu0 %v1324
        %v1619 = vpop.f32.mrb[0].mxu0
        %v1620 = vadd.f32 %v1388, %v1619
        %v1621 = vpop.f32.mrb[0].mxu0
        %v1622 = vadd.f32 %v1392, %v1621
        %v1623 = vpop.f32.mrb[0].mxu0
        %v1624 = vadd.f32 %v1388, %v1623
        %v1625 = vpop.f32.mrb[0].mxu0
        %v1626 = vadd.f32 %v1392, %v1625
        %1627 = vmatprep.mubr.bf16.mxu0 %v1327
        %1628 = vmatmul.mubr.bf16.gmra.mrb[0].mxu0 %v1326
        %v1629 = vpop.f32.mrb[0].mxu0
        %v1630 = vadd.f32 %v1388, %v1629
        %v1631 = vpop.f32.mrb[0].mxu0
        %v1632 = vadd.f32 %v1392, %v1631
        %v1633 = vpop.f32.mrb[0].mxu0
        %v1634 = vadd.f32 %v1388, %v1633
        %v1635 = vpop.f32.mrb[0].mxu0
        %v1636 = vadd.f32 %v1392, %v1635
        %1637 = vmatprep.mubr.bf16.mxu0 %v1329
        %1638 = vmatmul.mubr.bf16.gmra.mrb[0].mxu0 %v1328
        %v1639 = vpop.f32.mrb[0].mxu0
        %v1640 = vadd.f32 %v1388, %v1639
        %v1641 = vpop.f32.mrb[0].mxu0
        %v1642 = vadd.f32 %v1392, %v1641
        %v1643 = vpop.f32.mrb[0].mxu0
        %v1644 = vadd.f32 %v1388, %v1643
        %v1645 = vpop.f32.mrb[0].mxu0
        %v1646 = vadd.f32 %v1392, %v1645
        %1647 = vmatprep.mubr.bf16.mxu0 %v1331
        %1648 = vmatmul.mubr.bf16.gmra.mrb[0].mxu0 %v1330
        %v1649 = vpop.f32.mrb[0].mxu0
        %v1650 = vadd.f32 %v1388, %v1649
        %v1651 = vpop.f32.mrb[0].mxu0
        %v1652 = vadd.f32 %v1392, %v1651
        %v1653 = vpop.f32.mrb[0].mxu0
        %v1654 = vadd.f32 %v1388, %v1653
        %v1655 = vpop.f32.mrb[0].mxu0
        %v1656 = vadd.f32 %v1392, %v1655
        %1657 = vmatprep.mubr.bf16.mxu0 %v1333
        %1658 = vmatmul.mubr.bf16.gmra.mrb[0].mxu0 %v1332
        %v1659 = vpop.f32.mrb[0].mxu0
        %v1660 = vadd.f32 %v1388, %v1659
        %v1661 = vpop.f32.mrb[0].mxu0
        %v1662 = vadd.f32 %v1392, %v1661
        %v1663 = vpop.f32.mrb[0].mxu0
        %v1664 = vadd.f32 %v1388, %v1663
        %v1665 = vpop.f32.mrb[0].mxu0
        %v1666 = vadd.f32 %v1392, %v1665
        %1667 = vmatprep.mubr.bf16.mxu0 %v1335
        %1668 = vmatmul.mubr.bf16.gmra.mrb[0].mxu0 %v1334
        %v1669 = vpop.f32.mrb[0].mxu0
        %v1670 = vadd.f32 %v1388, %v1669
        %v1671 = vpop.f32.mrb[0].mxu0
        %v1672 = vadd.f32 %v1392, %v1671
        %v1673 = vpop.f32.mrb[0].mxu0
        %v1674 = vadd.f32 %v1388, %v1673
        %v1675 = vpop.f32.mrb[0].mxu0
        %v1676 = vadd.f32 %v1392, %v1675
        %1677 = vmatprep.mubr.bf16.mxu0 %v1337
        %1678 = vmatmul.mubr.bf16.gmra.mrb[0].mxu0 %v1336
        %v1679 = vpop.f32.mrb[0].mxu0
        %v1680 = vadd.f32 %v1388, %v1679
        %v1681 = vpop.f32.mrb[0].mxu0
        %v1682 = vadd.f32 %v1392, %v1681
        %v1683 = vpop.f32.mrb[0].mxu0
        %v1684 = vadd.f32 %v1388, %v1683
        %v1685 = vpop.f32.mrb[0].mxu0
        %v1686 = vadd.f32 %v1392, %v1685
        %1687 = vmatprep.mubr.bf16.mxu0 %v1339
        %1688 = vmatmul.mubr.bf16.gmra.mrb[0].mxu0 %v1338
        %v1689 = vpop.f32.mrb[0].mxu0
        %v1690 = vadd.f32 %v1388, %v1689
        %v1691 = vpop.f32.mrb[0].mxu0
        %v1692 = vadd.f32 %v1392, %v1691
        %v1693 = vpop.f32.mrb[0].mxu0
        %v1694 = vadd.f32 %v1388, %v1693
        %v1695 = vpop.f32.mrb[0].mxu0
        %v1696 = vadd.f32 %v1392, %v1695
        %1697 = vmatprep.mubr.bf16.mxu0 %v1341
        %1698 = vmatmul.mubr.bf16.gmra.mrb[0].mxu0 %v1340
        %v1699 = vpop.f32.mrb[0].mxu0
        %v1700 = vadd.f32 %v1388, %v1699
        %v1701 = vpop.f32.mrb[0].mxu0
        %v1702 = vadd.f32 %v1392, %v1701
        %v1703 = vpop.f32.mrb[0].mxu0
        %v1704 = vadd.f32 %v1388, %v1703
        %v1705 = vpop.f32.mrb[0].mxu0
        %v1706 = vadd.f32 %v1392, %v1705
        %1707 = vmatprep.mubr.bf16.mxu0 %v1343
        %1708 = vmatmul.mubr.bf16.gmra.mrb[0].mxu0 %v1342
        %v1709 = vpop.f32.mrb[0].mxu0
        %v1710 = vadd.f32 %v1388, %v1709
        %v1711 = vpop.f32.mrb[0].mxu0
        %v1712 = vadd.f32 %v1392, %v1711
        %v1713 = vpop.f32.mrb[0].mxu0
        %v1714 = vadd.f32 %v1388, %v1713
        %v1715 = vpop.f32.mrb[0].mxu0
        %v1716 = vadd.f32 %v1392, %v1715
        %1717 = vmatprep.mubr.bf16.mxu0 %v1345
        %1718 = vmatmul.mubr.bf16.gmra.mrb[0].mxu0 %v1344
        %v1719 = vpop.f32.mrb[0].mxu0
        %v1720 = vadd.f32 %v1388, %v1719
        %v1721 = vpop.f32.mrb[0].mxu0
        %v1722 = vadd.f32 %v1392, %v1721
        %v1723 = vpop.f32.mrb[0].mxu0
        %v1724 = vadd.f32 %v1388, %v1723
        %v1725 = vpop.f32.mrb[0].mxu0
        %v1726 = vadd.f32 %v1392, %v1725
        %1727 = vmatprep.mubr.bf16.mxu0 %v1347
        %1728 = vmatmul.mubr.bf16.gmra.mrb[0].mxu0 %v1346
        %v1729 = vpop.f32.mrb[0].mxu0
        %v1730 = vadd.f32 %v1388, %v1729
        %v1731 = vpop.f32.mrb[0].mxu0
        %v1732 = vadd.f32 %v1392, %v1731
        %v1733 = vpop.f32.mrb[0].mxu0
        %v1734 = vadd.f32 %v1388, %v1733
        %v1735 = vpop.f32.mrb[0].mxu0
        %v1736 = vadd.f32 %v1392, %v1735
        %1737 = vmatprep.mubr.bf16.mxu0 %v1349
        %1738 = vmatmul.mubr.bf16.gmra.mrb[0].mxu0 %v1348
        %v1739 = vpop.f32.mrb[0].mxu0
        %v1740 = vadd.f32 %v1388, %v1739
        %v1741 = vpop.f32.mrb[0].mxu0
        %v1742 = vadd.f32 %v1392, %v1741
        %v1743 = vpop.f32.mrb[0].mxu0
        %v1744 = vadd.f32 %v1388, %v1743
        %v1745 = vpop.f32.mrb[0].mxu0
        %v1746 = vadd.f32 %v1392, %v1745
        %1747 = vdwg.mxu0
        %v1748 = vmax.f32 %v1590, 0.0
        %v1749 = vmax.f32 %v1592, 0.0
        %v1750 = vmax.f32 %v1594, 0.0
        %v1751 = vmax.f32 %v1596, 0.0
        %v1752 = vmax.f32 %v1600, 0.0
        %v1753 = vmax.f32 %v1602, 0.0
        %v1754 = vmax.f32 %v1604, 0.0
        %v1755 = vmax.f32 %v1606, 0.0
        %v1756 = vmax.f32 %v1610, 0.0
        %v1757 = vmax.f32 %v1612, 0.0
        %v1758 = vmax.f32 %v1614, 0.0
        %v1759 = vmax.f32 %v1616, 0.0
        %v1760 = vmax.f32 %v1620, 0.0
        %v1761 = vmax.f32 %v1622, 0.0
        %v1762 = vmax.f32 %v1624, 0.0
        %v1763 = vmax.f32 %v1626, 0.0
        %v1764 = vmax.f32 %v1630, 0.0
        %v1765 = vmax.f32 %v1632, 0.0
        %v1766 = vmax.f32 %v1634, 0.0
        %v1767 = vmax.f32 %v1636, 0.0
        %v1768 = vmax.f32 %v1640, 0.0
        %v1769 = vmax.f32 %v1642, 0.0
        %v1770 = vmax.f32 %v1644, 0.0
        %v1771 = vmax.f32 %v1646, 0.0
        %v1772 = vmax.f32 %v1650, 0.0
        %v1773 = vmax.f32 %v1652, 0.0
        %v1774 = vmax.f32 %v1654, 0.0
        %v1775 = vmax.f32 %v1656, 0.0
        %v1776 = vmax.f32 %v1660, 0.0
        %v1777 = vmax.f32 %v1662, 0.0
        %v1778 = vmax.f32 %v1664, 0.0
        %v1779 = vmax.f32 %v1666, 0.0
        %v1780 = vmax.f32 %v1670, 0.0
        %v1781 = vmax.f32 %v1672, 0.0
        %v1782 = vmax.f32 %v1674, 0.0
        %v1783 = vmax.f32 %v1676, 0.0
        %v1784 = vmax.f32 %v1680, 0.0
        %v1785 = vmax.f32 %v1682, 0.0
        %v1786 = vmax.f32 %v1684, 0.0
        %v1787 = vmax.f32 %v1686, 0.0
        %v1788 = vmax.f32 %v1690, 0.0
        %v1789 = vmax.f32 %v1692, 0.0
        %v1790 = vmax.f32 %v1694, 0.0
        %v1791 = vmax.f32 %v1696, 0.0
        %v1792 = vmax.f32 %v1700, 0.0
        %v1793 = vmax.f32 %v1702, 0.0
        %v1794 = vmax.f32 %v1704, 0.0
        %v1795 = vmax.f32 %v1706, 0.0
        %v1796 = vmax.f32 %v1710, 0.0
        %v1797 = vmax.f32 %v1712, 0.0
        %v1798 = vmax.f32 %v1714, 0.0
        %v1799 = vmax.f32 %v1716, 0.0
        %v1800 = vmax.f32 %v1720, 0.0
        %v1801 = vmax.f32 %v1722, 0.0
        %v1802 = vmax.f32 %v1724, 0.0
        %v1803 = vmax.f32 %v1726, 0.0
        %v1804 = vmax.f32 %v1730, 0.0
        %v1805 = vmax.f32 %v1732, 0.0
        %v1806 = vmax.f32 %v1734, 0.0
        %v1807 = vmax.f32 %v1736, 0.0
        %v1808 = vmax.f32 %v1740, 0.0
        %v1809 = vmax.f32 %v1742, 0.0
        %v1810 = vmax.f32 %v1744, 0.0
        %v1811 = vmax.f32 %v1746, 0.0
        %v1812 = vpack.c.bf16 %v1750, %v1748
        %v1813 = vpack.c.bf16 %v1751, %v1749
        %v1814 = vpack.c.bf16 %v1754, %v1752
        %v1815 = vpack.c.bf16 %v1755, %v1753
        %v1816 = vpack.c.bf16 %v1758, %v1756
        %v1817 = vpack.c.bf16 %v1759, %v1757
        %v1818 = vpack.c.bf16 %v1762, %v1760
        %v1819 = vpack.c.bf16 %v1763, %v1761
        %v1820 = vpack.c.bf16 %v1766, %v1764
        %v1821 = vpack.c.bf16 %v1767, %v1765
        %v1822 = vpack.c.bf16 %v1770, %v1768
        %v1823 = vpack.c.bf16 %v1771, %v1769
        %v1824 = vpack.c.bf16 %v1774, %v1772
        %v1825 = vpack.c.bf16 %v1775, %v1773
        %v1826 = vpack.c.bf16 %v1778, %v1776
        %v1827 = vpack.c.bf16 %v1779, %v1777
        %v1828 = vpack.c.bf16 %v1782, %v1780
        %v1829 = vpack.c.bf16 %v1783, %v1781
        %v1830 = vpack.c.bf16 %v1786, %v1784
        %v1831 = vpack.c.bf16 %v1787, %v1785
        %v1832 = vpack.c.bf16 %v1790, %v1788
        %v1833 = vpack.c.bf16 %v1791, %v1789
        %v1834 = vpack.c.bf16 %v1794, %v1792
        %v1835 = vpack.c.bf16 %v1795, %v1793
        %v1836 = vpack.c.bf16 %v1798, %v1796
        %v1837 = vpack.c.bf16 %v1799, %v1797
        %v1838 = vpack.c.bf16 %v1802, %v1800
        %v1839 = vpack.c.bf16 %v1803, %v1801
        %v1840 = vpack.c.bf16 %v1806, %v1804
        %v1841 = vpack.c.bf16 %v1807, %v1805
        %v1842 = vpack.c.bf16 %v1810, %v1808
        %v1843 = vpack.c.bf16 %v1811, %v1809
        %v1844 = vld [vmem:[#allocation10] sm:$0xf]
        %v1845 = vld [vmem:[#allocation10 + $0x4] sm:$0xf]
        %v1846 = vld [vmem:[#allocation10 + $0x8] sm:$0xf]
        %v1847 = vld [vmem:[#allocation10 + $0xc] sm:$0xf]
        %v1848 = vld [vmem:[#allocation10 + $0x10] sm:$0xf]
        %v1849 = vld [vmem:[#allocation10 + $0x14] sm:$0xf]
        %v1850 = vld [vmem:[#allocation10 + $0x18] sm:$0xf]
        %v1851 = vld [vmem:[#allocation10 + $0x1c] sm:$0xf]
        %v1852 = vld [vmem:[#allocation10 + $0x20] sm:$0xf]
        %v1853 = vld [vmem:[#allocation10 + $0x24] sm:$0xf]
        %v1854 = vld [vmem:[#allocation10 + $0x28] sm:$0xf]
        %v1855 = vld [vmem:[#allocation10 + $0x2c] sm:$0xf]
        %v1856 = vld [vmem:[#allocation10 + $0x30] sm:$0xf]
        %v1857 = vld [vmem:[#allocation10 + $0x34] sm:$0xf]
        %v1858 = vld [vmem:[#allocation10 + $0x38] sm:$0xf]
        %v1859 = vld [vmem:[#allocation10 + $0x3c] sm:$0xf]
        %v1860 = vld [vmem:[#allocation10 + $0x40] sm:$0xf]
        %v1861 = vld [vmem:[#allocation10 + $0x44] sm:$0xf]
        %v1862 = vld [vmem:[#allocation10 + $0x48] sm:$0xf]
        %v1863 = vld [vmem:[#allocation10 + $0x4c] sm:$0xf]
        %v1864 = vld [vmem:[#allocation10 + $0x50] sm:$0xf]
        %v1865 = vld [vmem:[#allocation10 + $0x54] sm:$0xf]
        %v1866 = vld [vmem:[#allocation10 + $0x58] sm:$0xf]
        %v1867 = vld [vmem:[#allocation10 + $0x5c] sm:$0xf]
        %v1868 = vld [vmem:[#allocation10 + $0x60] sm:$0xf]
        %v1869 = vld [vmem:[#allocation10 + $0x64] sm:$0xf]
        %v1870 = vld [vmem:[#allocation10 + $0x68] sm:$0xf]
        %v1871 = vld [vmem:[#allocation10 + $0x6c] sm:$0xf]
        %v1872 = vld [vmem:[#allocation10 + $0x70] sm:$0xf]
        %v1873 = vld [vmem:[#allocation10 + $0x74] sm:$0xf]
        %v1874 = vld [vmem:[#allocation10 + $0x78] sm:$0xf]
        %v1875 = vld [vmem:[#allocation10 + $0x7c] sm:$0xf]
        %v1876 = vld [vmem:[%s5 + $0x3] sm:$0x1]
        %v1877 = vlaneseq
        %v1878 = vshrl.u32 %v1877, 7
        %v1879 = vsub.s32 0, %v1878
        %v1880 = vrot.slane %v1876, %v1879
        %v1913 = vunpack.c.l.b16 %v1844
        %v1914 = vunpack.c.l.b16 %v1845
        %v1915 = vunpack.c.l.b16 %v1846
        %v1916 = vunpack.c.l.b16 %v1847
        %v1917 = vunpack.c.l.b16 %v1848
        %v1918 = vunpack.c.l.b16 %v1849
        %v1919 = vunpack.c.l.b16 %v1850
        %v1920 = vunpack.c.l.b16 %v1851
        %v1921 = vunpack.c.l.b16 %v1852
        %v1922 = vunpack.c.l.b16 %v1853
        %v1923 = vunpack.c.l.b16 %v1854
        %v1924 = vunpack.c.l.b16 %v1855
        %v1925 = vunpack.c.l.b16 %v1856
        %v1926 = vunpack.c.l.b16 %v1857
        %v1927 = vunpack.c.l.b16 %v1858
        %v1928 = vunpack.c.l.b16 %v1859
        %v1929 = vunpack.c.l.b16 %v1860
        %v1930 = vunpack.c.l.b16 %v1861
        %v1931 = vunpack.c.l.b16 %v1862
        %v1932 = vunpack.c.l.b16 %v1863
        %v1933 = vunpack.c.l.b16 %v1864
        %v1934 = vunpack.c.l.b16 %v1865
        %v1935 = vunpack.c.l.b16 %v1866
        %v1936 = vunpack.c.l.b16 %v1867
        %v1937 = vunpack.c.l.b16 %v1868
        %v1938 = vunpack.c.l.b16 %v1869
        %v1939 = vunpack.c.l.b16 %v1870
        %v1940 = vunpack.c.l.b16 %v1871
        %v1941 = vunpack.c.l.b16 %v1872
        %v1942 = vunpack.c.l.b16 %v1873
        %v1943 = vunpack.c.l.b16 %v1874
        %v1944 = vunpack.c.l.b16 %v1875
        %v1945 = vpack.c.b16 %v1914, %v1913
        %v1946 = vpack.c.b16 %v1916, %v1915
        %v1947 = vpack.c.b16 %v1918, %v1917
        %v1948 = vpack.c.b16 %v1920, %v1919
        %v1949 = vpack.c.b16 %v1922, %v1921
        %v1950 = vpack.c.b16 %v1924, %v1923
        %v1951 = vpack.c.b16 %v1926, %v1925
        %v1952 = vpack.c.b16 %v1928, %v1927
        %v1953 = vpack.c.b16 %v1930, %v1929
        %v1954 = vpack.c.b16 %v1932, %v1931
        %v1955 = vpack.c.b16 %v1934, %v1933
        %v1956 = vpack.c.b16 %v1936, %v1935
        %v1957 = vpack.c.b16 %v1938, %v1937
        %v1958 = vpack.c.b16 %v1940, %v1939
        %v1959 = vpack.c.b16 %v1942, %v1941
        %v1960 = vpack.c.b16 %v1944, %v1943
        %1977 = vmatprep.subr.bf16.mxu0 0
        %1978 = vmatpush1.bf16.msra.mxu0 %v1945
        %1979 = vmatprep.subr.bf16.mxu0 0
        %1980 = vmatpush1.bf16.msra.mxu0 %v1946
        %1981 = vmatprep.subr.bf16.mxu0 0
        %1982 = vmatpush1.bf16.msra.mxu0 %v1947
        %1983 = vmatprep.subr.bf16.mxu0 0
        %1984 = vmatpush1.bf16.msra.mxu0 %v1948
        %1985 = vmatprep.subr.bf16.mxu0 0
        %1986 = vmatpush1.bf16.msra.mxu0 %v1949
        %1987 = vmatprep.subr.bf16.mxu0 0
        %1988 = vmatpush1.bf16.msra.mxu0 %v1950
        %1989 = vmatprep.subr.bf16.mxu0 0
        %1990 = vmatpush1.bf16.msra.mxu0 %v1951
        %1991 = vmatprep.subr.bf16.mxu0 0
        %1992 = vmatpush1.bf16.msra.mxu0 %v1952
        %1993 = vmatprep.subr.bf16.mxu0 0
        %1994 = vmatpush1.bf16.msra.mxu0 %v1953
        %1995 = vmatprep.subr.bf16.mxu0 0
        %1996 = vmatpush1.bf16.msra.mxu0 %v1954
        %1997 = vmatprep.subr.bf16.mxu0 0
        %1998 = vmatpush1.bf16.msra.mxu0 %v1955
        %1999 = vmatprep.subr.bf16.mxu0 0
        %2000 = vmatpush1.bf16.msra.mxu0 %v1956
        %2001 = vmatprep.subr.bf16.mxu0 0
        %2002 = vmatpush1.bf16.msra.mxu0 %v1957
        %2003 = vmatprep.subr.bf16.mxu0 0
        %2004 = vmatpush1.bf16.msra.mxu0 %v1958
        %2005 = vmatprep.subr.bf16.mxu0 0
        %2006 = vmatpush1.bf16.msra.mxu0 %v1959
        %2007 = vmatprep.subr.bf16.mxu0 0
        %2008 = vmatpush1.bf16.msra.mxu0 %v1960
        %2009 = vmatprep.mubr.bf16.mxu0 %v1813
        %2010 = vmatmul.mubr.bf16.gmra.mrb[0].mxu0 %v1812
        %v2011 = vpop.f32.mrb[0].mxu0
        %v2012 = vadd.f32 %v1880, %v2011
        %v2013 = vpop.f32.mrb[0].mxu0
        %v2014 = vpop.f32.mrb[0].mxu0
        %v2015 = vadd.f32 %v1880, %v2014
        %v2016 = vpop.f32.mrb[0].mxu0
        %2017 = vmatprep.mubr.bf16.mxu0 %v1815
        %2018 = vmatmul.mubr.bf16.gmra.mrb[0].mxu0 %v1814
        %v2019 = vpop.f32.mrb[0].mxu0
        %v2020 = vadd.f32 %v1880, %v2019
        %v2021 = vpop.f32.mrb[0].mxu0
        %v2022 = vpop.f32.mrb[0].mxu0
        %v2023 = vadd.f32 %v1880, %v2022
        %v2024 = vpop.f32.mrb[0].mxu0
        %2025 = vmatprep.mubr.bf16.mxu0 %v1817
        %2026 = vmatmul.mubr.bf16.gmra.mrb[0].mxu0 %v1816
        %v2027 = vpop.f32.mrb[0].mxu0
        %v2028 = vadd.f32 %v1880, %v2027
        %v2029 = vpop.f32.mrb[0].mxu0
        %v2030 = vpop.f32.mrb[0].mxu0
        %v2031 = vadd.f32 %v1880, %v2030
        %v2032 = vpop.f32.mrb[0].mxu0
        %2033 = vmatprep.mubr.bf16.mxu0 %v1819
        %2034 = vmatmul.mubr.bf16.gmra.mrb[0].mxu0 %v1818
        %v2035 = vpop.f32.mrb[0].mxu0
        %v2036 = vadd.f32 %v1880, %v2035
        %v2037 = vpop.f32.mrb[0].mxu0
        %v2038 = vpop.f32.mrb[0].mxu0
        %v2039 = vadd.f32 %v1880, %v2038
        %v2040 = vpop.f32.mrb[0].mxu0
        %2041 = vmatprep.mubr.bf16.mxu0 %v1821
        %2042 = vmatmul.mubr.bf16.gmra.mrb[0].mxu0 %v1820
        %v2043 = vpop.f32.mrb[0].mxu0
        %v2044 = vadd.f32 %v1880, %v2043
        %v2045 = vpop.f32.mrb[0].mxu0
        %v2046 = vpop.f32.mrb[0].mxu0
        %v2047 = vadd.f32 %v1880, %v2046
        %v2048 = vpop.f32.mrb[0].mxu0
        %2049 = vmatprep.mubr.bf16.mxu0 %v1823
        %2050 = vmatmul.mubr.bf16.gmra.mrb[0].mxu0 %v1822
        %v2051 = vpop.f32.mrb[0].mxu0
        %v2052 = vadd.f32 %v1880, %v2051
        %v2053 = vpop.f32.mrb[0].mxu0
        %v2054 = vpop.f32.mrb[0].mxu0
        %v2055 = vadd.f32 %v1880, %v2054
        %v2056 = vpop.f32.mrb[0].mxu0
        %2057 = vmatprep.mubr.bf16.mxu0 %v1825
        %2058 = vmatmul.mubr.bf16.gmra.mrb[0].mxu0 %v1824
        %v2059 = vpop.f32.mrb[0].mxu0
        %v2060 = vadd.f32 %v1880, %v2059
        %v2061 = vpop.f32.mrb[0].mxu0
        %v2062 = vpop.f32.mrb[0].mxu0
        %v2063 = vadd.f32 %v1880, %v2062
        %v2064 = vpop.f32.mrb[0].mxu0
        %2065 = vmatprep.mubr.bf16.mxu0 %v1827
        %2066 = vmatmul.mubr.bf16.gmra.mrb[0].mxu0 %v1826
        %v2067 = vpop.f32.mrb[0].mxu0
        %v2068 = vadd.f32 %v1880, %v2067
        %v2069 = vpop.f32.mrb[0].mxu0
        %v2070 = vpop.f32.mrb[0].mxu0
        %v2071 = vadd.f32 %v1880, %v2070
        %v2072 = vpop.f32.mrb[0].mxu0
        %2073 = vmatprep.mubr.bf16.mxu0 %v1829
        %2074 = vmatmul.mubr.bf16.gmra.mrb[0].mxu0 %v1828
        %v2075 = vpop.f32.mrb[0].mxu0
        %v2076 = vadd.f32 %v1880, %v2075
        %v2077 = vpop.f32.mrb[0].mxu0
        %v2078 = vpop.f32.mrb[0].mxu0
        %v2079 = vadd.f32 %v1880, %v2078
        %v2080 = vpop.f32.mrb[0].mxu0
        %2081 = vmatprep.mubr.bf16.mxu0 %v1831
        %2082 = vmatmul.mubr.bf16.gmra.mrb[0].mxu0 %v1830
        %v2083 = vpop.f32.mrb[0].mxu0
        %v2084 = vadd.f32 %v1880, %v2083
        %v2085 = vpop.f32.mrb[0].mxu0
        %v2086 = vpop.f32.mrb[0].mxu0
        %v2087 = vadd.f32 %v1880, %v2086
        %v2088 = vpop.f32.mrb[0].mxu0
        %2089 = vmatprep.mubr.bf16.mxu0 %v1833
        %2090 = vmatmul.mubr.bf16.gmra.mrb[0].mxu0 %v1832
        %v2091 = vpop.f32.mrb[0].mxu0
        %v2092 = vadd.f32 %v1880, %v2091
        %v2093 = vpop.f32.mrb[0].mxu0
        %v2094 = vpop.f32.mrb[0].mxu0
        %v2095 = vadd.f32 %v1880, %v2094
        %v2096 = vpop.f32.mrb[0].mxu0
        %2097 = vmatprep.mubr.bf16.mxu0 %v1835
        %2098 = vmatmul.mubr.bf16.gmra.mrb[0].mxu0 %v1834
        %v2099 = vpop.f32.mrb[0].mxu0
        %v2100 = vadd.f32 %v1880, %v2099
        %v2101 = vpop.f32.mrb[0].mxu0
        %v2102 = vpop.f32.mrb[0].mxu0
        %v2103 = vadd.f32 %v1880, %v2102
        %v2104 = vpop.f32.mrb[0].mxu0
        %2105 = vmatprep.mubr.bf16.mxu0 %v1837
        %2106 = vmatmul.mubr.bf16.gmra.mrb[0].mxu0 %v1836
        %v2107 = vpop.f32.mrb[0].mxu0
        %v2108 = vadd.f32 %v1880, %v2107
        %v2109 = vpop.f32.mrb[0].mxu0
        %v2110 = vpop.f32.mrb[0].mxu0
        %v2111 = vadd.f32 %v1880, %v2110
        %v2112 = vpop.f32.mrb[0].mxu0
        %2113 = vmatprep.mubr.bf16.mxu0 %v1839
        %2114 = vmatmul.mubr.bf16.gmra.mrb[0].mxu0 %v1838
        %v2115 = vpop.f32.mrb[0].mxu0
        %v2116 = vadd.f32 %v1880, %v2115
        %v2117 = vpop.f32.mrb[0].mxu0
        %v2118 = vpop.f32.mrb[0].mxu0
        %v2119 = vadd.f32 %v1880, %v2118
        %v2120 = vpop.f32.mrb[0].mxu0
        %2121 = vmatprep.mubr.bf16.mxu0 %v1841
        %2122 = vmatmul.mubr.bf16.gmra.mrb[0].mxu0 %v1840
        %v2123 = vpop.f32.mrb[0].mxu0
        %v2124 = vadd.f32 %v1880, %v2123
        %v2125 = vpop.f32.mrb[0].mxu0
        %v2126 = vpop.f32.mrb[0].mxu0
        %v2127 = vadd.f32 %v1880, %v2126
        %v2128 = vpop.f32.mrb[0].mxu0
        %2129 = vmatprep.mubr.bf16.mxu0 %v1843
        %2130 = vmatmul.mubr.bf16.gmra.mrb[0].mxu0 %v1842
        %v2131 = vpop.f32.mrb[0].mxu0
        %v2132 = vadd.f32 %v1880, %v2131
        %v2133 = vpop.f32.mrb[0].mxu0
        %v2134 = vpop.f32.mrb[0].mxu0
        %v2135 = vadd.f32 %v1880, %v2134
        %v2136 = vpop.f32.mrb[0].mxu0
        %2137 = vdwg.mxu0
        %v2138 = vpack.c.bf16 %v2015, %v2012
        %v2139 = vpack.c.bf16 %v2023, %v2020
        %v2140 = vpack.c.bf16 %v2031, %v2028
        %v2141 = vpack.c.bf16 %v2039, %v2036
        %v2142 = vpack.c.bf16 %v2047, %v2044
        %v2143 = vpack.c.bf16 %v2055, %v2052
        %v2144 = vpack.c.bf16 %v2063, %v2060
        %v2145 = vpack.c.bf16 %v2071, %v2068
        %v2146 = vpack.c.bf16 %v2079, %v2076
        %v2147 = vpack.c.bf16 %v2087, %v2084
        %v2148 = vpack.c.bf16 %v2095, %v2092
        %v2149 = vpack.c.bf16 %v2103, %v2100
        %v2150 = vpack.c.bf16 %v2111, %v2108
        %v2151 = vpack.c.bf16 %v2119, %v2116
        %v2152 = vpack.c.bf16 %v2127, %v2124
        %v2153 = vpack.c.bf16 %v2135, %v2132
        %v2170 = vunpack.c.l.b16 %v2138
        %v2171 = vunpack.c.h.b16 %v2138
        %v2172 = vunpack.c.l.b16 %v2139
        %v2173 = vunpack.c.h.b16 %v2139
        %v2174 = vunpack.c.l.b16 %v2140
        %v2175 = vunpack.c.h.b16 %v2140
        %v2176 = vunpack.c.l.b16 %v2141
        %v2177 = vunpack.c.h.b16 %v2141
        %v2178 = vunpack.c.l.b16 %v2142
        %v2179 = vunpack.c.h.b16 %v2142
        %v2180 = vunpack.c.l.b16 %v2143
        %v2181 = vunpack.c.h.b16 %v2143
        %v2182 = vunpack.c.l.b16 %v2144
        %v2183 = vunpack.c.h.b16 %v2144
        %v2184 = vunpack.c.l.b16 %v2145
        %v2185 = vunpack.c.h.b16 %v2145
        %v2186 = vunpack.c.l.b16 %v2146
        %v2187 = vunpack.c.h.b16 %v2146
        %v2188 = vunpack.c.l.b16 %v2147
        %v2189 = vunpack.c.h.b16 %v2147
        %v2190 = vunpack.c.l.b16 %v2148
        %v2191 = vunpack.c.h.b16 %v2148
        %v2192 = vunpack.c.l.b16 %v2149
        %v2193 = vunpack.c.h.b16 %v2149
        %v2194 = vunpack.c.l.b16 %v2150
        %v2195 = vunpack.c.h.b16 %v2150
        %v2196 = vunpack.c.l.b16 %v2151
        %v2197 = vunpack.c.h.b16 %v2151
        %v2198 = vunpack.c.l.b16 %v2152
        %v2199 = vunpack.c.h.b16 %v2152
        %v2200 = vunpack.c.l.b16 %v2153
        %v2201 = vunpack.c.h.b16 %v2153
        %v2202 = vpack.c.b16 %v2170, %v2170
        %v2203 = vpack.c.b16 %v2171, %v2171
        %v2204 = vpack.c.b16 %v2172, %v2172
        %v2205 = vpack.c.b16 %v2173, %v2173
        %v2206 = vpack.c.b16 %v2174, %v2174
        %v2207 = vpack.c.b16 %v2175, %v2175
        %v2208 = vpack.c.b16 %v2176, %v2176
        %v2209 = vpack.c.b16 %v2177, %v2177
        %v2210 = vpack.c.b16 %v2178, %v2178
        %v2211 = vpack.c.b16 %v2179, %v2179
        %v2212 = vpack.c.b16 %v2180, %v2180
        %v2213 = vpack.c.b16 %v2181, %v2181
        %v2214 = vpack.c.b16 %v2182, %v2182
        %v2215 = vpack.c.b16 %v2183, %v2183
        %v2216 = vpack.c.b16 %v2184, %v2184
        %v2217 = vpack.c.b16 %v2185, %v2185
        %v2218 = vpack.c.b16 %v2186, %v2186
        %v2219 = vpack.c.b16 %v2187, %v2187
        %v2220 = vpack.c.b16 %v2188, %v2188
        %v2221 = vpack.c.b16 %v2189, %v2189
        %v2222 = vpack.c.b16 %v2190, %v2190
        %v2223 = vpack.c.b16 %v2191, %v2191
        %v2224 = vpack.c.b16 %v2192, %v2192
        %v2225 = vpack.c.b16 %v2193, %v2193
        %v2226 = vpack.c.b16 %v2194, %v2194
        %v2227 = vpack.c.b16 %v2195, %v2195
        %v2228 = vpack.c.b16 %v2196, %v2196
        %v2229 = vpack.c.b16 %v2197, %v2197
        %v2230 = vpack.c.b16 %v2198, %v2198
        %v2231 = vpack.c.b16 %v2199, %v2199
        %v2232 = vpack.c.b16 %v2200, %v2200
        %v2233 = vpack.c.b16 %v2201, %v2201
        %2266 = vst [vmem:[%s327] sm:$0xf] %v2202
        %2267 = vst [vmem:[%s327 + $0x4] sm:$0xf] %v2203
        %2268 = vst [vmem:[%s327 + $0x8] sm:$0xf] %v2204
        %2269 = vst [vmem:[%s327 + $0xc] sm:$0xf] %v2205
        %2270 = vst [vmem:[%s327 + $0x10] sm:$0xf] %v2206
        %2271 = vst [vmem:[%s327 + $0x14] sm:$0xf] %v2207
        %2272 = vst [vmem:[%s327 + $0x18] sm:$0xf] %v2208
        %2273 = vst [vmem:[%s327 + $0x1c] sm:$0xf] %v2209
        %2274 = vst [vmem:[%s327 + $0x20] sm:$0xf] %v2210
        %2275 = vst [vmem:[%s327 + $0x24] sm:$0xf] %v2211
        %2276 = vst [vmem:[%s327 + $0x28] sm:$0xf] %v2212
        %2277 = vst [vmem:[%s327 + $0x2c] sm:$0xf] %v2213
        %2278 = vst [vmem:[%s327 + $0x30] sm:$0xf] %v2214
        %2279 = vst [vmem:[%s327 + $0x34] sm:$0xf] %v2215
        %2280 = vst [vmem:[%s327 + $0x38] sm:$0xf] %v2216
        %2281 = vst [vmem:[%s327 + $0x3c] sm:$0xf] %v2217
        %2282 = vst [vmem:[%s327 + $0x40] sm:$0xf] %v2218
        %2283 = vst [vmem:[%s327 + $0x44] sm:$0xf] %v2219
        %2284 = vst [vmem:[%s327 + $0x48] sm:$0xf] %v2220
        %2285 = vst [vmem:[%s327 + $0x4c] sm:$0xf] %v2221
        %2286 = vst [vmem:[%s327 + $0x50] sm:$0xf] %v2222
        %2287 = vst [vmem:[%s327 + $0x54] sm:$0xf] %v2223
        %2288 = vst [vmem:[%s327 + $0x58] sm:$0xf] %v2224
        %2289 = vst [vmem:[%s327 + $0x5c] sm:$0xf] %v2225
        %2290 = vst [vmem:[%s327 + $0x60] sm:$0xf] %v2226
        %2291 = vst [vmem:[%s327 + $0x64] sm:$0xf] %v2227
        %2292 = vst [vmem:[%s327 + $0x68] sm:$0xf] %v2228
        %2293 = vst [vmem:[%s327 + $0x6c] sm:$0xf] %v2229
        %2294 = vst [vmem:[%s327 + $0x70] sm:$0xf] %v2230
        %2295 = vst [vmem:[%s327 + $0x74] sm:$0xf] %v2231
        %2296 = vst [vmem:[%s327 + $0x78] sm:$0xf] %v2232
        %2297 = vst [vmem:[%s327 + $0x7c] sm:$0xf] %v2233
        %s2298 = sand.u32 %s164, 1
        %s2299 = scalar_lea.sflag [#allocation4], %s2298
        %s2300 = sand.u32 %s164, 1
        %s2301 = smul.addr %s2300, 128
        %s2302 = scalar_lea.vmem [#allocation11], %s2301
        // Predicated region
        $region65: #{tpu_custom_call.1} parent=43 // pred_check
          %p2303 = pneg %p174
        $region66: #{tpu_custom_call.1} parent=43 // pred_check_branch
          %2305 = sbr.rel (%p2303) target = $region68
        $region67: #{tpu_custom_call.1} parent=43 // pred_region
          %s2306 = smul.u32 32, %s25
          %s2308 = ssub.s32 2048, 2048
          %2309 = vsyncadd %s2299, %s2308
          %s2310 = smul.addr %s2306, 64
          %s2311 = scalar_lea.hbm %s6, %s2310
          %s2312 = sshll.u32 %s2302, 4
          %s2313 = int_to_ptr.vmem [resolvable:$true] %s2312
          %2318 = dma.vmem_to_hbm [thread:$0]  %s2313, 2048, %s2311, %s2299, 64, 64, 4
        $region68: #{tpu_custom_call.1} parent=43 // pred_fallthru
          _
      $region44: #{tpu_custom_call.1} parent=5 // pred_fallthru
        _
      %p2319 = scmp.le.s32.totalorder 2, %s20
      // Predicated region
      $region69: #{tpu_custom_call.1} parent=5 // pred_check
        %p2320 = pneg %p2319
      $region70: #{tpu_custom_call.1} parent=5 // pred_check_branch
        %2322 = sbr.rel (%p2320) target = $region72
      $region71: #{tpu_custom_call.1} parent=5 // pred_region
        %s2323 = ssub.s32 %s20, 2
        // Predicated region
        $region73: #{tpu_custom_call.1} parent=71 // pred_check
          %p2324 = pneg %p180
        $region74: #{tpu_custom_call.1} parent=71 // pred_check_branch
          %2326 = sbr.rel (%p2324) target = $region76
        $region75: #{tpu_custom_call.1} parent=71 // pred_region
          %s2327 = sand.u32 %s165, 1
          %s2328 = scalar_lea.sflag [#allocation4], %s2327
          %s2329 = sand.u32 %s165, 1
          %s2330 = smul.addr %s2329, 128
          %s2331 = scalar_lea.vmem [#allocation11], %s2330
          %2332 = dma.done %s2328, 2048
        $region76: #{tpu_custom_call.1} parent=71 // pred_fallthru
          _
      $region72: #{tpu_custom_call.1} parent=5 // pred_fallthru
        _
    $region6: #{tpu_custom_call.1} parent=1 // loop_footer
      %s24 = sadd.s32 1, %s20
    $region7: #{tpu_custom_call.1} parent=1 // loop_footer_branch
      %19 = sbr.rel target = $region3
    $region8: #{tpu_custom_call.1} parent=1 // loop_exit
      _
    %2333 = vsyncpa [#allocation3], 1
    %s2334 = scalar_lea.sflag [#allocation3], 1
    %2335 = vsyncpa %s2334, 1
    %2336 = vsyncpa [#allocation6], 1
    %2337 = vsyncpa [#allocation9], 1
    %2338 = vsyncpa [#allocation4], 1
    %s2339 = scalar_lea.sflag [#allocation4], 1
    %2340 = vsyncpa %s2339, 1

// kernel: tpu_custom_call.1
$region0: #{tpu_custom_call.1}
  #allocation0 [shape = 'u32[]', space=smem, size = 0x4, offset = 0x4, fixed_abs, tag = 'smem constant byte address 0x4 - core index']
  #allocation1 [shape = 'u32[144,128]{1,0:T(1,128)}', space=vmem, size = 0x12000, scoped, tag = 'internal scratch']
  %s0 = inlined_call_operand.hbm [shape: bf16[512,128], index: 0, kind: input, shape index: {}]
  %s1 = inlined_call_operand.hbm [shape: bf16[128,256], index: 1, kind: input, shape index: {}]
  %s2 = inlined_call_operand.hbm [shape: bf16[256,256], index: 2, kind: input, shape index: {}]
  %s3 = inlined_call_operand.hbm [shape: bf16[256,256], index: 3, kind: input, shape index: {}]
  %s4 = inlined_call_operand.hbm [shape: bf16[256,128], index: 4, kind: input, shape index: {}]
  %s5 = inlined_call_operand.vmem [shape: f32[4,256], index: 5, kind: input, shape index: {}]
  %s6 = inlined_call_operand.hbm [shape: bf16[512,128], index: 6, kind: output, shape index: {}]
  %s7 = sld [smem:[#allocation0]]
  $region77: #{tpu_custom_call.1} parent=0
    _
  %s9 = ssub.s32 1, %s7
  %s10 = scalar_select 0, %s9, %s7
  $region1: #{tpu_custom_call.1} parent=0
    #allocation2 [shape = 'u8[131072]{0}', space=vmem, size = 0x20000, scoped, tag = 'input window, operand 0']
    #allocation3 [shape = 's32[2]{0}', space=sflag, size = 0x8, scoped, tag = 'scoped memory for tpu_custom_call.1']
    #allocation4 [shape = 's32[2]{0}', space=sflag, size = 0x8, scoped, tag = 'scoped memory for tpu_custom_call.1']
    #allocation5 [shape = 'u8[65536]{0}', space=vmem, size = 0x10000, scoped, tag = 'input window, operand 1, single buffered']
    #allocation6 [shape = 's32[1]{0}', space=sflag, size = 0x4, scoped, tag = 'scoped memory for tpu_custom_call.1']
    #allocation7 [shape = 'u8[131072]{0}', space=vmem, size = 0x20000, scoped, tag = 'input window, operand 2, single buffered']
    #allocation8 [shape = 'u8[131072]{0}', space=vmem, size = 0x20000, scoped, tag = 'input window, operand 3, single buffered']
    #allocation9 [shape = 's32[1]{0}', space=sflag, size = 0x4, scoped, tag = 'scoped memory for tpu_custom_call.1']
    #allocation10 [shape = 'u8[65536]{0}', space=vmem, size = 0x10000, scoped, tag = 'input window, operand 4, single buffered']
    #allocation11 [shape = 'u8[131072]{0}', space=vmem, size = 0x20000, scoped, tag = 'output window, operand 0']
    %11 = vsyncpa [#allocation3], 0
    %s12 = scalar_lea.sflag [#allocation3], 1
    %13 = vsyncpa %s12, 0
    %14 = vsyncpa [#allocation6], 0
    %15 = vsyncpa [#allocation9], 0
    %16 = vsyncpa [#allocation4], 0
    %s17 = scalar_lea.sflag [#allocation4], 1
    %18 = vsyncpa %s17, 0
    loop: start=0, step=1, limit=4
    $region2: #{tpu_custom_call.1} parent=1 // loop_pre_header
      _
    $region3: #{tpu_custom_call.1} parent=1 // loop_header
      %s20 = sphi 0, %s24
      %p21 = scmp.ge.s32.totalorder %s20, 4
      %s30 = sphi 0, %s32
      %s33 = sphi 0, %s30
      %s34 = sphi 0, %s33
      %s50 = sphi 0, %s34
      %s54 = sphi 0, %s54
      %s56 = sphi 0, %s54
      %s57 = sphi 0, %s56
      %s71 = sphi 0, %s57
      %s75 = sphi 0, %s75
      %s77 = sphi 0, %s75
      %s78 = sphi 0, %s77
      %s92 = sphi 0, %s78
      %s96 = sphi 0, %s96
      %s98 = sphi 0, %s96
      %s99 = sphi 0, %s98
      %s113 = sphi 0, %s99
      %s117 = sphi 0, %s117
      %s119 = sphi 0, %s117
      %s120 = sphi 0, %s119
      %s134 = sphi 0, %s120
      %s138 = sphi 0, %s138
      %s140 = sphi 0, %s138
      %s141 = sphi 0, %s140
      %s155 = sphi 0, %s141
      %s161 = sphi 0, %s163
      %s164 = sphi 0, %s161
      %s165 = sphi 0, %s164
      %s181 = sphi 0, %s165
    $region4: #{tpu_custom_call.1} parent=1 // loop_header_branch
      %23 = sbr.rel (%p21) target = $region8
    $region5: #{tpu_custom_call.1} parent=1 // loop_body
      %s25 = ssub.s32 %s20, 1
      %s26 = ssub.s32 %s20, 2
      %s27 = sadd.s32 %s20, 1
      %s28 = ssub.s32 %s20, %s27
      %p29 = scmp.eq.s32.totalorder %s28, 0
      %s31 = sadd.s32 %s30, 1
      %s32 = scalar_select %p29, %s30, %s31
      %p35 = pneg %p29
      %p36 = scmp.eq.s32.totalorder %s20, 1
      %p37 = por %p35, %p36
      %p38 = scmp.ne.s32.totalorder %s30, %s33
      %p39 = scmp.eq.s32.totalorder %s20, 0
      %p40 = por %p38, %p39
      %p41 = scmp.ne.s32.totalorder %s30, %s33
      %p42 = scmp.eq.s32.totalorder %s25, 1
      %p43 = por %p41, %p42
      %p44 = scmp.ne.s32.totalorder %s33, %s34
      %p45 = scmp.eq.s32.totalorder %s25, 0
      %p46 = por %p44, %p45
      %p47 = scmp.ne.s32.totalorder %s33, %s34
      %p48 = scmp.eq.s32.totalorder %s26, 1
      %p49 = por %p47, %p48
      %p51 = scmp.ne.s32.totalorder %s34, %s50
      %p52 = scmp.eq.s32.totalorder %s26, 0
      %p53 = por %p51, %p52
      %s55 = sadd.s32 %s54, 1
      %p58 = scmp.eq.s32.totalorder %s20, 1
      %p59 = scmp.ne.s32.totalorder %s54, %s56
      %p60 = scmp.eq.s32.totalorder %s20, 0
      %p61 = por %p59, %p60
      %p62 = scmp.ne.s32.totalorder %s54, %s56
      %p63 = scmp.eq.s32.totalorder %s25, 1
      %p64 = por %p62, %p63
      %p65 = scmp.ne.s32.totalorder %s56, %s57
      %p66 = scmp.eq.s32.totalorder %s25, 0
      %p67 = por %p65, %p66
      %p68 = scmp.ne.s32.totalorder %s56, %s57
      %p69 = scmp.eq.s32.totalorder %s26, 1
      %p70 = por %p68, %p69
      %p72 = scmp.ne.s32.totalorder %s57, %s71
      %p73 = scmp.eq.s32.totalorder %s26, 0
      %p74 = por %p72, %p73
      %s76 = sadd.s32 %s75, 1
      %p79 = scmp.eq.s32.totalorder %s20, 1
      %p80 = scmp.ne.s32.totalorder %s75, %s77
      %p81 = scmp.eq.s32.totalorder %s20, 0
      %p82 = por %p80, %p81
      %p83 = scmp.ne.s32.totalorder %s75, %s77
      %p84 = scmp.eq.s32.totalorder %s25, 1
      %p85 = por %p83, %p84
      %p86 = scmp.ne.s32.totalorder %s77, %s78
      %p87 = scmp.eq.s32.totalorder %s25, 0
      %p88 = por %p86, %p87
      %p89 = scmp.ne.s32.totalorder %s77, %s78
      %p90 = scmp.eq.s32.totalorder %s26, 1
      %p91 = por %p89, %p90
      %p93 = scmp.ne.s32.totalorder %s78, %s92
      %p94 = scmp.eq.s32.totalorder %s26, 0
      %p95 = por %p93, %p94
      %s97 = sadd.s32 %s96, 1
      %p100 = scmp.eq.s32.totalorder %s20, 1
      %p101 = scmp.ne.s32.totalorder %s96, %s98
      %p102 = scmp.eq.s32.totalorder %s20, 0
      %p103 = por %p101, %p102
      %p104 = scmp.ne.s32.totalorder %s96, %s98
      %p105 = scmp.eq.s32.totalorder %s25, 1
      %p106 = por %p104, %p105
      %p107 = scmp.ne.s32.totalorder %s98, %s99
      %p108 = scmp.eq.s32.totalorder %s25, 0
      %p109 = por %p107, %p108
      %p110 = scmp.ne.s32.totalorder %s98, %s99
      %p111 = scmp.eq.s32.totalorder %s26, 1
      %p112 = por %p110, %p111
      %p114 = scmp.ne.s32.totalorder %s99, %s113
      %p115 = scmp.eq.s32.totalorder %s26, 0
      %p116 = por %p114, %p115
      %s118 = sadd.s32 %s117, 1
      %p121 = scmp.eq.s32.totalorder %s20, 1
      %p122 = scmp.ne.s32.totalorder %s117, %s119
      %p123 = scmp.eq.s32.totalorder %s20, 0
      %p124 = por %p122, %p123
      %p125 = scmp.ne.s32.totalorder %s117, %s119
      %p126 = scmp.eq.s32.totalorder %s25, 1
      %p127 = por %p125, %p126
      %p128 = scmp.ne.s32.totalorder %s119, %s120
      %p129 = scmp.eq.s32.totalorder %s25, 0
      %p130 = por %p128, %p129
      %p131 = scmp.ne.s32.totalorder %s119, %s120
      %p132 = scmp.eq.s32.totalorder %s26, 1
      %p133 = por %p131, %p132
      %p135 = scmp.ne.s32.totalorder %s120, %s134
      %p136 = scmp.eq.s32.totalorder %s26, 0
      %p137 = por %p135, %p136
      %s139 = sadd.s32 %s138, 1
      %p142 = scmp.eq.s32.totalorder %s20, 1
      %p143 = scmp.ne.s32.totalorder %s138, %s140
      %p144 = scmp.eq.s32.totalorder %s20, 0
      %p145 = por %p143, %p144
      %p146 = scmp.ne.s32.totalorder %s138, %s140
      %p147 = scmp.eq.s32.totalorder %s25, 1
      %p148 = por %p146, %p147
      %p149 = scmp.ne.s32.totalorder %s140, %s141
      %p150 = scmp.eq.s32.totalorder %s25, 0
      %p151 = por %p149, %p150
      %p152 = scmp.ne.s32.totalorder %s140, %s141
      %p153 = scmp.eq.s32.totalorder %s26, 1
      %p154 = por %p152, %p153
      %p156 = scmp.ne.s32.totalorder %s141, %s155
      %p157 = scmp.eq.s32.totalorder %s26, 0
      %p158 = por %p156, %p157
      %s159 = ssub.s32 %s20, %s27
      %p160 = scmp.eq.s32.totalorder %s159, 0
      %s162 = sadd.s32 %s161, 1
      %s163 = scalar_select %p160, %s161, %s162
      %p166 = pneg %p160
      %p167 = scmp.eq.s32.totalorder %s20, 1
      %p168 = por %p166, %p167
      %p169 = scmp.ne.s32.totalorder %s161, %s164
      %p170 = scmp.eq.s32.totalorder %s20, 0
      %p171 = por %p169, %p170
      %p172 = scmp.ne.s32.totalorder %s161, %s164
      %p173 = scmp.eq.s32.totalorder %s25, 1
      %p174 = por %p172, %p173
      %p175 = scmp.ne.s32.totalorder %s164, %s165
      %p176 = scmp.eq.s32.totalorder %s25, 0
      %p177 = por %p175, %p176
      %p178 = scmp.ne.s32.totalorder %s164, %s165
      %p179 = scmp.eq.s32.totalorder %s26, 1
      %p180 = por %p178, %p179
      %p182 = scmp.ne.s32.totalorder %s165, %s181
      %p183 = scmp.eq.s32.totalorder %s26, 0
      %p184 = por %p182, %p183
      %p185 = scmp.le.s32.totalorder 1, %s20
      %p186 = scmp.lt.s32.totalorder %s20, 3
      %p187 = pnand %p185, %p186
      %p188 = pneg %p187
      // Predicated region
      $region9: #{tpu_custom_call.1} parent=5 // pred_check
        _
      $region10: #{tpu_custom_call.1} parent=5 // pred_check_branch
        %190 = sbr.rel (%p187) target = $region12
      $region11: #{tpu_custom_call.1} parent=5 // pred_region
        %s191 = ssub.s32 %s20, 1
        // Predicated region
        $region13: #{tpu_custom_call.1} parent=11 // pred_check
          %p192 = pneg %p67
        $region14: #{tpu_custom_call.1} parent=11 // pred_check_branch
          %194 = sbr.rel (%p192) target = $region16
        $region15: #{tpu_custom_call.1} parent=11 // pred_region
          %s196 = ssub.s32 2048, 2048
          %197 = vsyncadd [#allocation6], %s196
          %s198 = sshll.u32 [#allocation5], 4
          %s199 = int_to_ptr.vmem [resolvable:$true] %s198
          %204 = dma.hbm_to_vmem [thread:$0]  %s1, 2048, %s199, [#allocation6], 128, 128, 8
        $region16: #{tpu_custom_call.1} parent=11 // pred_fallthru
          _
        // Predicated region
        $region17: #{tpu_custom_call.1} parent=11 // pred_check
          %p205 = pneg %p88
        $region18: #{tpu_custom_call.1} parent=11 // pred_check_branch
          %207 = sbr.rel (%p205) target = $region20
        $region19: #{tpu_custom_call.1} parent=11 // pred_region
          %s209 = ssub.s32 4096, 4096
          %210 = vsyncadd [#allocation6], %s209
          %s211 = sshll.u32 [#allocation7], 4
          %s212 = int_to_ptr.vmem [resolvable:$true] %s211
          %217 = dma.hbm_to_vmem [thread:$0]  %s2, 4096, %s212, [#allocation6], 128, 128, 8
        $region20: #{tpu_custom_call.1} parent=11 // pred_fallthru
          _
        // Predicated region
        $region21: #{tpu_custom_call.1} parent=11 // pred_check
          %p218 = pneg %p109
        $region22: #{tpu_custom_call.1} parent=11 // pred_check_branch
          %220 = sbr.rel (%p218) target = $region24
        $region23: #{tpu_custom_call.1} parent=11 // pred_region
          %s222 = ssub.s32 4096, 4096
          %223 = vsyncadd [#allocation9], %s222
          %s224 = sshll.u32 [#allocation8], 4
          %s225 = int_to_ptr.vmem [resolvable:$true] %s224
          %230 = dma.hbm_to_vmem [thread:$0]  %s3, 4096, %s225, [#allocation9], 128, 128, 8
        $region24: #{tpu_custom_call.1} parent=11 // pred_fallthru
          _
        // Predicated region
        $region25: #{tpu_custom_call.1} parent=11 // pred_check
          %p231 = pneg %p130
        $region26: #{tpu_custom_call.1} parent=11 // pred_check_branch
          %233 = sbr.rel (%p231) target = $region28
        $region27: #{tpu_custom_call.1} parent=11 // pred_region
          %s235 = ssub.s32 2048, 2048
          %236 = vsyncadd [#allocation9], %s235
          %s237 = sshll.u32 [#allocation10], 4
          %s238 = int_to_ptr.vmem [resolvable:$true] %s237
          %243 = dma.hbm_to_vmem [thread:$0]  %s4, 2048, %s238, [#allocation9], 64, 64, 4
        $region28: #{tpu_custom_call.1} parent=11 // pred_fallthru
          _
        // Predicated region
        $region29: #{tpu_custom_call.1} parent=11 // pred_check
          %p244 = pneg %p151
        $region30: #{tpu_custom_call.1} parent=11 // pred_check_branch
          %246 = sbr.rel (%p244) target = $region32
        $region31: #{tpu_custom_call.1} parent=11 // pred_region
          _
        $region32: #{tpu_custom_call.1} parent=11 // pred_fallthru
          _
      $region12: #{tpu_custom_call.1} parent=5 // pred_fallthru
        _
      %p247 = scmp.lt.s32.totalorder %s20, 2
      // Predicated region
      $region33: #{tpu_custom_call.1} parent=5 // pred_check
        %p248 = pneg %p247
      $region34: #{tpu_custom_call.1} parent=5 // pred_check_branch
        %250 = sbr.rel (%p248) target = $region36
      $region35: #{tpu_custom_call.1} parent=5 // pred_region
        // Predicated region
        $region37: #{tpu_custom_call.1} parent=35 // pred_check
          %p251 = pneg %p40
        $region38: #{tpu_custom_call.1} parent=35 // pred_check_branch
          %253 = sbr.rel (%p251) target = $region40
        $region39: #{tpu_custom_call.1} parent=35 // pred_region
          %s254 = sand.u32 %s30, 1
          %s255 = scalar_lea.sflag [#allocation3], %s254
          %s256 = sand.u32 %s30, 1
          %s257 = smul.addr %s256, 128
          %s258 = scalar_lea.vmem [#allocation2], %s257
          %s259 = smul.u32 32, %s20
          %s261 = ssub.s32 2048, 2048
          %262 = vsyncadd %s255, %s261
          %s263 = smul.addr %s259, 64
          %s264 = scalar_lea.hbm %s0, %s263
          %s265 = sshll.u32 %s258, 4
          %s266 = int_to_ptr.vmem [resolvable:$true] %s265
          %271 = dma.hbm_to_vmem [thread:$0]  %s264, 2048, %s266, %s255, 64, 64, 4
        $region40: #{tpu_custom_call.1} parent=35 // pred_fallthru
          _
      $region36: #{tpu_custom_call.1} parent=5 // pred_fallthru
        _
      %p272 = scmp.le.s32.totalorder 1, %s20
      %p273 = scmp.lt.s32.totalorder %s20, 3
      %p274 = pnand %p272, %p273
      %p275 = pneg %p274
      // Predicated region
      $region41: #{tpu_custom_call.1} parent=5 // pred_check
        _
      $region42: #{tpu_custom_call.1} parent=5 // pred_check_branch
        %277 = sbr.rel (%p274) target = $region44
      $region43: #{tpu_custom_call.1} parent=5 // pred_region
        %s278 = ssub.s32 %s20, 1
        %s279 = sand.u32 %s33, 1
        %s280 = scalar_lea.sflag [#allocation3], %s279
        %s281 = sand.u32 %s33, 1
        %s282 = smul.addr %s281, 128
        %s283 = scalar_lea.vmem [#allocation2], %s282
        // Predicated region
        $region45: #{tpu_custom_call.1} parent=43 // pred_check
          %p284 = pneg %p46
        $region46: #{tpu_custom_call.1} parent=43 // pred_check_branch
          %286 = sbr.rel (%p284) target = $region48
        $region47: #{tpu_custom_call.1} parent=43 // pred_region
          %287 = dma.done %s280, 2048
        $region48: #{tpu_custom_call.1} parent=43 // pred_fallthru
          _
        // Predicated region
        $region49: #{tpu_custom_call.1} parent=43 // pred_check
          %p288 = pneg %p67
        $region50: #{tpu_custom_call.1} parent=43 // pred_check_branch
          %290 = sbr.rel (%p288) target = $region52
        $region51: #{tpu_custom_call.1} parent=43 // pred_region
          %291 = dma.done [#allocation6], 2048
        $region52: #{tpu_custom_call.1} parent=43 // pred_fallthru
          _
        // Predicated region
        $region53: #{tpu_custom_call.1} parent=43 // pred_check
          %p292 = pneg %p88
        $region54: #{tpu_custom_call.1} parent=43 // pred_check_branch
          %294 = sbr.rel (%p292) target = $region56
        $region55: #{tpu_custom_call.1} parent=43 // pred_region
          %295 = dma.done [#allocation6], 4096
        $region56: #{tpu_custom_call.1} parent=43 // pred_fallthru
          _
        // Predicated region
        $region57: #{tpu_custom_call.1} parent=43 // pred_check
          %p296 = pneg %p109
        $region58: #{tpu_custom_call.1} parent=43 // pred_check_branch
          %298 = sbr.rel (%p296) target = $region60
        $region59: #{tpu_custom_call.1} parent=43 // pred_region
          %299 = dma.done [#allocation9], 4096
        $region60: #{tpu_custom_call.1} parent=43 // pred_fallthru
          _
        // Predicated region
        $region61: #{tpu_custom_call.1} parent=43 // pred_check
          %p300 = pneg %p130
        $region62: #{tpu_custom_call.1} parent=43 // pred_check_branch
          %302 = sbr.rel (%p300) target = $region64
        $region63: #{tpu_custom_call.1} parent=43 // pred_region
          %303 = dma.done [#allocation9], 2048
        $region64: #{tpu_custom_call.1} parent=43 // pred_fallthru
          _
        %s304 = sand.u32 %s33, 1
        %s305 = scalar_lea.sflag [#allocation3], %s304
        %s306 = sand.u32 %s33, 1
        %s307 = smul.addr %s306, 128
        %s308 = scalar_lea.vmem [#allocation2], %s307
        %p309 = pneg %p46
        %p310 = pneg %p43
        %p311 = pneg %p67
        %p312 = pneg %p64
        %p313 = pneg %p88
        %p314 = pneg %p85
        %p315 = pneg %p109
        %p316 = pneg %p106
        %p317 = pneg %p130
        %p318 = pneg %p127
        %p319 = pneg %p151
        %p320 = pneg %p148
        %p321 = pneg %p177
        %p322 = pneg %p174
        %s323 = sand.u32 %s164, 1
        %s324 = scalar_lea.sflag [#allocation4], %s323
        %s325 = sand.u32 %s164, 1
        %s326 = smul.addr %s325, 128
        %s327 = scalar_lea.vmem [#allocation11], %s326
        %s328 = smul.u32 32, %s25
        %s329 = smul.u32 32, %s25
        %v331 = vld [vmem:[%s283] sm:$0xf]
        %v332 = vld [vmem:[%s283 + $0x4] sm:$0xf]
        %v333 = vld [vmem:[%s283 + $0x8] sm:$0xf]
        %v334 = vld [vmem:[%s283 + $0xc] sm:$0xf]
        %v335 = vld [vmem:[%s283 + $0x10] sm:$0xf]
        %v336 = vld [vmem:[%s283 + $0x14] sm:$0xf]
        %v337 = vld [vmem:[%s283 + $0x18] sm:$0xf]
        %v338 = vld [vmem:[%s283 + $0x1c] sm:$0xf]
        %v339 = vld [vmem:[%s283 + $0x20] sm:$0xf]
        %v340 = vld [vmem:[%s283 + $0x24] sm:$0xf]
        %v341 = vld [vmem:[%s283 + $0x28] sm:$0xf]
        %v342 = vld [vmem:[%s283 + $0x2c] sm:$0xf]
        %v343 = vld [vmem:[%s283 + $0x30] sm:$0xf]
        %v344 = vld [vmem:[%s283 + $0x34] sm:$0xf]
        %v345 = vld [vmem:[%s283 + $0x38] sm:$0xf]
        %v346 = vld [vmem:[%s283 + $0x3c] sm:$0xf]
        %v347 = vld [vmem:[%s283 + $0x40] sm:$0xf]
        %v348 = vld [vmem:[%s283 + $0x44] sm:$0xf]
        %v349 = vld [vmem:[%s283 + $0x48] sm:$0xf]
        %v350 = vld [vmem:[%s283 + $0x4c] sm:$0xf]
        %v351 = vld [vmem:[%s283 + $0x50] sm:$0xf]
        %v352 = vld [vmem:[%s283 + $0x54] sm:$0xf]
        %v353 = vld [vmem:[%s283 + $0x58] sm:$0xf]
        %v354 = vld [vmem:[%s283 + $0x5c] sm:$0xf]
        %v355 = vld [vmem:[%s283 + $0x60] sm:$0xf]
        %v356 = vld [vmem:[%s283 + $0x64] sm:$0xf]
        %v357 = vld [vmem:[%s283 + $0x68] sm:$0xf]
        %v358 = vld [vmem:[%s283 + $0x6c] sm:$0xf]
        %v359 = vld [vmem:[%s283 + $0x70] sm:$0xf]
        %v360 = vld [vmem:[%s283 + $0x74] sm:$0xf]
        %v361 = vld [vmem:[%s283 + $0x78] sm:$0xf]
        %v362 = vld [vmem:[%s283 + $0x7c] sm:$0xf]
        %v363 = vld [vmem:[#allocation5] sm:$0xff]
        %v364 = vld [vmem:[#allocation5 + $0x8] sm:$0xff]
        %v365 = vld [vmem:[#allocation5 + $0x10] sm:$0xff]
        %v366 = vld [vmem:[#allocation5 + $0x18] sm:$0xff]
        %v367 = vld [vmem:[#allocation5 + $0x20] sm:$0xff]
        %v368 = vld [vmem:[#allocation5 + $0x28] sm:$0xff]
        %v369 = vld [vmem:[#allocation5 + $0x30] sm:$0xff]
        %v370 = vld [vmem:[#allocation5 + $0x38] sm:$0xff]
        %v371 = vld [vmem:[#allocation5 + $0x40] sm:$0xff]
        %v372 = vld [vmem:[#allocation5 + $0x48] sm:$0xff]
        %v373 = vld [vmem:[#allocation5 + $0x50] sm:$0xff]
        %v374 = vld [vmem:[#allocation5 + $0x58] sm:$0xff]
        %v375 = vld [vmem:[#allocation5 + $0x60] sm:$0xff]
        %v376 = vld [vmem:[#allocation5 + $0x68] sm:$0xff]
        %v377 = vld [vmem:[#allocation5 + $0x70] sm:$0xff]
        %v378 = vld [vmem:[#allocation5 + $0x78] sm:$0xff]
        %v379 = vld [vmem:[%s5] ss:$4 sm:$0x3]
        %v381 = vlaneseq
        %v382 = vshrl.u32 %v381, 7
        %v383 = vsub.s32 0, %v382
        %v384 = vrot.slane %v379, %v383
        %v385 = vlaneseq
        %v386 = vshrl.u32 %v385, 7
        %v387 = vsub.s32 1, %v386
        %v388 = vrot.slane %v379, %v387
        %v423 = vunpack.c.l.b16 %v331
        %v424 = vunpack.c.l.b16 %v332
        %v425 = vunpack.c.l.b16 %v333
        %v426 = vunpack.c.l.b16 %v334
        %v427 = vunpack.c.l.b16 %v335
        %v428 = vunpack.c.l.b16 %v336
        %v429 = vunpack.c.l.b16 %v337
        %v430 = vunpack.c.l.b16 %v338
        %v431 = vunpack.c.l.b16 %v339
        %v432 = vunpack.c.l.b16 %v340
        %v433 = vunpack.c.l.b16 %v341
        %v434 = vunpack.c.l.b16 %v342
        %v435 = vunpack.c.l.b16 %v343
        %v436 = vunpack.c.l.b16 %v344
        %v437 = vunpack.c.l.b16 %v345
        %v438 = vunpack.c.l.b16 %v346
        %v439 = vunpack.c.l.b16 %v347
        %v440 = vunpack.c.l.b16 %v348
        %v441 = vunpack.c.l.b16 %v349
        %v442 = vunpack.c.l.b16 %v350
        %v443 = vunpack.c.l.b16 %v351
        %v444 = vunpack.c.l.b16 %v352
        %v445 = vunpack.c.l.b16 %v353
        %v446 = vunpack.c.l.b16 %v354
        %v447 = vunpack.c.l.b16 %v355
        %v448 = vunpack.c.l.b16 %v356
        %v449 = vunpack.c.l.b16 %v357
        %v450 = vunpack.c.l.b16 %v358
        %v451 = vunpack.c.l.b16 %v359
        %v452 = vunpack.c.l.b16 %v360
        %v453 = vunpack.c.l.b16 %v361
        %v454 = vunpack.c.l.b16 %v362
        %v455 = vpack.c.b16 %v424, %v423
        %v456 = vpack.c.b16 %v426, %v425
        %v457 = vpack.c.b16 %v428, %v427
        %v458 = vpack.c.b16 %v430, %v429
        %v459 = vpack.c.b16 %v432, %v431
        %v460 = vpack.c.b16 %v434, %v433
        %v461 = vpack.c.b16 %v436, %v435
        %v462 = vpack.c.b16 %v438, %v437
        %v463 = vpack.c.b16 %v440, %v439
        %v464 = vpack.c.b16 %v442, %v441
        %v465 = vpack.c.b16 %v444, %v443
        %v466 = vpack.c.b16 %v446, %v445
        %v467 = vpack.c.b16 %v448, %v447
        %v468 = vpack.c.b16 %v450, %v449
        %v469 = vpack.c.b16 %v452, %v451
        %v470 = vpack.c.b16 %v454, %v453
        %v503 = vunpack.c.l.b16 %v363
        %v504 = vunpack.c.h.b16 %v363
        %v505 = vunpack.c.l.b16 %v364
        %v506 = vunpack.c.h.b16 %v364
        %v507 = vunpack.c.l.b16 %v365
        %v508 = vunpack.c.h.b16 %v365
        %v509 = vunpack.c.l.b16 %v366
        %v510 = vunpack.c.h.b16 %v366
        %v511 = vunpack.c.l.b16 %v367
        %v512 = vunpack.c.h.b16 %v367
        %v513 = vunpack.c.l.b16 %v368
        %v514 = vunpack.c.h.b16 %v368
        %v515 = vunpack.c.l.b16 %v369
        %v516 = vunpack.c.h.b16 %v369
        %v517 = vunpack.c.l.b16 %v370
        %v518 = vunpack.c.h.b16 %v370
        %v519 = vunpack.c.l.b16 %v371
        %v520 = vunpack.c.h.b16 %v371
        %v521 = vunpack.c.l.b16 %v372
        %v522 = vunpack.c.h.b16 %v372
        %v523 = vunpack.c.l.b16 %v373
        %v524 = vunpack.c.h.b16 %v373
        %v525 = vunpack.c.l.b16 %v374
        %v526 = vunpack.c.h.b16 %v374
        %v527 = vunpack.c.l.b16 %v375
        %v528 = vunpack.c.h.b16 %v375
        %v529 = vunpack.c.l.b16 %v376
        %v530 = vunpack.c.h.b16 %v376
        %v531 = vunpack.c.l.b16 %v377
        %v532 = vunpack.c.h.b16 %v377
        %v533 = vunpack.c.l.b16 %v378
        %v534 = vunpack.c.h.b16 %v378
        %v535 = vpack.c.b16 %v505, %v503
        %v536 = vpack.c.b16 %v506, %v504
        %v537 = vpack.c.b16 %v509, %v507
        %v538 = vpack.c.b16 %v510, %v508
        %v539 = vpack.c.b16 %v513, %v511
        %v540 = vpack.c.b16 %v514, %v512
        %v541 = vpack.c.b16 %v517, %v515
        %v542 = vpack.c.b16 %v518, %v516
        %v543 = vpack.c.b16 %v521, %v519
        %v544 = vpack.c.b16 %v522, %v520
        %v545 = vpack.c.b16 %v525, %v523
        %v546 = vpack.c.b16 %v526, %v524
        %v547 = vpack.c.b16 %v529, %v527
        %v548 = vpack.c.b16 %v530, %v528
        %v549 = vpack.c.b16 %v533, %v531
        %v550 = vpack.c.b16 %v534, %v532
        %567 = vmatprep.subr.bf16.mxu0 %v536
        %568 = vmatpush1.bf16.msra.mxu0 %v535
        %569 = vmatprep.subr.bf16.mxu0 %v538
        %570 = vmatpush1.bf16.msra.mxu0 %v537
        %571 = vmatprep.subr.bf16.mxu0 %v540
        %572 = vmatpush1.bf16.msra.mxu0 %v539
        %573 = vmatprep.subr.bf16.mxu0 %v542
        %574 = vmatpush1.bf16.msra.mxu0 %v541
        %575 = vmatprep.subr.bf16.mxu0 %v544
        %576 = vmatpush1.bf16.msra.mxu0 %v543
        %577 = vmatprep.subr.bf16.mxu0 %v546
        %578 = vmatpush1.bf16.msra.mxu0 %v545
        %579 = vmatprep.subr.bf16.mxu0 %v548
        %580 = vmatpush1.bf16.msra.mxu0 %v547
        %581 = vmatprep.subr.bf16.mxu0 %v550
        %582 = vmatpush1.bf16.msra.mxu0 %v549
        %583 = vmatprep.subr.bf16.mxu0 0
        %584 = vmatpush1.bf16.msra.mxu0 0
        %585 = vmatprep.subr.bf16.mxu0 0
        %586 = vmatpush1.bf16.msra.mxu0 0
        %587 = vmatprep.subr.bf16.mxu0 0
        %588 = vmatpush1.bf16.msra.mxu0 0
        %589 = vmatprep.subr.bf16.mxu0 0
        %590 = vmatpush1.bf16.msra.mxu0 0
        %591 = vmatprep.subr.bf16.mxu0 0
        %592 = vmatpush1.bf16.msra.mxu0 0
        %593 = vmatprep.subr.bf16.mxu0 0
        %594 = vmatpush1.bf16.msra.mxu0 0
        %595 = vmatprep.subr.bf16.mxu0 0
        %596 = vmatpush1.bf16.msra.mxu0 0
        %597 = vmatprep.subr.bf16.mxu0 0
        %598 = vmatpush1.bf16.msra.mxu0 0
        %599 = vmatprep.mubr.bf16.mxu0 0
        %600 = vmatmul.mubr.bf16.gmra.mrb[0].mxu0 %v455
        %v601 = vpop.f32.mrb[0].mxu0
        %v602 = vadd.f32 %v384, %v601
        %v603 = vpop.f32.mrb[0].mxu0
        %v604 = vadd.f32 %v388, %v603
        %v605 = vpop.f32.mrb[0].mxu0
        %v606 = vadd.f32 %v384, %v605
        %v607 = vpop.f32.mrb[0].mxu0
        %v608 = vadd.f32 %v388, %v607
        %609 = vmatprep.mubr.bf16.mxu0 0
        %610 = vmatmul.mubr.bf16.gmra.mrb[0].mxu0 %v456
        %v611 = vpop.f32.mrb[0].mxu0
        %v612 = vadd.f32 %v384, %v611
        %v613 = vpop.f32.mrb[0].mxu0
        %v614 = vadd.f32 %v388, %v613
        %v615 = vpop.f32.mrb[0].mxu0
        %v616 = vadd.f32 %v384, %v615
        %v617 = vpop.f32.mrb[0].mxu0
        %v618 = vadd.f32 %v388, %v617
        %619 = vmatprep.mubr.bf16.mxu0 0
        %620 = vmatmul.mubr.bf16.gmra.mrb[0].mxu0 %v457
        %v621 = vpop.f32.mrb[0].mxu0
        %v622 = vadd.f32 %v384, %v621
        %v623 = vpop.f32.mrb[0].mxu0
        %v624 = vadd.f32 %v388, %v623
        %v625 = vpop.f32.mrb[0].mxu0
        %v626 = vadd.f32 %v384, %v625
        %v627 = vpop.f32.mrb[0].mxu0
        %v628 = vadd.f32 %v388, %v627
        %629 = vmatprep.mubr.bf16.mxu0 0
        %630 = vmatmul.mubr.bf16.gmra.mrb[0].mxu0 %v458
        %v631 = vpop.f32.mrb[0].mxu0
        %v632 = vadd.f32 %v384, %v631
        %v633 = vpop.f32.mrb[0].mxu0
        %v634 = vadd.f32 %v388, %v633
        %v635 = vpop.f32.mrb[0].mxu0
        %v636 = vadd.f32 %v384, %v635
        %v637 = vpop.f32.mrb[0].mxu0
        %v638 = vadd.f32 %v388, %v637
        %639 = vmatprep.mubr.bf16.mxu0 0
        %640 = vmatmul.mubr.bf16.gmra.mrb[0].mxu0 %v459
        %v641 = vpop.f32.mrb[0].mxu0
        %v642 = vadd.f32 %v384, %v641
        %v643 = vpop.f32.mrb[0].mxu0
        %v644 = vadd.f32 %v388, %v643
        %v645 = vpop.f32.mrb[0].mxu0
        %v646 = vadd.f32 %v384, %v645
        %v647 = vpop.f32.mrb[0].mxu0
        %v648 = vadd.f32 %v388, %v647
        %649 = vmatprep.mubr.bf16.mxu0 0
        %650 = vmatmul.mubr.bf16.gmra.mrb[0].mxu0 %v460
        %v651 = vpop.f32.mrb[0].mxu0
        %v652 = vadd.f32 %v384, %v651
        %v653 = vpop.f32.mrb[0].mxu0
        %v654 = vadd.f32 %v388, %v653
        %v655 = vpop.f32.mrb[0].mxu0
        %v656 = vadd.f32 %v384, %v655
        %v657 = vpop.f32.mrb[0].mxu0
        %v658 = vadd.f32 %v388, %v657
        %659 = vmatprep.mubr.bf16.mxu0 0
        %660 = vmatmul.mubr.bf16.gmra.mrb[0].mxu0 %v461
        %v661 = vpop.f32.mrb[0].mxu0
        %v662 = vadd.f32 %v384, %v661
        %v663 = vpop.f32.mrb[0].mxu0
        %v664 = vadd.f32 %v388, %v663
        %v665 = vpop.f32.mrb[0].mxu0
        %v666 = vadd.f32 %v384, %v665
        %v667 = vpop.f32.mrb[0].mxu0
        %v668 = vadd.f32 %v388, %v667
        %669 = vmatprep.mubr.bf16.mxu0 0
        %670 = vmatmul.mubr.bf16.gmra.mrb[0].mxu0 %v462
        %v671 = vpop.f32.mrb[0].mxu0
        %v672 = vadd.f32 %v384, %v671
        %v673 = vpop.f32.mrb[0].mxu0
        %v674 = vadd.f32 %v388, %v673
        %v675 = vpop.f32.mrb[0].mxu0
        %v676 = vadd.f32 %v384, %v675
        %v677 = vpop.f32.mrb[0].mxu0
        %v678 = vadd.f32 %v388, %v677
        %679 = vmatprep.mubr.bf16.mxu0 0
        %680 = vmatmul.mubr.bf16.gmra.mrb[0].mxu0 %v463
        %v681 = vpop.f32.mrb[0].mxu0
        %v682 = vadd.f32 %v384, %v681
        %v683 = vpop.f32.mrb[0].mxu0
        %v684 = vadd.f32 %v388, %v683
        %v685 = vpop.f32.mrb[0].mxu0
        %v686 = vadd.f32 %v384, %v685
        %v687 = vpop.f32.mrb[0].mxu0
        %v688 = vadd.f32 %v388, %v687
        %689 = vmatprep.mubr.bf16.mxu0 0
        %690 = vmatmul.mubr.bf16.gmra.mrb[0].mxu0 %v464
        %v691 = vpop.f32.mrb[0].mxu0
        %v692 = vadd.f32 %v384, %v691
        %v693 = vpop.f32.mrb[0].mxu0
        %v694 = vadd.f32 %v388, %v693
        %v695 = vpop.f32.mrb[0].mxu0
        %v696 = vadd.f32 %v384, %v695
        %v697 = vpop.f32.mrb[0].mxu0
        %v698 = vadd.f32 %v388, %v697
        %699 = vmatprep.mubr.bf16.mxu0 0
        %700 = vmatmul.mubr.bf16.gmra.mrb[0].mxu0 %v465
        %v701 = vpop.f32.mrb[0].mxu0
        %v702 = vadd.f32 %v384, %v701
        %v703 = vpop.f32.mrb[0].mxu0
        %v704 = vadd.f32 %v388, %v703
        %v705 = vpop.f32.mrb[0].mxu0
        %v706 = vadd.f32 %v384, %v705
        %v707 = vpop.f32.mrb[0].mxu0
        %v708 = vadd.f32 %v388, %v707
        %709 = vmatprep.mubr.bf16.mxu0 0
        %710 = vmatmul.mubr.bf16.gmra.mrb[0].mxu0 %v466
        %v711 = vpop.f32.mrb[0].mxu0
        %v712 = vadd.f32 %v384, %v711
        %v713 = vpop.f32.mrb[0].mxu0
        %v714 = vadd.f32 %v388, %v713
        %v715 = vpop.f32.mrb[0].mxu0
        %v716 = vadd.f32 %v384, %v715
        %v717 = vpop.f32.mrb[0].mxu0
        %v718 = vadd.f32 %v388, %v717
        %719 = vmatprep.mubr.bf16.mxu0 0
        %720 = vmatmul.mubr.bf16.gmra.mrb[0].mxu0 %v467
        %v721 = vpop.f32.mrb[0].mxu0
        %v722 = vadd.f32 %v384, %v721
        %v723 = vpop.f32.mrb[0].mxu0
        %v724 = vadd.f32 %v388, %v723
        %v725 = vpop.f32.mrb[0].mxu0
        %v726 = vadd.f32 %v384, %v725
        %v727 = vpop.f32.mrb[0].mxu0
        %v728 = vadd.f32 %v388, %v727
        %729 = vmatprep.mubr.bf16.mxu0 0
        %730 = vmatmul.mubr.bf16.gmra.mrb[0].mxu0 %v468
        %v731 = vpop.f32.mrb[0].mxu0
        %v732 = vadd.f32 %v384, %v731
        %v733 = vpop.f32.mrb[0].mxu0
        %v734 = vadd.f32 %v388, %v733
        %v735 = vpop.f32.mrb[0].mxu0
        %v736 = vadd.f32 %v384, %v735
        %v737 = vpop.f32.mrb[0].mxu0
        %v738 = vadd.f32 %v388, %v737
        %739 = vmatprep.mubr.bf16.mxu0 0
        %740 = vmatmul.mubr.bf16.gmra.mrb[0].mxu0 %v469
        %v741 = vpop.f32.mrb[0].mxu0
        %v742 = vadd.f32 %v384, %v741
        %v743 = vpop.f32.mrb[0].mxu0
        %v744 = vadd.f32 %v388, %v743
        %v745 = vpop.f32.mrb[0].mxu0
        %v746 = vadd.f32 %v384, %v745
        %v747 = vpop.f32.mrb[0].mxu0
        %v748 = vadd.f32 %v388, %v747
        %749 = vmatprep.mubr.bf16.mxu0 0
        %750 = vmatmul.mubr.bf16.gmra.mrb[0].mxu0 %v470
        %v751 = vpop.f32.mrb[0].mxu0
        %v752 = vadd.f32 %v384, %v751
        %v753 = vpop.f32.mrb[0].mxu0
        %v754 = vadd.f32 %v388, %v753
        %v755 = vpop.f32.mrb[0].mxu0
        %v756 = vadd.f32 %v384, %v755
        %v757 = vpop.f32.mrb[0].mxu0
        %v758 = vadd.f32 %v388, %v757
        %759 = vdwg.mxu0
        %v760 = vmax.f32 %v602, 0.0
        %v761 = vmax.f32 %v604, 0.0
        %v762 = vmax.f32 %v606, 0.0
        %v763 = vmax.f32 %v608, 0.0
        %v764 = vmax.f32 %v612, 0.0
        %v765 = vmax.f32 %v614, 0.0
        %v766 = vmax.f32 %v616, 0.0
        %v767 = vmax.f32 %v618, 0.0
        %v768 = vmax.f32 %v622, 0.0
        %v769 = vmax.f32 %v624, 0.0
        %v770 = vmax.f32 %v626, 0.0
        %v771 = vmax.f32 %v628, 0.0
        %v772 = vmax.f32 %v632, 0.0
        %v773 = vmax.f32 %v634, 0.0
        %v774 = vmax.f32 %v636, 0.0
        %v775 = vmax.f32 %v638, 0.0
        %v776 = vmax.f32 %v642, 0.0
        %v777 = vmax.f32 %v644, 0.0
        %v778 = vmax.f32 %v646, 0.0
        %v779 = vmax.f32 %v648, 0.0
        %v780 = vmax.f32 %v652, 0.0
        %v781 = vmax.f32 %v654, 0.0
        %v782 = vmax.f32 %v656, 0.0
        %v783 = vmax.f32 %v658, 0.0
        %v784 = vmax.f32 %v662, 0.0
        %v785 = vmax.f32 %v664, 0.0
        %v786 = vmax.f32 %v666, 0.0
        %v787 = vmax.f32 %v668, 0.0
        %v788 = vmax.f32 %v672, 0.0
        %v789 = vmax.f32 %v674, 0.0
        %v790 = vmax.f32 %v676, 0.0
        %v791 = vmax.f32 %v678, 0.0
        %v792 = vmax.f32 %v682, 0.0
        %v793 = vmax.f32 %v684, 0.0
        %v794 = vmax.f32 %v686, 0.0
        %v795 = vmax.f32 %v688, 0.0
        %v796 = vmax.f32 %v692, 0.0
        %v797 = vmax.f32 %v694, 0.0
        %v798 = vmax.f32 %v696, 0.0
        %v799 = vmax.f32 %v698, 0.0
        %v800 = vmax.f32 %v702, 0.0
        %v801 = vmax.f32 %v704, 0.0
        %v802 = vmax.f32 %v706, 0.0
        %v803 = vmax.f32 %v708, 0.0
        %v804 = vmax.f32 %v712, 0.0
        %v805 = vmax.f32 %v714, 0.0
        %v806 = vmax.f32 %v716, 0.0
        %v807 = vmax.f32 %v718, 0.0
        %v808 = vmax.f32 %v722, 0.0
        %v809 = vmax.f32 %v724, 0.0
        %v810 = vmax.f32 %v726, 0.0
        %v811 = vmax.f32 %v728, 0.0
        %v812 = vmax.f32 %v732, 0.0
        %v813 = vmax.f32 %v734, 0.0
        %v814 = vmax.f32 %v736, 0.0
        %v815 = vmax.f32 %v738, 0.0
        %v816 = vmax.f32 %v742, 0.0
        %v817 = vmax.f32 %v744, 0.0
        %v818 = vmax.f32 %v746, 0.0
        %v819 = vmax.f32 %v748, 0.0
        %v820 = vmax.f32 %v752, 0.0
        %v821 = vmax.f32 %v754, 0.0
        %v822 = vmax.f32 %v756, 0.0
        %v823 = vmax.f32 %v758, 0.0
        %v824 = vpack.c.bf16 %v762, %v760
        %v825 = vpack.c.bf16 %v763, %v761
        %v826 = vpack.c.bf16 %v766, %v764
        %v827 = vpack.c.bf16 %v767, %v765
        %v828 = vpack.c.bf16 %v770, %v768
        %v829 = vpack.c.bf16 %v771, %v769
        %v830 = vpack.c.bf16 %v774, %v772
        %v831 = vpack.c.bf16 %v775, %v773
        %v832 = vpack.c.bf16 %v778, %v776
        %v833 = vpack.c.bf16 %v779, %v777
        %v834 = vpack.c.bf16 %v782, %v780
        %v835 = vpack.c.bf16 %v783, %v781
        %v836 = vpack.c.bf16 %v786, %v784
        %v837 = vpack.c.bf16 %v787, %v785
        %v838 = vpack.c.bf16 %v790, %v788
        %v839 = vpack.c.bf16 %v791, %v789
        %v840 = vpack.c.bf16 %v794, %v792
        %v841 = vpack.c.bf16 %v795, %v793
        %v842 = vpack.c.bf16 %v798, %v796
        %v843 = vpack.c.bf16 %v799, %v797
        %v844 = vpack.c.bf16 %v802, %v800
        %v845 = vpack.c.bf16 %v803, %v801
        %v846 = vpack.c.bf16 %v806, %v804
        %v847 = vpack.c.bf16 %v807, %v805
        %v848 = vpack.c.bf16 %v810, %v808
        %v849 = vpack.c.bf16 %v811, %v809
        %v850 = vpack.c.bf16 %v814, %v812
        %v851 = vpack.c.bf16 %v815, %v813
        %v852 = vpack.c.bf16 %v818, %v816
        %v853 = vpack.c.bf16 %v819, %v817
        %v854 = vpack.c.bf16 %v822, %v820
        %v855 = vpack.c.bf16 %v823, %v821
        %v856 = vld [vmem:[#allocation7] sm:$0xff]
        %v857 = vld [vmem:[#allocation7 + $0x8] sm:$0xff]
        %v858 = vld [vmem:[#allocation7 + $0x10] sm:$0xff]
        %v859 = vld [vmem:[#allocation7 + $0x18] sm:$0xff]
        %v860 = vld [vmem:[#allocation7 + $0x20] sm:$0xff]
        %v861 = vld [vmem:[#allocation7 + $0x28] sm:$0xff]
        %v862 = vld [vmem:[#allocation7 + $0x30] sm:$0xff]
        %v863 = vld [vmem:[#allocation7 + $0x38] sm:$0xff]
        %v864 = vld [vmem:[#allocation7 + $0x40] sm:$0xff]
        %v865 = vld [vmem:[#allocation7 + $0x48] sm:$0xff]
        %v866 = vld [vmem:[#allocation7 + $0x50] sm:$0xff]
        %v867 = vld [vmem:[#allocation7 + $0x58] sm:$0xff]
        %v868 = vld [vmem:[#allocation7 + $0x60] sm:$0xff]
        %v869 = vld [vmem:[#allocation7 + $0x68] sm:$0xff]
        %v870 = vld [vmem:[#allocation7 + $0x70] sm:$0xff]
        %v871 = vld [vmem:[#allocation7 + $0x78] sm:$0xff]
        %v872 = vld [vmem:[#allocation7 + $0x80] sm:$0xff]
        %v873 = vld [vmem:[#allocation7 + $0x88] sm:$0xff]
        %v874 = vld [vmem:[#allocation7 + $0x90] sm:$0xff]
        %v875 = vld [vmem:[#allocation7 + $0x98] sm:$0xff]
        %v876 = vld [vmem:[#allocation7 + $0xa0] sm:$0xff]
        %v877 = vld [vmem:[#allocation7 + $0xa8] sm:$0xff]
        %v878 = vld [vmem:[#allocation7 + $0xb0] sm:$0xff]
        %v879 = vld [vmem:[#allocation7 + $0xb8] sm:$0xff]
        %v880 = vld [vmem:[#allocation7 + $0xc0] sm:$0xff]
        %v881 = vld [vmem:[#allocation7 + $0xc8] sm:$0xff]
        %v882 = vld [vmem:[#allocation7 + $0xd0] sm:$0xff]
        %v883 = vld [vmem:[#allocation7 + $0xd8] sm:$0xff]
        %v884 = vld [vmem:[#allocation7 + $0xe0] sm:$0xff]
        %v885 = vld [vmem:[#allocation7 + $0xe8] sm:$0xff]
        %v886 = vld [vmem:[#allocation7 + $0xf0] sm:$0xff]
        %v887 = vld [vmem:[#allocation7 + $0xf8] sm:$0xff]
        %s888 = scalar_lea.vmem %s5, 1
        %v889 = vld [vmem:[%s888] ss:$4 sm:$0x3]
        %v891 = vlaneseq
        %v892 = vshrl.u32 %v891, 7
        %v893 = vsub.s32 0, %v892
        %v894 = vrot.slane %v889, %v893
        %v895 = vlaneseq
        %v896 = vshrl.u32 %v895, 7
        %v897 = vsub.s32 1, %v896
        %v898 = vrot.slane %v889, %v897
        %v933 = vunpack.c.l.b16 %v856
        %v934 = vunpack.c.h.b16 %v856
        %v935 = vunpack.c.l.b16 %v857
        %v936 = vunpack.c.h.b16 %v857
        %v937 = vunpack.c.l.b16 %v858
        %v938 = vunpack.c.h.b16 %v858
        %v939 = vunpack.c.l.b16 %v859
        %v940 = vunpack.c.h.b16 %v859
        %v941 = vunpack.c.l.b16 %v860
        %v942 = vunpack.c.h.b16 %v860
        %v943 = vunpack.c.l.b16 %v861
        %v944 = vunpack.c.h.b16 %v861
        %v945 = vunpack.c.l.b16 %v862
        %v946 = vunpack.c.h.b16 %v862
        %v947 = vunpack.c.l.b16 %v863
        %v948 = vunpack.c.h.b16 %v863
        %v949 = vunpack.c.l.b16 %v864
        %v950 = vunpack.c.h.b16 %v864
        %v951 = vunpack.c.l.b16 %v865
        %v952 = vunpack.c.h.b16 %v865
        %v953 = vunpack.c.l.b16 %v866
        %v954 = vunpack.c.h.b16 %v866
        %v955 = vunpack.c.l.b16 %v867
        %v956 = vunpack.c.h.b16 %v867
        %v957 = vunpack.c.l.b16 %v868
        %v958 = vunpack.c.h.b16 %v868
        %v959 = vunpack.c.l.b16 %v869
        %v960 = vunpack.c.h.b16 %v869
        %v961 = vunpack.c.l.b16 %v870
        %v962 = vunpack.c.h.b16 %v870
        %v963 = vunpack.c.l.b16 %v871
        %v964 = vunpack.c.h.b16 %v871
        %v965 = vunpack.c.l.b16 %v872
        %v966 = vunpack.c.h.b16 %v872
        %v967 = vunpack.c.l.b16 %v873
        %v968 = vunpack.c.h.b16 %v873
        %v969 = vunpack.c.l.b16 %v874
        %v970 = vunpack.c.h.b16 %v874
        %v971 = vunpack.c.l.b16 %v875
        %v972 = vunpack.c.h.b16 %v875
        %v973 = vunpack.c.l.b16 %v876
        %v974 = vunpack.c.h.b16 %v876
        %v975 = vunpack.c.l.b16 %v877
        %v976 = vunpack.c.h.b16 %v877
        %v977 = vunpack.c.l.b16 %v878
        %v978 = vunpack.c.h.b16 %v878
        %v979 = vunpack.c.l.b16 %v879
        %v980 = vunpack.c.h.b16 %v879
        %v981 = vunpack.c.l.b16 %v880
        %v982 = vunpack.c.h.b16 %v880
        %v983 = vunpack.c.l.b16 %v881
        %v984 = vunpack.c.h.b16 %v881
        %v985 = vunpack.c.l.b16 %v882
        %v986 = vunpack.c.h.b16 %v882
        %v987 = vunpack.c.l.b16 %v883
        %v988 = vunpack.c.h.b16 %v883
        %v989 = vunpack.c.l.b16 %v884
        %v990 = vunpack.c.h.b16 %v884
        %v991 = vunpack.c.l.b16 %v885
        %v992 = vunpack.c.h.b16 %v885
        %v993 = vunpack.c.l.b16 %v886
        %v994 = vunpack.c.h.b16 %v886
        %v995 = vunpack.c.l.b16 %v887
        %v996 = vunpack.c.h.b16 %v887
        %v997 = vpack.c.b16 %v935, %v933
        %v998 = vpack.c.b16 %v936, %v934
        %v999 = vpack.c.b16 %v939, %v937
        %v1000 = vpack.c.b16 %v940, %v938
        %v1001 = vpack.c.b16 %v943, %v941
        %v1002 = vpack.c.b16 %v944, %v942
        %v1003 = vpack.c.b16 %v947, %v945
        %v1004 = vpack.c.b16 %v948, %v946
        %v1005 = vpack.c.b16 %v951, %v949
        %v1006 = vpack.c.b16 %v952, %v950
        %v1007 = vpack.c.b16 %v955, %v953
        %v1008 = vpack.c.b16 %v956, %v954
        %v1009 = vpack.c.b16 %v959, %v957
        %v1010 = vpack.c.b16 %v960, %v958
        %v1011 = vpack.c.b16 %v963, %v961
        %v1012 = vpack.c.b16 %v964, %v962
        %v1013 = vpack.c.b16 %v967, %v965
        %v1014 = vpack.c.b16 %v968, %v966
        %v1015 = vpack.c.b16 %v971, %v969
        %v1016 = vpack.c.b16 %v972, %v970
        %v1017 = vpack.c.b16 %v975, %v973
        %v1018 = vpack.c.b16 %v976, %v974
        %v1019 = vpack.c.b16 %v979, %v977
        %v1020 = vpack.c.b16 %v980, %v978
        %v1021 = vpack.c.b16 %v983, %v981
        %v1022 = vpack.c.b16 %v984, %v982
        %v1023 = vpack.c.b16 %v987, %v985
        %v1024 = vpack.c.b16 %v988, %v986
        %v1025 = vpack.c.b16 %v991, %v989
        %v1026 = vpack.c.b16 %v992, %v990
        %v1027 = vpack.c.b16 %v995, %v993
        %v1028 = vpack.c.b16 %v996, %v994
        %1061 = vmatprep.subr.bf16.mxu0 %v998
        %1062 = vmatpush1.bf16.msra.mxu0 %v997
        %1063 = vmatprep.subr.bf16.mxu0 %v1000
        %1064 = vmatpush1.bf16.msra.mxu0 %v999
        %1065 = vmatprep.subr.bf16.mxu0 %v1002
        %1066 = vmatpush1.bf16.msra.mxu0 %v1001
        %1067 = vmatprep.subr.bf16.mxu0 %v1004
        %1068 = vmatpush1.bf16.msra.mxu0 %v1003
        %1069 = vmatprep.subr.bf16.mxu0 %v1006
        %1070 = vmatpush1.bf16.msra.mxu0 %v1005
        %1071 = vmatprep.subr.bf16.mxu0 %v1008
        %1072 = vmatpush1.bf16.msra.mxu0 %v1007
        %1073 = vmatprep.subr.bf16.mxu0 %v1010
        %1074 = vmatpush1.bf16.msra.mxu0 %v1009
        %1075 = vmatprep.subr.bf16.mxu0 %v1012
        %1076 = vmatpush1.bf16.msra.mxu0 %v1011
        %1077 = vmatprep.subr.bf16.mxu0 %v1014
        %1078 = vmatpush1.bf16.msra.mxu0 %v1013
        %1079 = vmatprep.subr.bf16.mxu0 %v1016
        %1080 = vmatpush1.bf16.msra.mxu0 %v1015
        %1081 = vmatprep.subr.bf16.mxu0 %v1018
        %1082 = vmatpush1.bf16.msra.mxu0 %v1017
        %1083 = vmatprep.subr.bf16.mxu0 %v1020
        %1084 = vmatpush1.bf16.msra.mxu0 %v1019
        %1085 = vmatprep.subr.bf16.mxu0 %v1022
        %1086 = vmatpush1.bf16.msra.mxu0 %v1021
        %1087 = vmatprep.subr.bf16.mxu0 %v1024
        %1088 = vmatpush1.bf16.msra.mxu0 %v1023
        %1089 = vmatprep.subr.bf16.mxu0 %v1026
        %1090 = vmatpush1.bf16.msra.mxu0 %v1025
        %1091 = vmatprep.subr.bf16.mxu0 %v1028
        %1092 = vmatpush1.bf16.msra.mxu0 %v1027
        %1093 = vmatprep.mubr.bf16.mxu0 %v825
        %1094 = vmatmul.mubr.bf16.gmra.mrb[0].mxu0 %v824
        %v1095 = vpop.f32.mrb[0].mxu0
        %v1096 = vadd.f32 %v894, %v1095
        %v1097 = vpop.f32.mrb[0].mxu0
        %v1098 = vadd.f32 %v898, %v1097
        %v1099 = vpop.f32.mrb[0].mxu0
        %v1100 = vadd.f32 %v894, %v1099
        %v1101 = vpop.f32.mrb[0].mxu0
        %v1102 = vadd.f32 %v898, %v1101
        %1103 = vmatprep.mubr.bf16.mxu0 %v827
        %1104 = vmatmul.mubr.bf16.gmra.mrb[0].mxu0 %v826
        %v1105 = vpop.f32.mrb[0].mxu0
        %v1106 = vadd.f32 %v894, %v1105
        %v1107 = vpop.f32.mrb[0].mxu0
        %v1108 = vadd.f32 %v898, %v1107
        %v1109 = vpop.f32.mrb[0].mxu0
        %v1110 = vadd.f32 %v894, %v1109
        %v1111 = vpop.f32.mrb[0].mxu0
        %v1112 = vadd.f32 %v898, %v1111
        %1113 = vmatprep.mubr.bf16.mxu0 %v829
        %1114 = vmatmul.mubr.bf16.gmra.mrb[0].mxu0 %v828
        %v1115 = vpop.f32.mrb[0].mxu0
        %v1116 = vadd.f32 %v894, %v1115
        %v1117 = vpop.f32.mrb[0].mxu0
        %v1118 = vadd.f32 %v898, %v1117
        %v1119 = vpop.f32.mrb[0].mxu0
        %v1120 = vadd.f32 %v894, %v1119
        %v1121 = vpop.f32.mrb[0].mxu0
        %v1122 = vadd.f32 %v898, %v1121
        %1123 = vmatprep.mubr.bf16.mxu0 %v831
        %1124 = vmatmul.mubr.bf16.gmra.mrb[0].mxu0 %v830
        %v1125 = vpop.f32.mrb[0].mxu0
        %v1126 = vadd.f32 %v894, %v1125
        %v1127 = vpop.f32.mrb[0].mxu0
        %v1128 = vadd.f32 %v898, %v1127
        %v1129 = vpop.f32.mrb[0].mxu0
        %v1130 = vadd.f32 %v894, %v1129
        %v1131 = vpop.f32.mrb[0].mxu0
        %v1132 = vadd.f32 %v898, %v1131
        %1133 = vmatprep.mubr.bf16.mxu0 %v833
        %1134 = vmatmul.mubr.bf16.gmra.mrb[0].mxu0 %v832
        %v1135 = vpop.f32.mrb[0].mxu0
        %v1136 = vadd.f32 %v894, %v1135
        %v1137 = vpop.f32.mrb[0].mxu0
        %v1138 = vadd.f32 %v898, %v1137
        %v1139 = vpop.f32.mrb[0].mxu0
        %v1140 = vadd.f32 %v894, %v1139
        %v1141 = vpop.f32.mrb[0].mxu0
        %v1142 = vadd.f32 %v898, %v1141
        %1143 = vmatprep.mubr.bf16.mxu0 %v835
        %1144 = vmatmul.mubr.bf16.gmra.mrb[0].mxu0 %v834
        %v1145 = vpop.f32.mrb[0].mxu0
        %v1146 = vadd.f32 %v894, %v1145
        %v1147 = vpop.f32.mrb[0].mxu0
        %v1148 = vadd.f32 %v898, %v1147
        %v1149 = vpop.f32.mrb[0].mxu0
        %v1150 = vadd.f32 %v894, %v1149
        %v1151 = vpop.f32.mrb[0].mxu0
        %v1152 = vadd.f32 %v898, %v1151
        %1153 = vmatprep.mubr.bf16.mxu0 %v837
        %1154 = vmatmul.mubr.bf16.gmra.mrb[0].mxu0 %v836
        %v1155 = vpop.f32.mrb[0].mxu0
        %v1156 = vadd.f32 %v894, %v1155
        %v1157 = vpop.f32.mrb[0].mxu0
        %v1158 = vadd.f32 %v898, %v1157
        %v1159 = vpop.f32.mrb[0].mxu0
        %v1160 = vadd.f32 %v894, %v1159
        %v1161 = vpop.f32.mrb[0].mxu0
        %v1162 = vadd.f32 %v898, %v1161
        %1163 = vmatprep.mubr.bf16.mxu0 %v839
        %1164 = vmatmul.mubr.bf16.gmra.mrb[0].mxu0 %v838
        %v1165 = vpop.f32.mrb[0].mxu0
        %v1166 = vadd.f32 %v894, %v1165
        %v1167 = vpop.f32.mrb[0].mxu0
        %v1168 = vadd.f32 %v898, %v1167
        %v1169 = vpop.f32.mrb[0].mxu0
        %v1170 = vadd.f32 %v894, %v1169
        %v1171 = vpop.f32.mrb[0].mxu0
        %v1172 = vadd.f32 %v898, %v1171
        %1173 = vmatprep.mubr.bf16.mxu0 %v841
        %1174 = vmatmul.mubr.bf16.gmra.mrb[0].mxu0 %v840
        %v1175 = vpop.f32.mrb[0].mxu0
        %v1176 = vadd.f32 %v894, %v1175
        %v1177 = vpop.f32.mrb[0].mxu0
        %v1178 = vadd.f32 %v898, %v1177
        %v1179 = vpop.f32.mrb[0].mxu0
        %v1180 = vadd.f32 %v894, %v1179
        %v1181 = vpop.f32.mrb[0].mxu0
        %v1182 = vadd.f32 %v898, %v1181
        %1183 = vmatprep.mubr.bf16.mxu0 %v843
        %1184 = vmatmul.mubr.bf16.gmra.mrb[0].mxu0 %v842
        %v1185 = vpop.f32.mrb[0].mxu0
        %v1186 = vadd.f32 %v894, %v1185
        %v1187 = vpop.f32.mrb[0].mxu0
        %v1188 = vadd.f32 %v898, %v1187
        %v1189 = vpop.f32.mrb[0].mxu0
        %v1190 = vadd.f32 %v894, %v1189
        %v1191 = vpop.f32.mrb[0].mxu0
        %v1192 = vadd.f32 %v898, %v1191
        %1193 = vmatprep.mubr.bf16.mxu0 %v845
        %1194 = vmatmul.mubr.bf16.gmra.mrb[0].mxu0 %v844
        %v1195 = vpop.f32.mrb[0].mxu0
        %v1196 = vadd.f32 %v894, %v1195
        %v1197 = vpop.f32.mrb[0].mxu0
        %v1198 = vadd.f32 %v898, %v1197
        %v1199 = vpop.f32.mrb[0].mxu0
        %v1200 = vadd.f32 %v894, %v1199
        %v1201 = vpop.f32.mrb[0].mxu0
        %v1202 = vadd.f32 %v898, %v1201
        %1203 = vmatprep.mubr.bf16.mxu0 %v847
        %1204 = vmatmul.mubr.bf16.gmra.mrb[0].mxu0 %v846
        %v1205 = vpop.f32.mrb[0].mxu0
        %v1206 = vadd.f32 %v894, %v1205
        %v1207 = vpop.f32.mrb[0].mxu0
        %v1208 = vadd.f32 %v898, %v1207
        %v1209 = vpop.f32.mrb[0].mxu0
        %v1210 = vadd.f32 %v894, %v1209
        %v1211 = vpop.f32.mrb[0].mxu0
        %v1212 = vadd.f32 %v898, %v1211
        %1213 = vmatprep.mubr.bf16.mxu0 %v849
        %1214 = vmatmul.mubr.bf16.gmra.mrb[0].mxu0 %v848
        %v1215 = vpop.f32.mrb[0].mxu0
        %v1216 = vadd.f32 %v894, %v1215
        %v1217 = vpop.f32.mrb[0].mxu0
        %v1218 = vadd.f32 %v898, %v1217
        %v1219 = vpop.f32.mrb[0].mxu0
        %v1220 = vadd.f32 %v894, %v1219
        %v1221 = vpop.f32.mrb[0].mxu0
        %v1222 = vadd.f32 %v898, %v1221
        %1223 = vmatprep.mubr.bf16.mxu0 %v851
        %1224 = vmatmul.mubr.bf16.gmra.mrb[0].mxu0 %v850
        %v1225 = vpop.f32.mrb[0].mxu0
        %v1226 = vadd.f32 %v894, %v1225
        %v1227 = vpop.f32.mrb[0].mxu0
        %v1228 = vadd.f32 %v898, %v1227
        %v1229 = vpop.f32.mrb[0].mxu0
        %v1230 = vadd.f32 %v894, %v1229
        %v1231 = vpop.f32.mrb[0].mxu0
        %v1232 = vadd.f32 %v898, %v1231
        %1233 = vmatprep.mubr.bf16.mxu0 %v853
        %1234 = vmatmul.mubr.bf16.gmra.mrb[0].mxu0 %v852
        %v1235 = vpop.f32.mrb[0].mxu0
        %v1236 = vadd.f32 %v894, %v1235
        %v1237 = vpop.f32.mrb[0].mxu0
        %v1238 = vadd.f32 %v898, %v1237
        %v1239 = vpop.f32.mrb[0].mxu0
        %v1240 = vadd.f32 %v894, %v1239
        %v1241 = vpop.f32.mrb[0].mxu0
        %v1242 = vadd.f32 %v898, %v1241
        %1243 = vmatprep.mubr.bf16.mxu0 %v855
        %1244 = vmatmul.mubr.bf16.gmra.mrb[0].mxu0 %v854
        %v1245 = vpop.f32.mrb[0].mxu0
        %v1246 = vadd.f32 %v894, %v1245
        %v1247 = vpop.f32.mrb[0].mxu0
        %v1248 = vadd.f32 %v898, %v1247
        %v1249 = vpop.f32.mrb[0].mxu0
        %v1250 = vadd.f32 %v894, %v1249
        %v1251 = vpop.f32.mrb[0].mxu0
        %v1252 = vadd.f32 %v898, %v1251
        %1253 = vdwg.mxu0
        %v1254 = vmax.f32 %v1096, 0.0
        %v1255 = vmax.f32 %v1098, 0.0
        %v1256 = vmax.f32 %v1100, 0.0
        %v1257 = vmax.f32 %v1102, 0.0
        %v1258 = vmax.f32 %v1106, 0.0
        %v1259 = vmax.f32 %v1108, 0.0
        %v1260 = vmax.f32 %v1110, 0.0
        %v1261 = vmax.f32 %v1112, 0.0
        %v1262 = vmax.f32 %v1116, 0.0
        %v1263 = vmax.f32 %v1118, 0.0
        %v1264 = vmax.f32 %v1120, 0.0
        %v1265 = vmax.f32 %v1122, 0.0
        %v1266 = vmax.f32 %v1126, 0.0
        %v1267 = vmax.f32 %v1128, 0.0
        %v1268 = vmax.f32 %v1130, 0.0
        %v1269 = vmax.f32 %v1132, 0.0
        %v1270 = vmax.f32 %v1136, 0.0
        %v1271 = vmax.f32 %v1138, 0.0
        %v1272 = vmax.f32 %v1140, 0.0
        %v1273 = vmax.f32 %v1142, 0.0
        %v1274 = vmax.f32 %v1146, 0.0
        %v1275 = vmax.f32 %v1148, 0.0
        %v1276 = vmax.f32 %v1150, 0.0
        %v1277 = vmax.f32 %v1152, 0.0
        %v1278 = vmax.f32 %v1156, 0.0
        %v1279 = vmax.f32 %v1158, 0.0
        %v1280 = vmax.f32 %v1160, 0.0
        %v1281 = vmax.f32 %v1162, 0.0
        %v1282 = vmax.f32 %v1166, 0.0
        %v1283 = vmax.f32 %v1168, 0.0
        %v1284 = vmax.f32 %v1170, 0.0
        %v1285 = vmax.f32 %v1172, 0.0
        %v1286 = vmax.f32 %v1176, 0.0
        %v1287 = vmax.f32 %v1178, 0.0
        %v1288 = vmax.f32 %v1180, 0.0
        %v1289 = vmax.f32 %v1182, 0.0
        %v1290 = vmax.f32 %v1186, 0.0
        %v1291 = vmax.f32 %v1188, 0.0
        %v1292 = vmax.f32 %v1190, 0.0
        %v1293 = vmax.f32 %v1192, 0.0
        %v1294 = vmax.f32 %v1196, 0.0
        %v1295 = vmax.f32 %v1198, 0.0
        %v1296 = vmax.f32 %v1200, 0.0
        %v1297 = vmax.f32 %v1202, 0.0
        %v1298 = vmax.f32 %v1206, 0.0
        %v1299 = vmax.f32 %v1208, 0.0
        %v1300 = vmax.f32 %v1210, 0.0
        %v1301 = vmax.f32 %v1212, 0.0
        %v1302 = vmax.f32 %v1216, 0.0
        %v1303 = vmax.f32 %v1218, 0.0
        %v1304 = vmax.f32 %v1220, 0.0
        %v1305 = vmax.f32 %v1222, 0.0
        %v1306 = vmax.f32 %v1226, 0.0
        %v1307 = vmax.f32 %v1228, 0.0
        %v1308 = vmax.f32 %v1230, 0.0
        %v1309 = vmax.f32 %v1232, 0.0
        %v1310 = vmax.f32 %v1236, 0.0
        %v1311 = vmax.f32 %v1238, 0.0
        %v1312 = vmax.f32 %v1240, 0.0
        %v1313 = vmax.f32 %v1242, 0.0
        %v1314 = vmax.f32 %v1246, 0.0
        %v1315 = vmax.f32 %v1248, 0.0
        %v1316 = vmax.f32 %v1250, 0.0
        %v1317 = vmax.f32 %v1252, 0.0
        %v1318 = vpack.c.bf16 %v1256, %v1254
        %v1319 = vpack.c.bf16 %v1257, %v1255
        %v1320 = vpack.c.bf16 %v1260, %v1258
        %v1321 = vpack.c.bf16 %v1261, %v1259
        %v1322 = vpack.c.bf16 %v1264, %v1262
        %v1323 = vpack.c.bf16 %v1265, %v1263
        %v1324 = vpack.c.bf16 %v1268, %v1266
        %v1325 = vpack.c.bf16 %v1269, %v1267
        %v1326 = vpack.c.bf16 %v1272, %v1270
        %v1327 = vpack.c.bf16 %v1273, %v1271
        %v1328 = vpack.c.bf16 %v1276, %v1274
        %v1329 = vpack.c.bf16 %v1277, %v1275
        %v1330 = vpack.c.bf16 %v1280, %v1278
        %v1331 = vpack.c.bf16 %v1281, %v1279
        %v1332 = vpack.c.bf16 %v1284, %v1282
        %v1333 = vpack.c.bf16 %v1285, %v1283
        %v1334 = vpack.c.bf16 %v1288, %v1286
        %v1335 = vpack.c.bf16 %v1289, %v1287
        %v1336 = vpack.c.bf16 %v1292, %v1290
        %v1337 = vpack.c.bf16 %v1293, %v1291
        %v1338 = vpack.c.bf16 %v1296, %v1294
        %v1339 = vpack.c.bf16 %v1297, %v1295
        %v1340 = vpack.c.bf16 %v1300, %v1298
        %v1341 = vpack.c.bf16 %v1301, %v1299
        %v1342 = vpack.c.bf16 %v1304, %v1302
        %v1343 = vpack.c.bf16 %v1305, %v1303
        %v1344 = vpack.c.bf16 %v1308, %v1306
        %v1345 = vpack.c.bf16 %v1309, %v1307
        %v1346 = vpack.c.bf16 %v1312, %v1310
        %v1347 = vpack.c.bf16 %v1313, %v1311
        %v1348 = vpack.c.bf16 %v1316, %v1314
        %v1349 = vpack.c.bf16 %v1317, %v1315
        %v1350 = vld [vmem:[#allocation8] sm:$0xff]
        %v1351 = vld [vmem:[#allocation8 + $0x8] sm:$0xff]
        %v1352 = vld [vmem:[#allocation8 + $0x10] sm:$0xff]
        %v1353 = vld [vmem:[#allocation8 + $0x18] sm:$0xff]
        %v1354 = vld [vmem:[#allocation8 + $0x20] sm:$0xff]
        %v1355 = vld [vmem:[#allocation8 + $0x28] sm:$0xff]
        %v1356 = vld [vmem:[#allocation8 + $0x30] sm:$0xff]
        %v1357 = vld [vmem:[#allocation8 + $0x38] sm:$0xff]
        %v1358 = vld [vmem:[#allocation8 + $0x40] sm:$0xff]
        %v1359 = vld [vmem:[#allocation8 + $0x48] sm:$0xff]
        %v1360 = vld [vmem:[#allocation8 + $0x50] sm:$0xff]
        %v1361 = vld [vmem:[#allocation8 + $0x58] sm:$0xff]
        %v1362 = vld [vmem:[#allocation8 + $0x60] sm:$0xff]
        %v1363 = vld [vmem:[#allocation8 + $0x68] sm:$0xff]
        %v1364 = vld [vmem:[#allocation8 + $0x70] sm:$0xff]
        %v1365 = vld [vmem:[#allocation8 + $0x78] sm:$0xff]
        %v1366 = vld [vmem:[#allocation8 + $0x80] sm:$0xff]
        %v1367 = vld [vmem:[#allocation8 + $0x88] sm:$0xff]
        %v1368 = vld [vmem:[#allocation8 + $0x90] sm:$0xff]
        %v1369 = vld [vmem:[#allocation8 + $0x98] sm:$0xff]
        %v1370 = vld [vmem:[#allocation8 + $0xa0] sm:$0xff]
        %v1371 = vld [vmem:[#allocation8 + $0xa8] sm:$0xff]
        %v1372 = vld [vmem:[#allocation8 + $0xb0] sm:$0xff]
        %v1373 = vld [vmem:[#allocation8 + $0xb8] sm:$0xff]
        %v1374 = vld [vmem:[#allocation8 + $0xc0] sm:$0xff]
        %v1375 = vld [vmem:[#allocation8 + $0xc8] sm:$0xff]
        %v1376 = vld [vmem:[#allocation8 + $0xd0] sm:$0xff]
        %v1377 = vld [vmem:[#allocation8 + $0xd8] sm:$0xff]
        %v1378 = vld [vmem:[#allocation8 + $0xe0] sm:$0xff]
        %v1379 = vld [vmem:[#allocation8 + $0xe8] sm:$0xff]
        %v1380 = vld [vmem:[#allocation8 + $0xf0] sm:$0xff]
        %v1381 = vld [vmem:[#allocation8 + $0xf8] sm:$0xff]
        %s1382 = scalar_lea.vmem %s5, 2
        %v1383 = vld [vmem:[%s1382] ss:$4 sm:$0x3]
        %v1385 = vlaneseq
        %v1386 = vshrl.u32 %v1385, 7
        %v1387 = vsub.s32 0, %v1386
        %v1388 = vrot.slane %v1383, %v1387
        %v1389 = vlaneseq
        %v1390 = vshrl.u32 %v1389, 7
        %v1391 = vsub.s32 1, %v1390
        %v1392 = vrot.slane %v1383, %v1391
        %v1427 = vunpack.c.l.b16 %v1350
        %v1428 = vunpack.c.h.b16 %v1350
        %v1429 = vunpack.c.l.b16 %v1351
        %v1430 = vunpack.c.h.b16 %v1351
        %v1431 = vunpack.c.l.b16 %v1352
        %v1432 = vunpack.c.h.b16 %v1352
        %v1433 = vunpack.c.l.b16 %v1353
        %v1434 = vunpack.c.h.b16 %v1353
        %v1435 = vunpack.c.l.b16 %v1354
        %v1436 = vunpack.c.h.b16 %v1354
        %v1437 = vunpack.c.l.b16 %v1355
        %v1438 = vunpack.c.h.b16 %v1355
        %v1439 = vunpack.c.l.b16 %v1356
        %v1440 = vunpack.c.h.b16 %v1356
        %v1441 = vunpack.c.l.b16 %v1357
        %v1442 = vunpack.c.h.b16 %v1357
        %v1443 = vunpack.c.l.b16 %v1358
        %v1444 = vunpack.c.h.b16 %v1358
        %v1445 = vunpack.c.l.b16 %v1359
        %v1446 = vunpack.c.h.b16 %v1359
        %v1447 = vunpack.c.l.b16 %v1360
        %v1448 = vunpack.c.h.b16 %v1360
        %v1449 = vunpack.c.l.b16 %v1361
        %v1450 = vunpack.c.h.b16 %v1361
        %v1451 = vunpack.c.l.b16 %v1362
        %v1452 = vunpack.c.h.b16 %v1362
        %v1453 = vunpack.c.l.b16 %v1363
        %v1454 = vunpack.c.h.b16 %v1363
        %v1455 = vunpack.c.l.b16 %v1364
        %v1456 = vunpack.c.h.b16 %v1364
        %v1457 = vunpack.c.l.b16 %v1365
        %v1458 = vunpack.c.h.b16 %v1365
        %v1459 = vunpack.c.l.b16 %v1366
        %v1460 = vunpack.c.h.b16 %v1366
        %v1461 = vunpack.c.l.b16 %v1367
        %v1462 = vunpack.c.h.b16 %v1367
        %v1463 = vunpack.c.l.b16 %v1368
        %v1464 = vunpack.c.h.b16 %v1368
        %v1465 = vunpack.c.l.b16 %v1369
        %v1466 = vunpack.c.h.b16 %v1369
        %v1467 = vunpack.c.l.b16 %v1370
        %v1468 = vunpack.c.h.b16 %v1370
        %v1469 = vunpack.c.l.b16 %v1371
        %v1470 = vunpack.c.h.b16 %v1371
        %v1471 = vunpack.c.l.b16 %v1372
        %v1472 = vunpack.c.h.b16 %v1372
        %v1473 = vunpack.c.l.b16 %v1373
        %v1474 = vunpack.c.h.b16 %v1373
        %v1475 = vunpack.c.l.b16 %v1374
        %v1476 = vunpack.c.h.b16 %v1374
        %v1477 = vunpack.c.l.b16 %v1375
        %v1478 = vunpack.c.h.b16 %v1375
        %v1479 = vunpack.c.l.b16 %v1376
        %v1480 = vunpack.c.h.b16 %v1376
        %v1481 = vunpack.c.l.b16 %v1377
        %v1482 = vunpack.c.h.b16 %v1377
        %v1483 = vunpack.c.l.b16 %v1378
        %v1484 = vunpack.c.h.b16 %v1378
        %v1485 = vunpack.c.l.b16 %v1379
        %v1486 = vunpack.c.h.b16 %v1379
        %v1487 = vunpack.c.l.b16 %v1380
        %v1488 = vunpack.c.h.b16 %v1380
        %v1489 = vunpack.c.l.b16 %v1381
        %v1490 = vunpack.c.h.b16 %v1381
        %v1491 = vpack.c.b16 %v1429, %v1427
        %v1492 = vpack.c.b16 %v1430, %v1428
        %v1493 = vpack.c.b16 %v1433, %v1431
        %v1494 = vpack.c.b16 %v1434, %v1432
        %v1495 = vpack.c.b16 %v1437, %v1435
        %v1496 = vpack.c.b16 %v1438, %v1436
        %v1497 = vpack.c.b16 %v1441, %v1439
        %v1498 = vpack.c.b16 %v1442, %v1440
        %v1499 = vpack.c.b16 %v1445, %v1443
        %v1500 = vpack.c.b16 %v1446, %v1444
        %v1501 = vpack.c.b16 %v1449, %v1447
        %v1502 = vpack.c.b16 %v1450, %v1448
        %v1503 = vpack.c.b16 %v1453, %v1451
        %v1504 = vpack.c.b16 %v1454, %v1452
        %v1505 = vpack.c.b16 %v1457, %v1455
        %v1506 = vpack.c.b16 %v1458, %v1456
        %v1507 = vpack.c.b16 %v1461, %v1459
        %v1508 = vpack.c.b16 %v1462, %v1460
        %v1509 = vpack.c.b16 %v1465, %v1463
        %v1510 = vpack.c.b16 %v1466, %v1464
        %v1511 = vpack.c.b16 %v1469, %v1467
        %v1512 = vpack.c.b16 %v1470, %v1468
        %v1513 = vpack.c.b16 %v1473, %v1471
        %v1514 = vpack.c.b16 %v1474, %v1472
        %v1515 = vpack.c.b16 %v1477, %v1475
        %v1516 = vpack.c.b16 %v1478, %v1476
        %v1517 = vpack.c.b16 %v1481, %v1479
        %v1518 = vpack.c.b16 %v1482, %v1480
        %v1519 = vpack.c.b16 %v1485, %v1483
        %v1520 = vpack.c.b16 %v1486, %v1484
        %v1521 = vpack.c.b16 %v1489, %v1487
        %v1522 = vpack.c.b16 %v1490, %v1488
        %1555 = vmatprep.subr.bf16.mxu0 %v1492
        %1556 = vmatpush1.bf16.msra.mxu0 %v1491
        %1557 = vmatprep.subr.bf16.mxu0 %v1494
        %1558 = vmatpush1.bf16.msra.mxu0 %v1493
        %1559 = vmatprep.subr.bf16.mxu0 %v1496
        %1560 = vmatpush1.bf16.msra.mxu0 %v1495
        %1561 = vmatprep.subr.bf16.mxu0 %v1498
        %1562 = vmatpush1.bf16.msra.mxu0 %v1497
        %1563 = vmatprep.subr.bf16.mxu0 %v1500
        %1564 = vmatpush1.bf16.msra.mxu0 %v1499
        %1565 = vmatprep.subr.bf16.mxu0 %v1502
        %1566 = vmatpush1.bf16.msra.mxu0 %v1501
        %1567 = vmatprep.subr.bf16.mxu0 %v1504
        %1568 = vmatpush1.bf16.msra.mxu0 %v1503
        %1569 = vmatprep.subr.bf16.mxu0 %v1506
        %1570 = vmatpush1.bf16.msra.mxu0 %v1505
        %1571 = vmatprep.subr.bf16.mxu0 %v1508
        %1572 = vmatpush1.bf16.msra.mxu0 %v1507
        %1573 = vmatprep.subr.bf16.mxu0 %v1510
        %1574 = vmatpush1.bf16.msra.mxu0 %v1509
        %1575 = vmatprep.subr.bf16.mxu0 %v1512
        %1576 = vmatpush1.bf16.msra.mxu0 %v1511
        %1577 = vmatprep.subr.bf16.mxu0 %v1514
        %1578 = vmatpush1.bf16.msra.mxu0 %v1513
        %1579 = vmatprep.subr.bf16.mxu0 %v1516
        %1580 = vmatpush1.bf16.msra.mxu0 %v1515
        %1581 = vmatprep.subr.bf16.mxu0 %v1518
        %1582 = vmatpush1.bf16.msra.mxu0 %v1517
        %1583 = vmatprep.subr.bf16.mxu0 %v1520
        %1584 = vmatpush1.bf16.msra.mxu0 %v1519
        %1585 = vmatprep.subr.bf16.mxu0 %v1522
        %1586 = vmatpush1.bf16.msra.mxu0 %v1521
        %1587 = vmatprep.mubr.bf16.mxu0 %v1319
        %1588 = vmatmul.mubr.bf16.gmra.mrb[0].mxu0 %v1318
        %v1589 = vpop.f32.mrb[0].mxu0
        %v1590 = vadd.f32 %v1388, %v1589
        %v1591 = vpop.f32.mrb[0].mxu0
        %v1592 = vadd.f32 %v1392, %v1591
        %v1593 = vpop.f32.mrb[0].mxu0
        %v1594 = vadd.f32 %v1388, %v1593
        %v1595 = vpop.f32.mrb[0].mxu0
        %v1596 = vadd.f32 %v1392, %v1595
        %1597 = vmatprep.mubr.bf16.mxu0 %v1321
        %1598 = vmatmul.mubr.bf16.gmra.mrb[0].mxu0 %v1320
        %v1599 = vpop.f32.mrb[0].mxu0
        %v1600 = vadd.f32 %v1388, %v1599
        %v1601 = vpop.f32.mrb[0].mxu0
        %v1602 = vadd.f32 %v1392, %v1601
        %v1603 = vpop.f32.mrb[0].mxu0
        %v1604 = vadd.f32 %v1388, %v1603
        %v1605 = vpop.f32.mrb[0].mxu0
        %v1606 = vadd.f32 %v1392, %v1605
        %1607 = vmatprep.mubr.bf16.mxu0 %v1323
        %1608 = vmatmul.mubr.bf16.gmra.mrb[0].mxu0 %v1322
        %v1609 = vpop.f32.mrb[0].mxu0
        %v1610 = vadd.f32 %v1388, %v1609
        %v1611 = vpop.f32.mrb[0].mxu0
        %v1612 = vadd.f32 %v1392, %v1611
        %v1613 = vpop.f32.mrb[0].mxu0
        %v1614 = vadd.f32 %v1388, %v1613
        %v1615 = vpop.f32.mrb[0].mxu0
        %v1616 = vadd.f32 %v1392, %v1615
        %1617 = vmatprep.mubr.bf16.mxu0 %v1325
        %1618 = vmatmul.mubr.bf16.gmra.mrb[0].mxu0 %v1324
        %v1619 = vpop.f32.mrb[0].mxu0
        %v1620 = vadd.f32 %v1388, %v1619
        %v1621 = vpop.f32.mrb[0].mxu0
        %v1622 = vadd.f32 %v1392, %v1621
        %v1623 = vpop.f32.mrb[0].mxu0
        %v1624 = vadd.f32 %v1388, %v1623
        %v1625 = vpop.f32.mrb[0].mxu0
        %v1626 = vadd.f32 %v1392, %v1625
        %1627 = vmatprep.mubr.bf16.mxu0 %v1327
        %1628 = vmatmul.mubr.bf16.gmra.mrb[0].mxu0 %v1326
        %v1629 = vpop.f32.mrb[0].mxu0
        %v1630 = vadd.f32 %v1388, %v1629
        %v1631 = vpop.f32.mrb[0].mxu0
        %v1632 = vadd.f32 %v1392, %v1631
        %v1633 = vpop.f32.mrb[0].mxu0
        %v1634 = vadd.f32 %v1388, %v1633
        %v1635 = vpop.f32.mrb[0].mxu0
        %v1636 = vadd.f32 %v1392, %v1635
        %1637 = vmatprep.mubr.bf16.mxu0 %v1329
        %1638 = vmatmul.mubr.bf16.gmra.mrb[0].mxu0 %v1328
        %v1639 = vpop.f32.mrb[0].mxu0
        %v1640 = vadd.f32 %v1388, %v1639
        %v1641 = vpop.f32.mrb[0].mxu0
        %v1642 = vadd.f32 %v1392, %v1641
        %v1643 = vpop.f32.mrb[0].mxu0
        %v1644 = vadd.f32 %v1388, %v1643
        %v1645 = vpop.f32.mrb[0].mxu0
        %v1646 = vadd.f32 %v1392, %v1645
        %1647 = vmatprep.mubr.bf16.mxu0 %v1331
        %1648 = vmatmul.mubr.bf16.gmra.mrb[0].mxu0 %v1330
        %v1649 = vpop.f32.mrb[0].mxu0
        %v1650 = vadd.f32 %v1388, %v1649
        %v1651 = vpop.f32.mrb[0].mxu0
        %v1652 = vadd.f32 %v1392, %v1651
        %v1653 = vpop.f32.mrb[0].mxu0
        %v1654 = vadd.f32 %v1388, %v1653
        %v1655 = vpop.f32.mrb[0].mxu0
        %v1656 = vadd.f32 %v1392, %v1655
        %1657 = vmatprep.mubr.bf16.mxu0 %v1333
        %1658 = vmatmul.mubr.bf16.gmra.mrb[0].mxu0 %v1332
        %v1659 = vpop.f32.mrb[0].mxu0
        %v1660 = vadd.f32 %v1388, %v1659
        %v1661 = vpop.f32.mrb[0].mxu0
        %v1662 = vadd.f32 %v1392, %v1661
        %v1663 = vpop.f32.mrb[0].mxu0
        %v1664 = vadd.f32 %v1388, %v1663
        %v1665 = vpop.f32.mrb[0].mxu0
        %v1666 = vadd.f32 %v1392, %v1665
        %1667 = vmatprep.mubr.bf16.mxu0 %v1335
        %1668 = vmatmul.mubr.bf16.gmra.mrb[0].mxu0 %v1334
        %v1669 = vpop.f32.mrb[0].mxu0
        %v1670 = vadd.f32 %v1388, %v1669
        %v1671 = vpop.f32.mrb[0].mxu0
        %v1672 = vadd.f32 %v1392, %v1671
        %v1673 = vpop.f32.mrb[0].mxu0
        %v1674 = vadd.f32 %v1388, %v1673
        %v1675 = vpop.f32.mrb[0].mxu0
        %v1676 = vadd.f32 %v1392, %v1675
        %1677 = vmatprep.mubr.bf16.mxu0 %v1337
        %1678 = vmatmul.mubr.bf16.gmra.mrb[0].mxu0 %v1336
        %v1679 = vpop.f32.mrb[0].mxu0
        %v1680 = vadd.f32 %v1388, %v1679
        %v1681 = vpop.f32.mrb[0].mxu0
        %v1682 = vadd.f32 %v1392, %v1681
        %v1683 = vpop.f32.mrb[0].mxu0
        %v1684 = vadd.f32 %v1388, %v1683
        %v1685 = vpop.f32.mrb[0].mxu0
        %v1686 = vadd.f32 %v1392, %v1685
        %1687 = vmatprep.mubr.bf16.mxu0 %v1339
        %1688 = vmatmul.mubr.bf16.gmra.mrb[0].mxu0 %v1338
        %v1689 = vpop.f32.mrb[0].mxu0
        %v1690 = vadd.f32 %v1388, %v1689
        %v1691 = vpop.f32.mrb[0].mxu0
        %v1692 = vadd.f32 %v1392, %v1691
        %v1693 = vpop.f32.mrb[0].mxu0
        %v1694 = vadd.f32 %v1388, %v1693
        %v1695 = vpop.f32.mrb[0].mxu0
        %v1696 = vadd.f32 %v1392, %v1695
        %1697 = vmatprep.mubr.bf16.mxu0 %v1341
        %1698 = vmatmul.mubr.bf16.gmra.mrb[0].mxu0 %v1340
        %v1699 = vpop.f32.mrb[0].mxu0
        %v1700 = vadd.f32 %v1388, %v1699
        %v1701 = vpop.f32.mrb[0].mxu0
        %v1702 = vadd.f32 %v1392, %v1701
        %v1703 = vpop.f32.mrb[0].mxu0
        %v1704 = vadd.f32 %v1388, %v1703
        %v1705 = vpop.f32.mrb[0].mxu0
        %v1706 = vadd.f32 %v1392, %v1705
        %1707 = vmatprep.mubr.bf16.mxu0 %v1343
        %1708 = vmatmul.mubr.bf16.gmra.mrb[0].mxu0 %v1342
        %v1709 = vpop.f32.mrb[0].mxu0
        %v1710 = vadd.f32 %v1388, %v1709
        %v1711 = vpop.f32.mrb[0].mxu0
        %v1712 = vadd.f32 %v1392, %v1711
        %v1713 = vpop.f32.mrb[0].mxu0
        %v1714 = vadd.f32 %v1388, %v1713
        %v1715 = vpop.f32.mrb[0].mxu0
        %v1716 = vadd.f32 %v1392, %v1715
        %1717 = vmatprep.mubr.bf16.mxu0 %v1345
        %1718 = vmatmul.mubr.bf16.gmra.mrb[0].mxu0 %v1344
        %v1719 = vpop.f32.mrb[0].mxu0
        %v1720 = vadd.f32 %v1388, %v1719
        %v1721 = vpop.f32.mrb[0].mxu0
        %v1722 = vadd.f32 %v1392, %v1721
        %v1723 = vpop.f32.mrb[0].mxu0
        %v1724 = vadd.f32 %v1388, %v1723
        %v1725 = vpop.f32.mrb[0].mxu0
        %v1726 = vadd.f32 %v1392, %v1725
        %1727 = vmatprep.mubr.bf16.mxu0 %v1347
        %1728 = vmatmul.mubr.bf16.gmra.mrb[0].mxu0 %v1346
        %v1729 = vpop.f32.mrb[0].mxu0
        %v1730 = vadd.f32 %v1388, %v1729
        %v1731 = vpop.f32.mrb[0].mxu0
        %v1732 = vadd.f32 %v1392, %v1731
        %v1733 = vpop.f32.mrb[0].mxu0
        %v1734 = vadd.f32 %v1388, %v1733
        %v1735 = vpop.f32.mrb[0].mxu0
        %v1736 = vadd.f32 %v1392, %v1735
        %1737 = vmatprep.mubr.bf16.mxu0 %v1349
        %1738 = vmatmul.mubr.bf16.gmra.mrb[0].mxu0 %v1348
        %v1739 = vpop.f32.mrb[0].mxu0
        %v1740 = vadd.f32 %v1388, %v1739
        %v1741 = vpop.f32.mrb[0].mxu0
        %v1742 = vadd.f32 %v1392, %v1741
        %v1743 = vpop.f32.mrb[0].mxu0
        %v1744 = vadd.f32 %v1388, %v1743
        %v1745 = vpop.f32.mrb[0].mxu0
        %v1746 = vadd.f32 %v1392, %v1745
        %1747 = vdwg.mxu0
        %v1748 = vmax.f32 %v1590, 0.0
        %v1749 = vmax.f32 %v1592, 0.0
        %v1750 = vmax.f32 %v1594, 0.0
        %v1751 = vmax.f32 %v1596, 0.0
        %v1752 = vmax.f32 %v1600, 0.0
        %v1753 = vmax.f32 %v1602, 0.0
        %v1754 = vmax.f32 %v1604, 0.0
        %v1755 = vmax.f32 %v1606, 0.0
        %v1756 = vmax.f32 %v1610, 0.0
        %v1757 = vmax.f32 %v1612, 0.0
        %v1758 = vmax.f32 %v1614, 0.0
        %v1759 = vmax.f32 %v1616, 0.0
        %v1760 = vmax.f32 %v1620, 0.0
        %v1761 = vmax.f32 %v1622, 0.0
        %v1762 = vmax.f32 %v1624, 0.0
        %v1763 = vmax.f32 %v1626, 0.0
        %v1764 = vmax.f32 %v1630, 0.0
        %v1765 = vmax.f32 %v1632, 0.0
        %v1766 = vmax.f32 %v1634, 0.0
        %v1767 = vmax.f32 %v1636, 0.0
        %v1768 = vmax.f32 %v1640, 0.0
        %v1769 = vmax.f32 %v1642, 0.0
        %v1770 = vmax.f32 %v1644, 0.0
        %v1771 = vmax.f32 %v1646, 0.0
        %v1772 = vmax.f32 %v1650, 0.0
        %v1773 = vmax.f32 %v1652, 0.0
        %v1774 = vmax.f32 %v1654, 0.0
        %v1775 = vmax.f32 %v1656, 0.0
        %v1776 = vmax.f32 %v1660, 0.0
        %v1777 = vmax.f32 %v1662, 0.0
        %v1778 = vmax.f32 %v1664, 0.0
        %v1779 = vmax.f32 %v1666, 0.0
        %v1780 = vmax.f32 %v1670, 0.0
        %v1781 = vmax.f32 %v1672, 0.0
        %v1782 = vmax.f32 %v1674, 0.0
        %v1783 = vmax.f32 %v1676, 0.0
        %v1784 = vmax.f32 %v1680, 0.0
        %v1785 = vmax.f32 %v1682, 0.0
        %v1786 = vmax.f32 %v1684, 0.0
        %v1787 = vmax.f32 %v1686, 0.0
        %v1788 = vmax.f32 %v1690, 0.0
        %v1789 = vmax.f32 %v1692, 0.0
        %v1790 = vmax.f32 %v1694, 0.0
        %v1791 = vmax.f32 %v1696, 0.0
        %v1792 = vmax.f32 %v1700, 0.0
        %v1793 = vmax.f32 %v1702, 0.0
        %v1794 = vmax.f32 %v1704, 0.0
        %v1795 = vmax.f32 %v1706, 0.0
        %v1796 = vmax.f32 %v1710, 0.0
        %v1797 = vmax.f32 %v1712, 0.0
        %v1798 = vmax.f32 %v1714, 0.0
        %v1799 = vmax.f32 %v1716, 0.0
        %v1800 = vmax.f32 %v1720, 0.0
        %v1801 = vmax.f32 %v1722, 0.0
        %v1802 = vmax.f32 %v1724, 0.0
        %v1803 = vmax.f32 %v1726, 0.0
        %v1804 = vmax.f32 %v1730, 0.0
        %v1805 = vmax.f32 %v1732, 0.0
        %v1806 = vmax.f32 %v1734, 0.0
        %v1807 = vmax.f32 %v1736, 0.0
        %v1808 = vmax.f32 %v1740, 0.0
        %v1809 = vmax.f32 %v1742, 0.0
        %v1810 = vmax.f32 %v1744, 0.0
        %v1811 = vmax.f32 %v1746, 0.0
        %v1812 = vpack.c.bf16 %v1750, %v1748
        %v1813 = vpack.c.bf16 %v1751, %v1749
        %v1814 = vpack.c.bf16 %v1754, %v1752
        %v1815 = vpack.c.bf16 %v1755, %v1753
        %v1816 = vpack.c.bf16 %v1758, %v1756
        %v1817 = vpack.c.bf16 %v1759, %v1757
        %v1818 = vpack.c.bf16 %v1762, %v1760
        %v1819 = vpack.c.bf16 %v1763, %v1761
        %v1820 = vpack.c.bf16 %v1766, %v1764
        %v1821 = vpack.c.bf16 %v1767, %v1765
        %v1822 = vpack.c.bf16 %v1770, %v1768
        %v1823 = vpack.c.bf16 %v1771, %v1769
        %v1824 = vpack.c.bf16 %v1774, %v1772
        %v1825 = vpack.c.bf16 %v1775, %v1773
        %v1826 = vpack.c.bf16 %v1778, %v1776
        %v1827 = vpack.c.bf16 %v1779, %v1777
        %v1828 = vpack.c.bf16 %v1782, %v1780
        %v1829 = vpack.c.bf16 %v1783, %v1781
        %v1830 = vpack.c.bf16 %v1786, %v1784
        %v1831 = vpack.c.bf16 %v1787, %v1785
        %v1832 = vpack.c.bf16 %v1790, %v1788
        %v1833 = vpack.c.bf16 %v1791, %v1789
        %v1834 = vpack.c.bf16 %v1794, %v1792
        %v1835 = vpack.c.bf16 %v1795, %v1793
        %v1836 = vpack.c.bf16 %v1798, %v1796
        %v1837 = vpack.c.bf16 %v1799, %v1797
        %v1838 = vpack.c.bf16 %v1802, %v1800
        %v1839 = vpack.c.bf16 %v1803, %v1801
        %v1840 = vpack.c.bf16 %v1806, %v1804
        %v1841 = vpack.c.bf16 %v1807, %v1805
        %v1842 = vpack.c.bf16 %v1810, %v1808
        %v1843 = vpack.c.bf16 %v1811, %v1809
        %v1844 = vld [vmem:[#allocation10] sm:$0xf]
        %v1845 = vld [vmem:[#allocation10 + $0x4] sm:$0xf]
        %v1846 = vld [vmem:[#allocation10 + $0x8] sm:$0xf]
        %v1847 = vld [vmem:[#allocation10 + $0xc] sm:$0xf]
        %v1848 = vld [vmem:[#allocation10 + $0x10] sm:$0xf]
        %v1849 = vld [vmem:[#allocation10 + $0x14] sm:$0xf]
        %v1850 = vld [vmem:[#allocation10 + $0x18] sm:$0xf]
        %v1851 = vld [vmem:[#allocation10 + $0x1c] sm:$0xf]
        %v1852 = vld [vmem:[#allocation10 + $0x20] sm:$0xf]
        %v1853 = vld [vmem:[#allocation10 + $0x24] sm:$0xf]
        %v1854 = vld [vmem:[#allocation10 + $0x28] sm:$0xf]
        %v1855 = vld [vmem:[#allocation10 + $0x2c] sm:$0xf]
        %v1856 = vld [vmem:[#allocation10 + $0x30] sm:$0xf]
        %v1857 = vld [vmem:[#allocation10 + $0x34] sm:$0xf]
        %v1858 = vld [vmem:[#allocation10 + $0x38] sm:$0xf]
        %v1859 = vld [vmem:[#allocation10 + $0x3c] sm:$0xf]
        %v1860 = vld [vmem:[#allocation10 + $0x40] sm:$0xf]
        %v1861 = vld [vmem:[#allocation10 + $0x44] sm:$0xf]
        %v1862 = vld [vmem:[#allocation10 + $0x48] sm:$0xf]
        %v1863 = vld [vmem:[#allocation10 + $0x4c] sm:$0xf]
        %v1864 = vld [vmem:[#allocation10 + $0x50] sm:$0xf]
        %v1865 = vld [vmem:[#allocation10 + $0x54] sm:$0xf]
        %v1866 = vld [vmem:[#allocation10 + $0x58] sm:$0xf]
        %v1867 = vld [vmem:[#allocation10 + $0x5c] sm:$0xf]
        %v1868 = vld [vmem:[#allocation10 + $0x60] sm:$0xf]
        %v1869 = vld [vmem:[#allocation10 + $0x64] sm:$0xf]
        %v1870 = vld [vmem:[#allocation10 + $0x68] sm:$0xf]
        %v1871 = vld [vmem:[#allocation10 + $0x6c] sm:$0xf]
        %v1872 = vld [vmem:[#allocation10 + $0x70] sm:$0xf]
        %v1873 = vld [vmem:[#allocation10 + $0x74] sm:$0xf]
        %v1874 = vld [vmem:[#allocation10 + $0x78] sm:$0xf]
        %v1875 = vld [vmem:[#allocation10 + $0x7c] sm:$0xf]
        %v1876 = vld [vmem:[%s5 + $0x3] sm:$0x1]
        %v1877 = vlaneseq
        %v1878 = vshrl.u32 %v1877, 7
        %v1879 = vsub.s32 0, %v1878
        %v1880 = vrot.slane %v1876, %v1879
        %v1913 = vunpack.c.l.b16 %v1844
        %v1914 = vunpack.c.l.b16 %v1845
        %v1915 = vunpack.c.l.b16 %v1846
        %v1916 = vunpack.c.l.b16 %v1847
        %v1917 = vunpack.c.l.b16 %v1848
        %v1918 = vunpack.c.l.b16 %v1849
        %v1919 = vunpack.c.l.b16 %v1850
        %v1920 = vunpack.c.l.b16 %v1851
        %v1921 = vunpack.c.l.b16 %v1852
        %v1922 = vunpack.c.l.b16 %v1853
        %v1923 = vunpack.c.l.b16 %v1854
        %v1924 = vunpack.c.l.b16 %v1855
        %v1925 = vunpack.c.l.b16 %v1856
        %v1926 = vunpack.c.l.b16 %v1857
        %v1927 = vunpack.c.l.b16 %v1858
        %v1928 = vunpack.c.l.b16 %v1859
        %v1929 = vunpack.c.l.b16 %v1860
        %v1930 = vunpack.c.l.b16 %v1861
        %v1931 = vunpack.c.l.b16 %v1862
        %v1932 = vunpack.c.l.b16 %v1863
        %v1933 = vunpack.c.l.b16 %v1864
        %v1934 = vunpack.c.l.b16 %v1865
        %v1935 = vunpack.c.l.b16 %v1866
        %v1936 = vunpack.c.l.b16 %v1867
        %v1937 = vunpack.c.l.b16 %v1868
        %v1938 = vunpack.c.l.b16 %v1869
        %v1939 = vunpack.c.l.b16 %v1870
        %v1940 = vunpack.c.l.b16 %v1871
        %v1941 = vunpack.c.l.b16 %v1872
        %v1942 = vunpack.c.l.b16 %v1873
        %v1943 = vunpack.c.l.b16 %v1874
        %v1944 = vunpack.c.l.b16 %v1875
        %v1945 = vpack.c.b16 %v1914, %v1913
        %v1946 = vpack.c.b16 %v1916, %v1915
        %v1947 = vpack.c.b16 %v1918, %v1917
        %v1948 = vpack.c.b16 %v1920, %v1919
        %v1949 = vpack.c.b16 %v1922, %v1921
        %v1950 = vpack.c.b16 %v1924, %v1923
        %v1951 = vpack.c.b16 %v1926, %v1925
        %v1952 = vpack.c.b16 %v1928, %v1927
        %v1953 = vpack.c.b16 %v1930, %v1929
        %v1954 = vpack.c.b16 %v1932, %v1931
        %v1955 = vpack.c.b16 %v1934, %v1933
        %v1956 = vpack.c.b16 %v1936, %v1935
        %v1957 = vpack.c.b16 %v1938, %v1937
        %v1958 = vpack.c.b16 %v1940, %v1939
        %v1959 = vpack.c.b16 %v1942, %v1941
        %v1960 = vpack.c.b16 %v1944, %v1943
        %1977 = vmatprep.subr.bf16.mxu0 0
        %1978 = vmatpush1.bf16.msra.mxu0 %v1945
        %1979 = vmatprep.subr.bf16.mxu0 0
        %1980 = vmatpush1.bf16.msra.mxu0 %v1946
        %1981 = vmatprep.subr.bf16.mxu0 0
        %1982 = vmatpush1.bf16.msra.mxu0 %v1947
        %1983 = vmatprep.subr.bf16.mxu0 0
        %1984 = vmatpush1.bf16.msra.mxu0 %v1948
        %1985 = vmatprep.subr.bf16.mxu0 0
        %1986 = vmatpush1.bf16.msra.mxu0 %v1949
        %1987 = vmatprep.subr.bf16.mxu0 0
        %1988 = vmatpush1.bf16.msra.mxu0 %v1950
        %1989 = vmatprep.subr.bf16.mxu0 0
        %1990 = vmatpush1.bf16.msra.mxu0 %v1951
        %1991 = vmatprep.subr.bf16.mxu0 0
        %1992 = vmatpush1.bf16.msra.mxu0 %v1952
        %1993 = vmatprep.subr.bf16.mxu0 0
        %1994 = vmatpush1.bf16.msra.mxu0 %v1953
        %1995 = vmatprep.subr.bf16.mxu0 0
        %1996 = vmatpush1.bf16.msra.mxu0 %v1954
        %1997 = vmatprep.subr.bf16.mxu0 0
        %1998 = vmatpush1.bf16.msra.mxu0 %v1955
        %1999 = vmatprep.subr.bf16.mxu0 0
        %2000 = vmatpush1.bf16.msra.mxu0 %v1956
        %2001 = vmatprep.subr.bf16.mxu0 0
        %2002 = vmatpush1.bf16.msra.mxu0 %v1957
        %2003 = vmatprep.subr.bf16.mxu0 0
        %2004 = vmatpush1.bf16.msra.mxu0 %v1958
        %2005 = vmatprep.subr.bf16.mxu0 0
        %2006 = vmatpush1.bf16.msra.mxu0 %v1959
        %2007 = vmatprep.subr.bf16.mxu0 0
        %2008 = vmatpush1.bf16.msra.mxu0 %v1960
        %2009 = vmatprep.mubr.bf16.mxu0 %v1813
        %2010 = vmatmul.mubr.bf16.gmra.mrb[0].mxu0 %v1812
        %v2011 = vpop.f32.mrb[0].mxu0
        %v2012 = vadd.f32 %v1880, %v2011
        %v2013 = vpop.f32.mrb[0].mxu0
        %v2014 = vpop.f32.mrb[0].mxu0
        %v2015 = vadd.f32 %v1880, %v2014
        %v2016 = vpop.f32.mrb[0].mxu0
        %2017 = vmatprep.mubr.bf16.mxu0 %v1815
        %2018 = vmatmul.mubr.bf16.gmra.mrb[0].mxu0 %v1814
        %v2019 = vpop.f32.mrb[0].mxu0
        %v2020 = vadd.f32 %v1880, %v2019
        %v2021 = vpop.f32.mrb[0].mxu0
        %v2022 = vpop.f32.mrb[0].mxu0
        %v2023 = vadd.f32 %v1880, %v2022
        %v2024 = vpop.f32.mrb[0].mxu0
        %2025 = vmatprep.mubr.bf16.mxu0 %v1817
        %2026 = vmatmul.mubr.bf16.gmra.mrb[0].mxu0 %v1816
        %v2027 = vpop.f32.mrb[0].mxu0
        %v2028 = vadd.f32 %v1880, %v2027
        %v2029 = vpop.f32.mrb[0].mxu0
        %v2030 = vpop.f32.mrb[0].mxu0
        %v2031 = vadd.f32 %v1880, %v2030
        %v2032 = vpop.f32.mrb[0].mxu0
        %2033 = vmatprep.mubr.bf16.mxu0 %v1819
        %2034 = vmatmul.mubr.bf16.gmra.mrb[0].mxu0 %v1818
        %v2035 = vpop.f32.mrb[0].mxu0
        %v2036 = vadd.f32 %v1880, %v2035
        %v2037 = vpop.f32.mrb[0].mxu0
        %v2038 = vpop.f32.mrb[0].mxu0
        %v2039 = vadd.f32 %v1880, %v2038
        %v2040 = vpop.f32.mrb[0].mxu0
        %2041 = vmatprep.mubr.bf16.mxu0 %v1821
        %2042 = vmatmul.mubr.bf16.gmra.mrb[0].mxu0 %v1820
        %v2043 = vpop.f32.mrb[0].mxu0
        %v2044 = vadd.f32 %v1880, %v2043
        %v2045 = vpop.f32.mrb[0].mxu0
        %v2046 = vpop.f32.mrb[0].mxu0
        %v2047 = vadd.f32 %v1880, %v2046
        %v2048 = vpop.f32.mrb[0].mxu0
        %2049 = vmatprep.mubr.bf16.mxu0 %v1823
        %2050 = vmatmul.mubr.bf16.gmra.mrb[0].mxu0 %v1822
        %v2051 = vpop.f32.mrb[0].mxu0
        %v2052 = vadd.f32 %v1880, %v2051
        %v2053 = vpop.f32.mrb[0].mxu0
        %v2054 = vpop.f32.mrb[0].mxu0
        %v2055 = vadd.f32 %v1880, %v2054
        %v2056 = vpop.f32.mrb[0].mxu0
        %2057 = vmatprep.mubr.bf16.mxu0 %v1825
        %2058 = vmatmul.mubr.bf16.gmra.mrb[0].mxu0 %v1824
        %v2059 = vpop.f32.mrb[0].mxu0
        %v2060 = vadd.f32 %v1880, %v2059
        %v2061 = vpop.f32.mrb[0].mxu0
        %v2062 = vpop.f32.mrb[0].mxu0
        %v2063 = vadd.f32 %v1880, %v2062
        %v2064 = vpop.f32.mrb[0].mxu0
        %2065 = vmatprep.mubr.bf16.mxu0 %v1827
        %2066 = vmatmul.mubr.bf16.gmra.mrb[0].mxu0 %v1826
        %v2067 = vpop.f32.mrb[0].mxu0
        %v2068 = vadd.f32 %v1880, %v2067
        %v2069 = vpop.f32.mrb[0].mxu0
        %v2070 = vpop.f32.mrb[0].mxu0
        %v2071 = vadd.f32 %v1880, %v2070
        %v2072 = vpop.f32.mrb[0].mxu0
        %2073 = vmatprep.mubr.bf16.mxu0 %v1829
        %2074 = vmatmul.mubr.bf16.gmra.mrb[0].mxu0 %v1828
        %v2075 = vpop.f32.mrb[0].mxu0
        %v2076 = vadd.f32 %v1880, %v2075
        %v2077 = vpop.f32.mrb[0].mxu0
        %v2078 = vpop.f32.mrb[0].mxu0
        %v2079 = vadd.f32 %v1880, %v2078
        %v2080 = vpop.f32.mrb[0].mxu0
        %2081 = vmatprep.mubr.bf16.mxu0 %v1831
        %2082 = vmatmul.mubr.bf16.gmra.mrb[0].mxu0 %v1830
        %v2083 = vpop.f32.mrb[0].mxu0
        %v2084 = vadd.f32 %v1880, %v2083
        %v2085 = vpop.f32.mrb[0].mxu0
        %v2086 = vpop.f32.mrb[0].mxu0
        %v2087 = vadd.f32 %v1880, %v2086
        %v2088 = vpop.f32.mrb[0].mxu0
        %2089 = vmatprep.mubr.bf16.mxu0 %v1833
        %2090 = vmatmul.mubr.bf16.gmra.mrb[0].mxu0 %v1832
        %v2091 = vpop.f32.mrb[0].mxu0
        %v2092 = vadd.f32 %v1880, %v2091
        %v2093 = vpop.f32.mrb[0].mxu0
        %v2094 = vpop.f32.mrb[0].mxu0
        %v2095 = vadd.f32 %v1880, %v2094
        %v2096 = vpop.f32.mrb[0].mxu0
        %2097 = vmatprep.mubr.bf16.mxu0 %v1835
        %2098 = vmatmul.mubr.bf16.gmra.mrb[0].mxu0 %v1834
        %v2099 = vpop.f32.mrb[0].mxu0
        %v2100 = vadd.f32 %v1880, %v2099
        %v2101 = vpop.f32.mrb[0].mxu0
        %v2102 = vpop.f32.mrb[0].mxu0
        %v2103 = vadd.f32 %v1880, %v2102
        %v2104 = vpop.f32.mrb[0].mxu0
        %2105 = vmatprep.mubr.bf16.mxu0 %v1837
        %2106 = vmatmul.mubr.bf16.gmra.mrb[0].mxu0 %v1836
        %v2107 = vpop.f32.mrb[0].mxu0
        %v2108 = vadd.f32 %v1880, %v2107
        %v2109 = vpop.f32.mrb[0].mxu0
        %v2110 = vpop.f32.mrb[0].mxu0
        %v2111 = vadd.f32 %v1880, %v2110
        %v2112 = vpop.f32.mrb[0].mxu0
        %2113 = vmatprep.mubr.bf16.mxu0 %v1839
        %2114 = vmatmul.mubr.bf16.gmra.mrb[0].mxu0 %v1838
        %v2115 = vpop.f32.mrb[0].mxu0
        %v2116 = vadd.f32 %v1880, %v2115
        %v2117 = vpop.f32.mrb[0].mxu0
        %v2118 = vpop.f32.mrb[0].mxu0
        %v2119 = vadd.f32 %v1880, %v2118
        %v2120 = vpop.f32.mrb[0].mxu0
        %2121 = vmatprep.mubr.bf16.mxu0 %v1841
        %2122 = vmatmul.mubr.bf16.gmra.mrb[0].mxu0 %v1840
        %v2123 = vpop.f32.mrb[0].mxu0
        %v2124 = vadd.f32 %v1880, %v2123
        %v2125 = vpop.f32.mrb[0].mxu0
        %v2126 = vpop.f32.mrb[0].mxu0
        %v2127 = vadd.f32 %v1880, %v2126
        %v2128 = vpop.f32.mrb[0].mxu0
        %2129 = vmatprep.mubr.bf16.mxu0 %v1843
        %2130 = vmatmul.mubr.bf16.gmra.mrb[0].mxu0 %v1842
        %v2131 = vpop.f32.mrb[0].mxu0
        %v2132 = vadd.f32 %v1880, %v2131
        %v2133 = vpop.f32.mrb[0].mxu0
        %v2134 = vpop.f32.mrb[0].mxu0
        %v2135 = vadd.f32 %v1880, %v2134
        %v2136 = vpop.f32.mrb[0].mxu0
        %2137 = vdwg.mxu0
        %v2138 = vpack.c.bf16 %v2015, %v2012
        %v2139 = vpack.c.bf16 %v2023, %v2020
        %v2140 = vpack.c.bf16 %v2031, %v2028
        %v2141 = vpack.c.bf16 %v2039, %v2036
        %v2142 = vpack.c.bf16 %v2047, %v2044
        %v2143 = vpack.c.bf16 %v2055, %v2052
        %v2144 = vpack.c.bf16 %v2063, %v2060
        %v2145 = vpack.c.bf16 %v2071, %v2068
        %v2146 = vpack.c.bf16 %v2079, %v2076
        %v2147 = vpack.c.bf16 %v2087, %v2084
        %v2148 = vpack.c.bf16 %v2095, %v2092
        %v2149 = vpack.c.bf16 %v2103, %v2100
        %v2150 = vpack.c.bf16 %v2111, %v2108
        %v2151 = vpack.c.bf16 %v2119, %v2116
        %v2152 = vpack.c.bf16 %v2127, %v2124
        %v2153 = vpack.c.bf16 %v2135, %v2132
        %v2170 = vunpack.c.l.b16 %v2138
        %v2171 = vunpack.c.h.b16 %v2138
        %v2172 = vunpack.c.l.b16 %v2139
        %v2173 = vunpack.c.h.b16 %v2139
        %v2174 = vunpack.c.l.b16 %v2140
        %v2175 = vunpack.c.h.b16 %v2140
        %v2176 = vunpack.c.l.b16 %v2141
        %v2177 = vunpack.c.h.b16 %v2141
        %v2178 = vunpack.c.l.b16 %v2142
        %v2179 = vunpack.c.h.b16 %v2142
        %v2180 = vunpack.c.l.b16 %v2143
        %v2181 = vunpack.c.h.b16 %v2143
        %v2182 = vunpack.c.l.b16 %v2144
        %v2183 = vunpack.c.h.b16 %v2144
        %v2184 = vunpack.c.l.b16 %v2145
        %v2185 = vunpack.c.h.b16 %v2145
        %v2186 = vunpack.c.l.b16 %v2146
        %v2187 = vunpack.c.h.b16 %v2146
        %v2188 = vunpack.c.l.b16 %v2147
        %v2189 = vunpack.c.h.b16 %v2147
        %v2190 = vunpack.c.l.b16 %v2148
        %v2191 = vunpack.c.h.b16 %v2148
        %v2192 = vunpack.c.l.b16 %v2149
        %v2193 = vunpack.c.h.b16 %v2149
        %v2194 = vunpack.c.l.b16 %v2150
        %v2195 = vunpack.c.h.b16 %v2150
        %v2196 = vunpack.c.l.b16 %v2151
        %v2197 = vunpack.c.h.b16 %v2151
        %v2198 = vunpack.c.l.b16 %v2152
        %v2199 = vunpack.c.h.b16 %v2152
        %v2200 = vunpack.c.l.b16 %v2153
        %v2201 = vunpack.c.h.b16 %v2153
        %v2202 = vpack.c.b16 %v2170, %v2170
        %v2203 = vpack.c.b16 %v2171, %v2171
        %v2204 = vpack.c.b16 %v2172, %v2172
        %v2205 = vpack.c.b16 %v2173, %v2173
        %v2206 = vpack.c.b16 %v2174, %v2174
        %v2207 = vpack.c.b16 %v2175, %v2175
        %v2208 = vpack.c.b16 %v2176, %v2176
        %v2209 = vpack.c.b16 %v2177, %v2177
        %v2210 = vpack.c.b16 %v2178, %v2178
        %v2211 = vpack.c.b16 %v2179, %v2179
        %v2212 = vpack.c.b16 %v2180, %v2180
        %v2213 = vpack.c.b16 %v2181, %v2181
        %v2214 = vpack.c.b16 %v2182, %v2182
        %v2215 = vpack.c.b16 %v2183, %v2183
        %v2216 = vpack.c.b16 %v2184, %v2184
        %v2217 = vpack.c.b16 %v2185, %v2185
        %v2218 = vpack.c.b16 %v2186, %v2186
        %v2219 = vpack.c.b16 %v2187, %v2187
        %v2220 = vpack.c.b16 %v2188, %v2188
        %v2221 = vpack.c.b16 %v2189, %v2189
        %v2222 = vpack.c.b16 %v2190, %v2190
        %v2223 = vpack.c.b16 %v2191, %v2191
        %v2224 = vpack.c.b16 %v2192, %v2192
        %v2225 = vpack.c.b16 %v2193, %v2193
        %v2226 = vpack.c.b16 %v2194, %v2194
        %v2227 = vpack.c.b16 %v2195, %v2195
        %v2228 = vpack.c.b16 %v2196, %v2196
        %v2229 = vpack.c.b16 %v2197, %v2197
        %v2230 = vpack.c.b16 %v2198, %v2198
        %v2231 = vpack.c.b16 %v2199, %v2199
        %v2232 = vpack.c.b16 %v2200, %v2200
        %v2233 = vpack.c.b16 %v2201, %v2201
        %2266 = vst [vmem:[%s327] sm:$0xf] %v2202
        %2267 = vst [vmem:[%s327 + $0x4] sm:$0xf] %v2203
        %2268 = vst [vmem:[%s327 + $0x8] sm:$0xf] %v2204
        %2269 = vst [vmem:[%s327 + $0xc] sm:$0xf] %v2205
        %2270 = vst [vmem:[%s327 + $0x10] sm:$0xf] %v2206
        %2271 = vst [vmem:[%s327 + $0x14] sm:$0xf] %v2207
        %2272 = vst [vmem:[%s327 + $0x18] sm:$0xf] %v2208
        %2273 = vst [vmem:[%s327 + $0x1c] sm:$0xf] %v2209
        %2274 = vst [vmem:[%s327 + $0x20] sm:$0xf] %v2210
        %2275 = vst [vmem:[%s327 + $0x24] sm:$0xf] %v2211
        %2276 = vst [vmem:[%s327 + $0x28] sm:$0xf] %v2212
        %2277 = vst [vmem:[%s327 + $0x2c] sm:$0xf] %v2213
        %2278 = vst [vmem:[%s327 + $0x30] sm:$0xf] %v2214
        %2279 = vst [vmem:[%s327 + $0x34] sm:$0xf] %v2215
        %2280 = vst [vmem:[%s327 + $0x38] sm:$0xf] %v2216
        %2281 = vst [vmem:[%s327 + $0x3c] sm:$0xf] %v2217
        %2282 = vst [vmem:[%s327 + $0x40] sm:$0xf] %v2218
        %2283 = vst [vmem:[%s327 + $0x44] sm:$0xf] %v2219
        %2284 = vst [vmem:[%s327 + $0x48] sm:$0xf] %v2220
        %2285 = vst [vmem:[%s327 + $0x4c] sm:$0xf] %v2221
        %2286 = vst [vmem:[%s327 + $0x50] sm:$0xf] %v2222
        %2287 = vst [vmem:[%s327 + $0x54] sm:$0xf] %v2223
        %2288 = vst [vmem:[%s327 + $0x58] sm:$0xf] %v2224
        %2289 = vst [vmem:[%s327 + $0x5c] sm:$0xf] %v2225
        %2290 = vst [vmem:[%s327 + $0x60] sm:$0xf] %v2226
        %2291 = vst [vmem:[%s327 + $0x64] sm:$0xf] %v2227
        %2292 = vst [vmem:[%s327 + $0x68] sm:$0xf] %v2228
        %2293 = vst [vmem:[%s327 + $0x6c] sm:$0xf] %v2229
        %2294 = vst [vmem:[%s327 + $0x70] sm:$0xf] %v2230
        %2295 = vst [vmem:[%s327 + $0x74] sm:$0xf] %v2231
        %2296 = vst [vmem:[%s327 + $0x78] sm:$0xf] %v2232
        %2297 = vst [vmem:[%s327 + $0x7c] sm:$0xf] %v2233
        %s2298 = sand.u32 %s164, 1
        %s2299 = scalar_lea.sflag [#allocation4], %s2298
        %s2300 = sand.u32 %s164, 1
        %s2301 = smul.addr %s2300, 128
        %s2302 = scalar_lea.vmem [#allocation11], %s2301
        // Predicated region
        $region65: #{tpu_custom_call.1} parent=43 // pred_check
          %p2303 = pneg %p174
        $region66: #{tpu_custom_call.1} parent=43 // pred_check_branch
          %2305 = sbr.rel (%p2303) target = $region68
        $region67: #{tpu_custom_call.1} parent=43 // pred_region
          %s2306 = smul.u32 32, %s25
          %s2308 = ssub.s32 2048, 2048
          %2309 = vsyncadd %s2299, %s2308
          %s2310 = smul.addr %s2306, 64
          %s2311 = scalar_lea.hbm %s6, %s2310
          %s2312 = sshll.u32 %s2302, 4
          %s2313 = int_to_ptr.vmem [resolvable:$true] %s2312
          %2318 = dma.vmem_to_hbm [thread:$0]  %s2313, 2048, %s2311, %s2299, 64, 64, 4
        $region68: #{tpu_custom_call.1} parent=43 // pred_fallthru
          _
      $region44: #{tpu_custom_call.1} parent=5 // pred_fallthru
        _
      %p2319 = scmp.le.s32.totalorder 2, %s20
      // Predicated region
      $region69: #{tpu_custom_call.1} parent=5 // pred_check
        %p2320 = pneg %p2319
      $region70: #{tpu_custom_call.1} parent=5 // pred_check_branch
        %2322 = sbr.rel (%p2320) target = $region72
      $region71: #{tpu_custom_call.1} parent=5 // pred_region
        %s2323 = ssub.s32 %s20, 2
        // Predicated region
        $region73: #{tpu_custom_call.1} parent=71 // pred_check
          %p2324 = pneg %p180
        $region74: #{tpu_custom_call.1} parent=71 // pred_check_branch
          %2326 = sbr.rel (%p2324) target = $region76
        $region75: #{tpu_custom_call.1} parent=71 // pred_region
          %s2327 = sand.u32 %s165, 1
          %s2328 = scalar_lea.sflag [#allocation4], %s2327
          %s2329 = sand.u32 %s165, 1
          %s2330 = smul.addr %s2329, 128
          %s2331 = scalar_lea.vmem [#allocation11], %s2330
          %2332 = dma.done %s2328, 2048
        $region76: #{tpu_custom_call.1} parent=71 // pred_fallthru
          _
      $region72: #{tpu_custom_call.1} parent=5 // pred_fallthru
        _
    $region6: #{tpu_custom_call.1} parent=1 // loop_footer
      %s24 = sadd.s32 1, %s20
    $region7: #{tpu_custom_call.1} parent=1 // loop_footer_branch
      %19 = sbr.rel target = $region3
    $region8: #{tpu_custom_call.1} parent=1 // loop_exit
      _
    %2333 = vsyncpa [#allocation3], 1
    %s2334 = scalar_lea.sflag [#allocation3], 1
    %2335 = vsyncpa %s2334, 1
    %2336 = vsyncpa [#allocation6], 1
    %2337 = vsyncpa [#allocation9], 1
    %2338 = vsyncpa [#allocation4], 1
    %s2339 = scalar_lea.sflag [#allocation4], 1
    %2340 = vsyncpa %s2339, 1

</llo_original>
